<compile_context>
chip_gen: v6e
topology: v6e:2x2x1
jax: 0.10.0
libtpu: 0.0.40
codegen_flags: <defaults>
</compile_context>

<pallas_src>
import functools

import jax
import jax.numpy as jnp
from jax.experimental import pallas as pl
from jax.experimental.pallas import tpu as pltpu

EPS = 1e-5

# MXU compute dtype. f32 keeps exact 1e-4 parity with the f32 reference at the
# toy widths below; flip to jnp.bfloat16 for real UNet widths (accumulation
# stays f32 via preferred_element_type).
MATMUL_DTYPE = jnp.float32
# Dtype of the HBM intermediates between passes (pre-BN conv outputs). bf16
# halves their HBM traffic / VMEM footprint at real widths; f32 for parity.
INTERMEDIATE_DTYPE = jnp.float32


def _vmem_limit_bytes():
    # v7x has 64 MiB physical VMEM vs. 128 MiB on v5e/v6e; size the scoped
    # budget per generation, falling back to the 32 MiB default.
    try:
        cap = pltpu.get_tpu_info().vmem_capacity_bytes
        return int(min(cap * 3 // 4, 96 * 1024 * 1024))
    except Exception:
        return 32 * 1024 * 1024


# ----------------------------------------------------------------------------
# Shared in-kernel helper: 3x3 same-padding conv (+bias) + partial BN stats
# ----------------------------------------------------------------------------
def _conv3x3_bias_stats(pad_ref, interior, w_ref, b_ref, y_ref, st_ref,
                        *, Ho, Wo, Cin, Cout):
    """Per-tap MXU conv on one (Ho, Wo, Cin) tile.

    pad_ref : VMEM scratch [Ho+2, Wo+2, Cin]; only the 1-px halo is zeroed,
              the interior is written exactly once (no full-buffer zero fill).
    w_ref   : [9, Cin, Cout], tap t = ky*3 + kx, each tap already [Cin, Cout].
    y_ref   : [Ho, Wo, Cout] pre-BN output tile (conv + bias).
    st_ref  : [2, Cout] per-tile partial BN stats (sum, sum-of-squares).
    """
    zero_row = jnp.zeros((1, Wo + 2, Cin), jnp.float32)
    zero_col = jnp.zeros((Ho + 2, 1, Cin), jnp.float32)
    pad_ref[0:1, :, :] = zero_row
    pad_ref[Ho + 1:Ho + 2, :, :] = zero_row
    pad_ref[:, 0:1, :] = zero_col
    pad_ref[:, Wo + 1:Wo + 2, :] = zero_col
    pad_ref[1:Ho + 1, 1:Wo + 1, :] = interior

    # 9 per-tap matmuls accumulating into a single f32 accumulator: no
    # [M, 9*C] im2col copy is ever materialized.
    acc = jnp.zeros((Ho * Wo, Cout), jnp.float32)
    t = 0
    for dy in range(3):
        for dx in range(3):
            tap = pad_ref[dy:dy + Ho, dx:dx + Wo, :].reshape(Ho * Wo, Cin)
            acc = acc + jnp.dot(tap.astype(MATMUL_DTYPE),
                                w_ref[t].astype(MATMUL_DTYPE),
                                preferred_element_type=jnp.float32)
            t += 1
    y = acc + b_ref[...]                                       # [Ho*Wo, Cout]

    y_ref[...] = y.reshape(Ho, Wo, Cout).astype(y_ref.dtype)
    # Single-pass BN statistics (sum / sum-of-squares), reduced across the
    # grid in the wrapper.
    st_ref[0:1, :] = jnp.sum(y, axis=0, keepdims=True)
    st_ref[1:2, :] = jnp.sum(y * y, axis=0, keepdims=True)


# ----------------------------------------------------------------------------
# Kernels (each runs on a batch grid, dimension_semantics=("parallel",))
# ----------------------------------------------------------------------------
def _pool_conv_kernel(x_ref, w_ref, b_ref, y_ref, st_ref, pad_ref,
                      *, Ho, Wo, Cin, Cout):
    """MaxPool2d(2) + Conv2d(3x3, pad=1) + bias for one batch image."""
    # 2x2 max pool (floor behaviour): input stays in its native dtype, upcast
    # only after the max (no wrapper-side f32 cast / extra HBM pass).
    # TODO(synk): switch the W axis to contiguous loads + pairwise max once
    # W-side vld pressure is the saturating slot at real widths.
    a = x_ref[pl.ds(0, Ho, stride=2), pl.ds(0, Wo, stride=2), :]
    b = x_ref[pl.ds(0, Ho, stride=2), pl.ds(1, Wo, stride=2), :]
    c = x_ref[pl.ds(1, Ho, stride=2), pl.ds(0, Wo, stride=2), :]
    d = x_ref[pl.ds(1, Ho, stride=2), pl.ds(1, Wo, stride=2), :]
    pooled = jnp.maximum(jnp.maximum(a, b), jnp.maximum(c, d)).astype(jnp.float32)
    _conv3x3_bias_stats(pad_ref, pooled, w_ref, b_ref, y_ref, st_ref,
                        Ho=Ho, Wo=Wo, Cin=Cin, Cout=Cout)


def _bnrelu_conv_kernel(x_ref, sc_ref, sh_ref, w_ref, b_ref, y_ref, st_ref,
                        pad_ref, *, Ho, Wo, Cin, Cout):
    """(BN affine + ReLU of the previous conv) fused into the next conv."""
    act = x_ref[...].astype(jnp.float32) * sc_ref[0] + sh_ref[0]
    act = jnp.maximum(act, 0.0)
    _conv3x3_bias_stats(pad_ref, act, w_ref, b_ref, y_ref, st_ref,
                        Ho=Ho, Wo=Wo, Cin=Cin, Cout=Cout)


def _bnrelu_kernel(x_ref, sc_ref, sh_ref, o_ref):
    """Final BN affine + ReLU (elementwise)."""
    act = x_ref[...].astype(jnp.float32) * sc_ref[0] + sh_ref[0]
    o_ref[...] = jnp.maximum(act, 0.0).astype(o_ref.dtype)


# ----------------------------------------------------------------------------
# Cross-tile BN reduction + affine fold (tiny, runs between pallas_calls)
# ----------------------------------------------------------------------------
def _bn_fold(stats, gamma, beta, count):
    total = jnp.sum(stats.astype(jnp.float32), axis=0)        # [2, Cout]
    mean = total[0] / count
    var = total[1] / count - mean * mean                       # biased (training BN)
    scale = gamma.astype(jnp.float32) * jax.lax.rsqrt(var + EPS)
    shift = beta.astype(jnp.float32) - mean * scale
    return scale.reshape(1, -1), shift.reshape(1, -1)


# ----------------------------------------------------------------------------
# Wrappers
# ----------------------------------------------------------------------------
def down_block_nhwc(x, params):
    """_DownBlock forward (MaxPool2d(2) + 2x ConvBlock), NHWC in / NHWC out."""
    N, H, W, Cin = x.shape
    Cout = params["w1"].shape[0]
    Ho, Wo = H // 2, W // 2
    count = float(N * Ho * Wo)

    # PyTorch OIHW -> per-tap [9, Cin_or_Cout, Cout] (tap = ky*3 + kx).
    w1 = jnp.transpose(params["w1"], (2, 3, 1, 0)).reshape(9, Cin, Cout).astype(MATMUL_DTYPE)
    w2 = jnp.transpose(params["w2"], (2, 3, 1, 0)).reshape(9, Cout, Cout).astype(MATMUL_DTYPE)
    b1 = params["b1"].reshape(1, Cout).astype(jnp.float32)
    b2 = params["b2"].reshape(1, Cout).astype(jnp.float32)

    cparams = pltpu.CompilerParams(
        dimension_semantics=("parallel",),        # batch grid -> both v7x TCs
        vmem_limit_bytes=_vmem_limit_bytes())

    def row_spec():
        return pl.BlockSpec((None, Ho, Wo, Cout), lambda n: (n, 0, 0, 0))

    def st_spec():
        return pl.BlockSpec((None, 2, Cout), lambda n: (n, 0, 0))

    def vec_spec(c):
        return pl.BlockSpec((1, c), lambda n: (0, 0))

    # ---- Pass 1: maxpool + conv1 + bias; per-image partial BN1 stats -------
    y1, st1 = pl.pallas_call(
        functools.partial(_pool_conv_kernel, Ho=Ho, Wo=Wo, Cin=Cin, Cout=Cout),
        grid=(N,),
        in_specs=[
            pl.BlockSpec((None, H, W, Cin), lambda n: (n, 0, 0, 0)),
            pl.BlockSpec((9, Cin, Cout), lambda n: (0, 0, 0)),
            vec_spec(Cout),
        ],
        out_specs=(row_spec(), st_spec()),
        out_shape=(
            jax.ShapeDtypeStruct((N, Ho, Wo, Cout), INTERMEDIATE_DTYPE),
            jax.ShapeDtypeStruct((N, 2, Cout), jnp.float32),
        ),
        scratch_shapes=[pltpu.VMEM((Ho + 2, Wo + 2, Cin), jnp.float32)],
        compiler_params=cparams,
    )(x, w1, b1)
    scale1, shift1 = _bn_fold(st1, params["g1"], params["be1"], count)

    # ---- Pass 2: BN1 affine + ReLU fused into conv2 + bias; BN2 stats ------
    y2, st2 = pl.pallas_call(
        functools.partial(_bnrelu_conv_kernel, Ho=Ho, Wo=Wo, Cin=Cout, Cout=Cout),
        grid=(N,),
        in_specs=[
            row_spec(),
            vec_spec(Cout),
            vec_spec(Cout),
            pl.BlockSpec((9, Cout, Cout), lambda n: (0, 0, 0)),
            vec_spec(Cout),
        ],
        out_specs=(row_spec(), st_spec()),
        out_shape=(
            jax.ShapeDtypeStruct((N, Ho, Wo, Cout), INTERMEDIATE_DTYPE),
            jax.ShapeDtypeStruct((N, 2, Cout), jnp.float32),
        ),
        scratch_shapes=[pltpu.VMEM((Ho + 2, Wo + 2, Cout), jnp.float32)],
        compiler_params=cparams,
    )(y1, scale1, shift1, w2, b2)
    scale2, shift2 = _bn_fold(st2, params["g2"], params["be2"], count)

    # ---- Pass 3: final BN2 affine + ReLU (elementwise) ----------------------
    # NHWC store is lane-dense once Cout >= 128 (real UNet widths); at this
    # toy Cout=8 it is a masked store (cannot reach 128 lanes at these sizes).
    out = pl.pallas_call(
        _bnrelu_kernel,
        grid=(N,),
        in_specs=[row_spec(), vec_spec(Cout), vec_spec(Cout)],
        out_specs=row_spec(),
        out_shape=jax.ShapeDtypeStruct((N, Ho, Wo, Cout), jnp.float32),
        compiler_params=cparams,
    )(y2, scale2, shift2)
    return out


def down_block(x_nchw, params):
    """_DownBlock forward, NCHW in/out (PyTorch convention).

    The two transposes are full HBM passes; keep the surrounding model NHWC
    end-to-end and call `down_block_nhwc` directly to avoid them.
    """
    x = jnp.transpose(x_nchw, (0, 2, 3, 1))      # NCHW -> NHWC
    y = down_block_nhwc(x, params)
    return jnp.transpose(y, (0, 3, 1, 2))        # NHWC -> NCHW


# ----------------------------------------------------------------------------
# Pure-JAX reference (PyTorch NCHW / OIHW semantics) for correctness check
# ----------------------------------------------------------------------------
def _ref_conv_block(x, w, b, gamma, beta):
    y = jax.lax.conv_general_dilated(
        x, w, window_strides=(1, 1), padding=((1, 1), (1, 1)),
        dimension_numbers=("NCHW", "OIHW", "NCHW"))
    y = y + b[None, :, None, None]
    mean = jnp.mean(y, axis=(0, 2, 3), keepdims=True)
    var = jnp.mean((y - mean) ** 2, axis=(0, 2, 3), keepdims=True)
    y = (y - mean) * jax.lax.rsqrt(var + EPS)
    y = y * gamma[None, :, None, None] + beta[None, :, None, None]
    return jnp.maximum(y, 0.0)


def _ref_down_block(x, p):
    N, C, H, W = x.shape
    x = x.reshape(N, C, H // 2, 2, W // 2, 2).max(axis=(3, 5))
    x = _ref_conv_block(x, p["w1"], p["b1"], p["g1"], p["be1"])
    x = _ref_conv_block(x, p["w2"], p["b2"], p["g2"], p["be2"])
    return x


# ----------------------------------------------------------------------------
if __name__ == "__main__":
    # _DownBlock(in_channels=4, out_channels=8, n_convs=2)
    N, Cin, H, W = 2, 4, 16, 16
    Cout = 8

    key = jax.random.PRNGKey(0)
    kx, k1, k2, k3, k4, k5, k6 = jax.random.split(key, 7)

    x = jax.random.normal(kx, (N, Cin, H, W), jnp.float32)

    # Deterministic synthetic parameters (PyTorch conventions: Conv2d OIHW).
    params = {
        "w1": 0.2 * jax.random.normal(k1, (Cout, Cin, 3, 3), jnp.float32),
        "b1": 0.1 * jax.random.normal(k2, (Cout,), jnp.float32),
        "g1": 1.0 + 0.1 * jax.random.normal(k5, (Cout,), jnp.float32),
        "be1": 0.1 * jax.random.normal(k6, (Cout,), jnp.float32),
        "w2": 0.2 * jax.random.normal(k3, (Cout, Cout, 3, 3), jnp.float32),
        "b2": 0.1 * jax.random.normal(k4, (Cout,), jnp.float32),
        "g2": jnp.ones((Cout,), jnp.float32),
        "be2": jnp.zeros((Cout,), jnp.float32),
    }

    fwd = jax.jit(down_block)
    out = jax.block_until_ready(fwd(x, params))
    assert out.shape == (N, Cout, H // 2, W // 2), out.shape

    ref = jax.block_until_ready(_ref_down_block(x, params))
    assert jnp.allclose(out, ref, atol=1e-4, rtol=1e-4), (
        float(jnp.max(jnp.abs(out - ref))))

    print("KERNEL_OK")
</pallas_src>

<mosaic_0001>
module attributes {stable_mosaic.version = 11 : i64} {
  func.func @_pool_conv_kernel(%arg0: i32, %arg1: memref<1x16x16x4xf32, #tpu.memory_space<vmem>>, %arg2: memref<9x4x8xf32, #tpu.memory_space<vmem>>, %arg3: memref<1x8xf32, #tpu.memory_space<vmem>>, %arg4: memref<1x8x8x8xf32, #tpu.memory_space<vmem>>, %arg5: memref<1x2x8xf32, #tpu.memory_space<vmem>>, %arg6: memref<10x10x4xf32, #tpu.memory_space<vmem>>) attributes {dimension_semantics = [#tpu.dimension_semantics<parallel>], iteration_bounds = array<i64: 2>, scalar_prefetch = 0 : i64, scratch_operands = 1 : i64, tpu.core_type = #tpu.core_type<tc>, window_params = [{transform_indices = @transform_0, window_bounds = array<i64: 1, 16, 16, 4>}, {pipeline_mode = #tpu.pipeline_mode<synchronous>, transform_indices = @transform_1, window_bounds = array<i64: 9, 4, 8>}, {pipeline_mode = #tpu.pipeline_mode<synchronous>, transform_indices = @transform_2, window_bounds = array<i64: 1, 8>}, {transform_indices = @transform_3, window_bounds = array<i64: 1, 8, 8, 8>}, {transform_indices = @transform_4, window_bounds = array<i64: 1, 2, 8>}]} {
    %c0 = arith.constant 0 : index
    %c0_0 = arith.constant 0 : index
    %c0_1 = arith.constant 0 : index
    %c0_2 = arith.constant 0 : index
    %0 = tpu.strided_load %arg1[%c0, %c0_0, %c0_1, %c0_2] {strides = array<i32: 1, 2, 2, 1>} : memref<1x16x16x4xf32, #tpu.memory_space<vmem>>, vector<1x8x8x4xf32>
    %1 = vector.shape_cast %0 : vector<1x8x8x4xf32> to vector<8x8x4xf32>
    %c0_3 = arith.constant 0 : index
    %c0_4 = arith.constant 0 : index
    %c1 = arith.constant 1 : index
    %c0_5 = arith.constant 0 : index
    %2 = tpu.strided_load %arg1[%c0_3, %c0_4, %c1, %c0_5] {strides = array<i32: 1, 2, 2, 1>} : memref<1x16x16x4xf32, #tpu.memory_space<vmem>>, vector<1x8x8x4xf32>
    %3 = vector.shape_cast %2 : vector<1x8x8x4xf32> to vector<8x8x4xf32>
    %c0_6 = arith.constant 0 : index
    %c1_7 = arith.constant 1 : index
    %c0_8 = arith.constant 0 : index
    %c0_9 = arith.constant 0 : index
    %4 = tpu.strided_load %arg1[%c0_6, %c1_7, %c0_8, %c0_9] {strides = array<i32: 1, 2, 2, 1>} : memref<1x16x16x4xf32, #tpu.memory_space<vmem>>, vector<1x8x8x4xf32>
    %5 = vector.shape_cast %4 : vector<1x8x8x4xf32> to vector<8x8x4xf32>
    %c0_10 = arith.constant 0 : index
    %c1_11 = arith.constant 1 : index
    %c1_12 = arith.constant 1 : index
    %c0_13 = arith.constant 0 : index
    %6 = tpu.strided_load %arg1[%c0_10, %c1_11, %c1_12, %c0_13] {strides = array<i32: 1, 2, 2, 1>} : memref<1x16x16x4xf32, #tpu.memory_space<vmem>>, vector<1x8x8x4xf32>
    %7 = vector.shape_cast %6 : vector<1x8x8x4xf32> to vector<8x8x4xf32>
    %8 = arith.maximumf %1, %3 : vector<8x8x4xf32>
    %9 = arith.maximumf %5, %7 : vector<8x8x4xf32>
    %10 = arith.maximumf %8, %9 : vector<8x8x4xf32>
    %cst = arith.constant 0.000000e+00 : f32
    %11 = vector.broadcast %cst : f32 to vector<1x10x4xf32>
    %cst_14 = arith.constant 0.000000e+00 : f32
    %12 = vector.broadcast %cst_14 : f32 to vector<10x1x4xf32>
    %c0_15 = arith.constant 0 : index
    %c0_16 = arith.constant 0 : index
    %c0_17 = arith.constant 0 : index
    %13 = vector.load %arg6[%c0_15, %c0_16, %c0_17] : memref<10x10x4xf32, #tpu.memory_space<vmem>>, vector<1x10x4xf32>
    tpu.vector_store %arg6[%c0_15, %c0_16, %c0_17], %11 {strides = array<i32>} : memref<10x10x4xf32, #tpu.memory_space<vmem>>, vector<1x10x4xf32>,
    %c9 = arith.constant 9 : index
    %c0_18 = arith.constant 0 : index
    %c0_19 = arith.constant 0 : index
    %14 = vector.load %arg6[%c9, %c0_18, %c0_19] : memref<10x10x4xf32, #tpu.memory_space<vmem>>, vector<1x10x4xf32>
    tpu.vector_store %arg6[%c9, %c0_18, %c0_19], %11 {strides = array<i32>} : memref<10x10x4xf32, #tpu.memory_space<vmem>>, vector<1x10x4xf32>,
    %c0_20 = arith.constant 0 : index
    %c0_21 = arith.constant 0 : index
    %c0_22 = arith.constant 0 : index
    %15 = vector.load %arg6[%c0_20, %c0_21, %c0_22] : memref<10x10x4xf32, #tpu.memory_space<vmem>>, vector<10x1x4xf32>
    tpu.vector_store %arg6[%c0_20, %c0_21, %c0_22], %12 {strides = array<i32>} : memref<10x10x4xf32, #tpu.memory_space<vmem>>, vector<10x1x4xf32>,
    %c0_23 = arith.constant 0 : index
    %c9_24 = arith.constant 9 : index
    %c0_25 = arith.constant 0 : index
    %16 = vector.load %arg6[%c0_23, %c9_24, %c0_25] : memref<10x10x4xf32, #tpu.memory_space<vmem>>, vector<10x1x4xf32>
    tpu.vector_store %arg6[%c0_23, %c9_24, %c0_25], %12 {strides = array<i32>} : memref<10x10x4xf32, #tpu.memory_space<vmem>>, vector<10x1x4xf32>,
    %c1_26 = arith.constant 1 : index
    %c1_27 = arith.constant 1 : index
    %c0_28 = arith.constant 0 : index
    %17 = vector.load %arg6[%c1_26, %c1_27, %c0_28] : memref<10x10x4xf32, #tpu.memory_space<vmem>>, vector<8x8x4xf32>
    tpu.vector_store %arg6[%c1_26, %c1_27, %c0_28], %10 {strides = array<i32>} : memref<10x10x4xf32, #tpu.memory_space<vmem>>, vector<8x8x4xf32>,
    %cst_29 = arith.constant 0.000000e+00 : f32
    %18 = vector.broadcast %cst_29 : f32 to vector<64x8xf32>
    %c0_30 = arith.constant 0 : index
    %c0_31 = arith.constant 0 : index
    %c0_32 = arith.constant 0 : index
    %19 = vector.load %arg6[%c0_30, %c0_31, %c0_32] : memref<10x10x4xf32, #tpu.memory_space<vmem>>, vector<8x8x4xf32>
    %20 = vector.shape_cast %19 : vector<8x8x4xf32> to vector<64x4xf32>
    %c0_33 = arith.constant 0 : index
    %c0_34 = arith.constant 0 : index
    %c0_35 = arith.constant 0 : index
    %21 = vector.load %arg2[%c0_33, %c0_34, %c0_35] : memref<9x4x8xf32, #tpu.memory_space<vmem>>, vector<1x4x8xf32>
    %22 = vector.shape_cast %21 : vector<1x4x8xf32> to vector<4x8xf32>
    %cst_36 = arith.constant dense<0.000000e+00> : vector<64x8xf32>
    %23 = tpu.matmul %20, %22, %cst_36 {dimension_numbers = #tpu.dot_dimension_numbers<[1], [0], [0], [1], [0, 0, 1, 1], [], []>} : vector<64x4xf32>, vector<4x8xf32>, vector<64x8xf32> -> vector<64x8xf32>
    %24 = arith.addf %18, %23 : vector<64x8xf32>
    %c0_37 = arith.constant 0 : index
    %c1_38 = arith.constant 1 : index
    %c0_39 = arith.constant 0 : index
    %25 = vector.load %arg6[%c0_37, %c1_38, %c0_39] : memref<10x10x4xf32, #tpu.memory_space<vmem>>, vector<8x8x4xf32>
    %26 = vector.shape_cast %25 : vector<8x8x4xf32> to vector<64x4xf32>
    %c1_40 = arith.constant 1 : index
    %c0_41 = arith.constant 0 : index
    %c0_42 = arith.constant 0 : index
    %27 = vector.load %arg2[%c1_40, %c0_41, %c0_42] : memref<9x4x8xf32, #tpu.memory_space<vmem>>, vector<1x4x8xf32>
    %28 = vector.shape_cast %27 : vector<1x4x8xf32> to vector<4x8xf32>
    %cst_43 = arith.constant dense<0.000000e+00> : vector<64x8xf32>
    %29 = tpu.matmul %26, %28, %cst_43 {dimension_numbers = #tpu.dot_dimension_numbers<[1], [0], [0], [1], [0, 0, 1, 1], [], []>} : vector<64x4xf32>, vector<4x8xf32>, vector<64x8xf32> -> vector<64x8xf32>
    %30 = arith.addf %24, %29 : vector<64x8xf32>
    %c0_44 = arith.constant 0 : index
    %c2 = arith.constant 2 : index
    %c0_45 = arith.constant 0 : index
    %31 = vector.load %arg6[%c0_44, %c2, %c0_45] : memref<10x10x4xf32, #tpu.memory_space<vmem>>, vector<8x8x4xf32>
    %32 = vector.shape_cast %31 : vector<8x8x4xf32> to vector<64x4xf32>
    %c2_46 = arith.constant 2 : index
    %c0_47 = arith.constant 0 : index
    %c0_48 = arith.constant 0 : index
    %33 = vector.load %arg2[%c2_46, %c0_47, %c0_48] : memref<9x4x8xf32, #tpu.memory_space<vmem>>, vector<1x4x8xf32>
    %34 = vector.shape_cast %33 : vector<1x4x8xf32> to vector<4x8xf32>
    %cst_49 = arith.constant dense<0.000000e+00> : vector<64x8xf32>
    %35 = tpu.matmul %32, %34, %cst_49 {dimension_numbers = #tpu.dot_dimension_numbers<[1], [0], [0], [1], [0, 0, 1, 1], [], []>} : vector<64x4xf32>, vector<4x8xf32>, vector<64x8xf32> -> vector<64x8xf32>
    %36 = arith.addf %30, %35 : vector<64x8xf32>
    %c1_50 = arith.constant 1 : index
    %c0_51 = arith.constant 0 : index
    %c0_52 = arith.constant 0 : index
    %37 = vector.load %arg6[%c1_50, %c0_51, %c0_52] : memref<10x10x4xf32, #tpu.memory_space<vmem>>, vector<8x8x4xf32>
    %38 = vector.shape_cast %37 : vector<8x8x4xf32> to vector<64x4xf32>
    %c3 = arith.constant 3 : index
    %c0_53 = arith.constant 0 : index
    %c0_54 = arith.constant 0 : index
    %39 = vector.load %arg2[%c3, %c0_53, %c0_54] : memref<9x4x8xf32, #tpu.memory_space<vmem>>, vector<1x4x8xf32>
    %40 = vector.shape_cast %39 : vector<1x4x8xf32> to vector<4x8xf32>
    %cst_55 = arith.constant dense<0.000000e+00> : vector<64x8xf32>
    %41 = tpu.matmul %38, %40, %cst_55 {dimension_numbers = #tpu.dot_dimension_numbers<[1], [0], [0], [1], [0, 0, 1, 1], [], []>} : vector<64x4xf32>, vector<4x8xf32>, vector<64x8xf32> -> vector<64x8xf32>
    %42 = arith.addf %36, %41 : vector<64x8xf32>
    %c1_56 = arith.constant 1 : index
    %c1_57 = arith.constant 1 : index
    %c0_58 = arith.constant 0 : index
    %43 = vector.load %arg6[%c1_56, %c1_57, %c0_58] : memref<10x10x4xf32, #tpu.memory_space<vmem>>, vector<8x8x4xf32>
    %44 = vector.shape_cast %43 : vector<8x8x4xf32> to vector<64x4xf32>
    %c4 = arith.constant 4 : index
    %c0_59 = arith.constant 0 : index
    %c0_60 = arith.constant 0 : index
    %45 = vector.load %arg2[%c4, %c0_59, %c0_60] : memref<9x4x8xf32, #tpu.memory_space<vmem>>, vector<1x4x8xf32>
    %46 = vector.shape_cast %45 : vector<1x4x8xf32> to vector<4x8xf32>
    %cst_61 = arith.constant dense<0.000000e+00> : vector<64x8xf32>
    %47 = tpu.matmul %44, %46, %cst_61 {dimension_numbers = #tpu.dot_dimension_numbers<[1], [0], [0], [1], [0, 0, 1, 1], [], []>} : vector<64x4xf32>, vector<4x8xf32>, vector<64x8xf32> -> vector<64x8xf32>
    %48 = arith.addf %42, %47 : vector<64x8xf32>
    %c1_62 = arith.constant 1 : index
    %c2_63 = arith.constant 2 : index
    %c0_64 = arith.constant 0 : index
    %49 = vector.load %arg6[%c1_62, %c2_63, %c0_64] : memref<10x10x4xf32, #tpu.memory_space<vmem>>, vector<8x8x4xf32>
    %50 = vector.shape_cast %49 : vector<8x8x4xf32> to vector<64x4xf32>
    %c5 = arith.constant 5 : index
    %c0_65 = arith.constant 0 : index
    %c0_66 = arith.constant 0 : index
    %51 = vector.load %arg2[%c5, %c0_65, %c0_66] : memref<9x4x8xf32, #tpu.memory_space<vmem>>, vector<1x4x8xf32>
    %52 = vector.shape_cast %51 : vector<1x4x8xf32> to vector<4x8xf32>
    %cst_67 = arith.constant dense<0.000000e+00> : vector<64x8xf32>
    %53 = tpu.matmul %50, %52, %cst_67 {dimension_numbers = #tpu.dot_dimension_numbers<[1], [0], [0], [1], [0, 0, 1, 1], [], []>} : vector<64x4xf32>, vector<4x8xf32>, vector<64x8xf32> -> vector<64x8xf32>
    %54 = arith.addf %48, %53 : vector<64x8xf32>
    %c2_68 = arith.constant 2 : index
    %c0_69 = arith.constant 0 : index
    %c0_70 = arith.constant 0 : index
    %55 = vector.load %arg6[%c2_68, %c0_69, %c0_70] : memref<10x10x4xf32, #tpu.memory_space<vmem>>, vector<8x8x4xf32>
    %56 = vector.shape_cast %55 : vector<8x8x4xf32> to vector<64x4xf32>
    %c6 = arith.constant 6 : index
    %c0_71 = arith.constant 0 : index
    %c0_72 = arith.constant 0 : index
    %57 = vector.load %arg2[%c6, %c0_71, %c0_72] : memref<9x4x8xf32, #tpu.memory_space<vmem>>, vector<1x4x8xf32>
    %58 = vector.shape_cast %57 : vector<1x4x8xf32> to vector<4x8xf32>
    %cst_73 = arith.constant dense<0.000000e+00> : vector<64x8xf32>
    %59 = tpu.matmul %56, %58, %cst_73 {dimension_numbers = #tpu.dot_dimension_numbers<[1], [0], [0], [1], [0, 0, 1, 1], [], []>} : vector<64x4xf32>, vector<4x8xf32>, vector<64x8xf32> -> vector<64x8xf32>
    %60 = arith.addf %54, %59 : vector<64x8xf32>
    %c2_74 = arith.constant 2 : index
    %c1_75 = arith.constant 1 : index
    %c0_76 = arith.constant 0 : index
    %61 = vector.load %arg6[%c2_74, %c1_75, %c0_76] : memref<10x10x4xf32, #tpu.memory_space<vmem>>, vector<8x8x4xf32>
    %62 = vector.shape_cast %61 : vector<8x8x4xf32> to vector<64x4xf32>
    %c7 = arith.constant 7 : index
    %c0_77 = arith.constant 0 : index
    %c0_78 = arith.constant 0 : index
    %63 = vector.load %arg2[%c7, %c0_77, %c0_78] : memref<9x4x8xf32, #tpu.memory_space<vmem>>, vector<1x4x8xf32>
    %64 = vector.shape_cast %63 : vector<1x4x8xf32> to vector<4x8xf32>
    %cst_79 = arith.constant dense<0.000000e+00> : vector<64x8xf32>
    %65 = tpu.matmul %62, %64, %cst_79 {dimension_numbers = #tpu.dot_dimension_numbers<[1], [0], [0], [1], [0, 0, 1, 1], [], []>} : vector<64x4xf32>, vector<4x8xf32>, vector<64x8xf32> -> vector<64x8xf32>
    %66 = arith.addf %60, %65 : vector<64x8xf32>
    %c2_80 = arith.constant 2 : index
    %c2_81 = arith.constant 2 : index
    %c0_82 = arith.constant 0 : index
    %67 = vector.load %arg6[%c2_80, %c2_81, %c0_82] : memref<10x10x4xf32, #tpu.memory_space<vmem>>, vector<8x8x4xf32>
    %68 = vector.shape_cast %67 : vector<8x8x4xf32> to vector<64x4xf32>
    %c8 = arith.constant 8 : index
    %c0_83 = arith.constant 0 : index
    %c0_84 = arith.constant 0 : index
    %69 = vector.load %arg2[%c8, %c0_83, %c0_84] : memref<9x4x8xf32, #tpu.memory_space<vmem>>, vector<1x4x8xf32>
    %70 = vector.shape_cast %69 : vector<1x4x8xf32> to vector<4x8xf32>
    %cst_85 = arith.constant dense<0.000000e+00> : vector<64x8xf32>
    %71 = tpu.matmul %68, %70, %cst_85 {dimension_numbers = #tpu.dot_dimension_numbers<[1], [0], [0], [1], [0, 0, 1, 1], [], []>} : vector<64x4xf32>, vector<4x8xf32>, vector<64x8xf32> -> vector<64x8xf32>
    %72 = arith.addf %66, %71 : vector<64x8xf32>
    %c0_86 = arith.constant 0 : index
    %c0_87 = arith.constant 0 : index
    %73 = vector.load %arg3[%c0_86, %c0_87] : memref<1x8xf32, #tpu.memory_space<vmem>>, vector<1x8xf32>
    %74 = vector.broadcast %73 : vector<1x8xf32> to vector<64x8xf32>
    %75 = arith.addf %72, %74 : vector<64x8xf32>
    %76 = vector.shape_cast %75 : vector<64x8xf32> to vector<8x8x8xf32>
    %c0_88 = arith.constant 0 : index
    %c0_89 = arith.constant 0 : index
    %c0_90 = arith.constant 0 : index
    %c0_91 = arith.constant 0 : index
    %77 = vector.load %arg4[%c0_88, %c0_89, %c0_90, %c0_91] : memref<1x8x8x8xf32, #tpu.memory_space<vmem>>, vector<1x8x8x8xf32>
    %78 = vector.shape_cast %77 : vector<1x8x8x8xf32> to vector<8x8x8xf32>
    %79 = vector.shape_cast %76 : vector<8x8x8xf32> to vector<1x8x8x8xf32>
    tpu.vector_store %arg4[%c0_88, %c0_89, %c0_90, %c0_91], %79 {strides = array<i32>} : memref<1x8x8x8xf32, #tpu.memory_space<vmem>>, vector<1x8x8x8xf32>,
    %cst_92 = arith.constant dense<0.000000e+00> : vector<8xf32>
    %80 = vector.multi_reduction <add>, %75, %cst_92 [0] : vector<64x8xf32> to vector<8xf32>
    %81 = vector.shape_cast %80 : vector<8xf32> to vector<1x8xf32>
    %c0_93 = arith.constant 0 : index
    %c0_94 = arith.constant 0 : index
    %c0_95 = arith.constant 0 : index
    %82 = vector.load %arg5[%c0_93, %c0_94, %c0_95] : memref<1x2x8xf32, #tpu.memory_space<vmem>>, vector<1x1x8xf32>
    %83 = vector.shape_cast %82 : vector<1x1x8xf32> to vector<1x8xf32>
    %84 = vector.shape_cast %81 : vector<1x8xf32> to vector<1x1x8xf32>
    tpu.vector_store %arg5[%c0_93, %c0_94, %c0_95], %84 {strides = array<i32>} : memref<1x2x8xf32, #tpu.memory_space<vmem>>, vector<1x1x8xf32>,
    %85 = arith.mulf %75, %75 : vector<64x8xf32>
    %cst_96 = arith.constant dense<0.000000e+00> : vector<8xf32>
    %86 = vector.multi_reduction <add>, %85, %cst_96 [0] : vector<64x8xf32> to vector<8xf32>
    %87 = vector.shape_cast %86 : vector<8xf32> to vector<1x8xf32>
    %c0_97 = arith.constant 0 : index
    %c1_98 = arith.constant 1 : index
    %c0_99 = arith.constant 0 : index
    %88 = vector.load %arg5[%c0_97, %c1_98, %c0_99] : memref<1x2x8xf32, #tpu.memory_space<vmem>>, vector<1x1x8xf32>
    %89 = vector.shape_cast %88 : vector<1x1x8xf32> to vector<1x8xf32>
    %90 = vector.shape_cast %87 : vector<1x8xf32> to vector<1x1x8xf32>
    tpu.vector_store %arg5[%c0_97, %c1_98, %c0_99], %90 {strides = array<i32>} : memref<1x2x8xf32, #tpu.memory_space<vmem>>, vector<1x1x8xf32>,
    return
  }
  func.func @transform_0(%arg0: i32) -> (i32, i32, i32, i32) {
    %c0_i32 = arith.constant 0 : i32
    %c0_i32_0 = arith.constant 0 : i32
    %c0_i32_1 = arith.constant 0 : i32
    %c0_i32_2 = arith.constant 0 : i32
    return %arg0, %c0_i32, %c0_i32_0, %c0_i32_1 : i32, i32, i32, i32
  }
  func.func @transform_1(%arg0: i32) -> (i32, i32, i32) {
    %c0_i32 = arith.constant 0 : i32
    %c0_i32_0 = arith.constant 0 : i32
    %c0_i32_1 = arith.constant 0 : i32
    %c0_i32_2 = arith.constant 0 : i32
    return %c0_i32, %c0_i32_0, %c0_i32_1 : i32, i32, i32
  }
  func.func @transform_2(%arg0: i32) -> (i32, i32) {
    %c0_i32 = arith.constant 0 : i32
    %c0_i32_0 = arith.constant 0 : i32
    %c0_i32_1 = arith.constant 0 : i32
    return %c0_i32, %c0_i32_0 : i32, i32
  }
  func.func @transform_3(%arg0: i32) -> (i32, i32, i32, i32) {
    %c0_i32 = arith.constant 0 : i32
    %c0_i32_0 = arith.constant 0 : i32
    %c0_i32_1 = arith.constant 0 : i32
    %c0_i32_2 = arith.constant 0 : i32
    return %arg0, %c0_i32, %c0_i32_0, %c0_i32_1 : i32, i32, i32, i32
  }
  func.func @transform_4(%arg0: i32) -> (i32, i32, i32) {
    %c0_i32 = arith.constant 0 : i32
    %c0_i32_0 = arith.constant 0 : i32
    %c0_i32_1 = arith.constant 0 : i32
    return %arg0, %c0_i32, %c0_i32_0 : i32, i32, i32
  }
}

module attributes {stable_mosaic.version = 11 : i64} {
  func.func @_bnrelu_conv_kernel(%arg0: i32, %arg1: memref<1x8x8x8xf32, #tpu.memory_space<vmem>>, %arg2: memref<1x8xf32, #tpu.memory_space<vmem>>, %arg3: memref<1x8xf32, #tpu.memory_space<vmem>>, %arg4: memref<9x8x8xf32, #tpu.memory_space<vmem>>, %arg5: memref<1x8xf32, #tpu.memory_space<vmem>>, %arg6: memref<1x8x8x8xf32, #tpu.memory_space<vmem>>, %arg7: memref<1x2x8xf32, #tpu.memory_space<vmem>>, %arg8: memref<10x10x8xf32, #tpu.memory_space<vmem>>) attributes {dimension_semantics = [#tpu.dimension_semantics<parallel>], iteration_bounds = array<i64: 2>, scalar_prefetch = 0 : i64, scratch_operands = 1 : i64, tpu.core_type = #tpu.core_type<tc>, window_params = [{transform_indices = @transform_0, window_bounds = array<i64: 1, 8, 8, 8>}, {pipeline_mode = #tpu.pipeline_mode<synchronous>, transform_indices = @transform_1, window_bounds = array<i64: 1, 8>}, {pipeline_mode = #tpu.pipeline_mode<synchronous>, transform_indices = @transform_2, window_bounds = array<i64: 1, 8>}, {pipeline_mode = #tpu.pipeline_mode<synchronous>, transform_indices = @transform_3, window_bounds = array<i64: 9, 8, 8>}, {pipeline_mode = #tpu.pipeline_mode<synchronous>, transform_indices = @transform_4, window_bounds = array<i64: 1, 8>}, {transform_indices = @transform_5, window_bounds = array<i64: 1, 8, 8, 8>}, {transform_indices = @transform_6, window_bounds = array<i64: 1, 2, 8>}]} {
    %c0 = arith.constant 0 : index
    %c0_0 = arith.constant 0 : index
    %c0_1 = arith.constant 0 : index
    %c0_2 = arith.constant 0 : index
    %0 = vector.load %arg1[%c0, %c0_0, %c0_1, %c0_2] : memref<1x8x8x8xf32, #tpu.memory_space<vmem>>, vector<1x8x8x8xf32>
    %1 = vector.shape_cast %0 : vector<1x8x8x8xf32> to vector<8x8x8xf32>
    %c0_3 = arith.constant 0 : index
    %c0_4 = arith.constant 0 : index
    %2 = vector.load %arg2[%c0_3, %c0_4] : memref<1x8xf32, #tpu.memory_space<vmem>>, vector<1x8xf32>
    %3 = vector.shape_cast %2 : vector<1x8xf32> to vector<8xf32>
    %4 = vector.shape_cast %3 : vector<8xf32> to vector<1x1x8xf32>
    %5 = vector.broadcast %4 : vector<1x1x8xf32> to vector<8x8x8xf32>
    %6 = arith.mulf %1, %5 : vector<8x8x8xf32>
    %c0_5 = arith.constant 0 : index
    %c0_6 = arith.constant 0 : index
    %7 = vector.load %arg3[%c0_5, %c0_6] : memref<1x8xf32, #tpu.memory_space<vmem>>, vector<1x8xf32>
    %8 = vector.shape_cast %7 : vector<1x8xf32> to vector<8xf32>
    %9 = vector.shape_cast %8 : vector<8xf32> to vector<1x1x8xf32>
    %10 = vector.broadcast %9 : vector<1x1x8xf32> to vector<8x8x8xf32>
    %11 = arith.addf %6, %10 : vector<8x8x8xf32>
    %cst = arith.constant 0.000000e+00 : f32
    %12 = vector.broadcast %cst : f32 to vector<8x8x8xf32>
    %13 = arith.maximumf %11, %12 : vector<8x8x8xf32>
    %cst_7 = arith.constant 0.000000e+00 : f32
    %14 = vector.broadcast %cst_7 : f32 to vector<1x10x8xf32>
    %cst_8 = arith.constant 0.000000e+00 : f32
    %15 = vector.broadcast %cst_8 : f32 to vector<10x1x8xf32>
    %c0_9 = arith.constant 0 : index
    %c0_10 = arith.constant 0 : index
    %c0_11 = arith.constant 0 : index
    %16 = vector.load %arg8[%c0_9, %c0_10, %c0_11] : memref<10x10x8xf32, #tpu.memory_space<vmem>>, vector<1x10x8xf32>
    tpu.vector_store %arg8[%c0_9, %c0_10, %c0_11], %14 {strides = array<i32>} : memref<10x10x8xf32, #tpu.memory_space<vmem>>, vector<1x10x8xf32>,
    %c9 = arith.constant 9 : index
    %c0_12 = arith.constant 0 : index
    %c0_13 = arith.constant 0 : index
    %17 = vector.load %arg8[%c9, %c0_12, %c0_13] : memref<10x10x8xf32, #tpu.memory_space<vmem>>, vector<1x10x8xf32>
    tpu.vector_store %arg8[%c9, %c0_12, %c0_13], %14 {strides = array<i32>} : memref<10x10x8xf32, #tpu.memory_space<vmem>>, vector<1x10x8xf32>,
    %c0_14 = arith.constant 0 : index
    %c0_15 = arith.constant 0 : index
    %c0_16 = arith.constant 0 : index
    %18 = vector.load %arg8[%c0_14, %c0_15, %c0_16] : memref<10x10x8xf32, #tpu.memory_space<vmem>>, vector<10x1x8xf32>
    tpu.vector_store %arg8[%c0_14, %c0_15, %c0_16], %15 {strides = array<i32>} : memref<10x10x8xf32, #tpu.memory_space<vmem>>, vector<10x1x8xf32>,
    %c0_17 = arith.constant 0 : index
    %c9_18 = arith.constant 9 : index
    %c0_19 = arith.constant 0 : index
    %19 = vector.load %arg8[%c0_17, %c9_18, %c0_19] : memref<10x10x8xf32, #tpu.memory_space<vmem>>, vector<10x1x8xf32>
    tpu.vector_store %arg8[%c0_17, %c9_18, %c0_19], %15 {strides = array<i32>} : memref<10x10x8xf32, #tpu.memory_space<vmem>>, vector<10x1x8xf32>,
    %c1 = arith.constant 1 : index
    %c1_20 = arith.constant 1 : index
    %c0_21 = arith.constant 0 : index
    %20 = vector.load %arg8[%c1, %c1_20, %c0_21] : memref<10x10x8xf32, #tpu.memory_space<vmem>>, vector<8x8x8xf32>
    tpu.vector_store %arg8[%c1, %c1_20, %c0_21], %13 {strides = array<i32>} : memref<10x10x8xf32, #tpu.memory_space<vmem>>, vector<8x8x8xf32>,
    %cst_22 = arith.constant 0.000000e+00 : f32
    %21 = vector.broadcast %cst_22 : f32 to vector<64x8xf32>
    %c0_23 = arith.constant 0 : index
    %c0_24 = arith.constant 0 : index
    %c0_25 = arith.constant 0 : index
    %22 = vector.load %arg8[%c0_23, %c0_24, %c0_25] : memref<10x10x8xf32, #tpu.memory_space<vmem>>, vector<8x8x8xf32>
    %23 = vector.shape_cast %22 : vector<8x8x8xf32> to vector<64x8xf32>
    %c0_26 = arith.constant 0 : index
    %c0_27 = arith.constant 0 : index
    %c0_28 = arith.constant 0 : index
    %24 = vector.load %arg4[%c0_26, %c0_27, %c0_28] : memref<9x8x8xf32, #tpu.memory_space<vmem>>, vector<1x8x8xf32>
    %25 = vector.shape_cast %24 : vector<1x8x8xf32> to vector<8x8xf32>
    %cst_29 = arith.constant dense<0.000000e+00> : vector<64x8xf32>
    %26 = tpu.matmul %23, %25, %cst_29 {dimension_numbers = #tpu.dot_dimension_numbers<[1], [0], [0], [1], [0, 0, 1, 1], [], []>} : vector<64x8xf32>, vector<8x8xf32>, vector<64x8xf32> -> vector<64x8xf32>
    %27 = arith.addf %21, %26 : vector<64x8xf32>
    %c0_30 = arith.constant 0 : index
    %c1_31 = arith.constant 1 : index
    %c0_32 = arith.constant 0 : index
    %28 = vector.load %arg8[%c0_30, %c1_31, %c0_32] : memref<10x10x8xf32, #tpu.memory_space<vmem>>, vector<8x8x8xf32>
    %29 = vector.shape_cast %28 : vector<8x8x8xf32> to vector<64x8xf32>
    %c1_33 = arith.constant 1 : index
    %c0_34 = arith.constant 0 : index
    %c0_35 = arith.constant 0 : index
    %30 = vector.load %arg4[%c1_33, %c0_34, %c0_35] : memref<9x8x8xf32, #tpu.memory_space<vmem>>, vector<1x8x8xf32>
    %31 = vector.shape_cast %30 : vector<1x8x8xf32> to vector<8x8xf32>
    %cst_36 = arith.constant dense<0.000000e+00> : vector<64x8xf32>
    %32 = tpu.matmul %29, %31, %cst_36 {dimension_numbers = #tpu.dot_dimension_numbers<[1], [0], [0], [1], [0, 0, 1, 1], [], []>} : vector<64x8xf32>, vector<8x8xf32>, vector<64x8xf32> -> vector<64x8xf32>
    %33 = arith.addf %27, %32 : vector<64x8xf32>
    %c0_37 = arith.constant 0 : index
    %c2 = arith.constant 2 : index
    %c0_38 = arith.constant 0 : index
    %34 = vector.load %arg8[%c0_37, %c2, %c0_38] : memref<10x10x8xf32, #tpu.memory_space<vmem>>, vector<8x8x8xf32>
    %35 = vector.shape_cast %34 : vector<8x8x8xf32> to vector<64x8xf32>
    %c2_39 = arith.constant 2 : index
    %c0_40 = arith.constant 0 : index
    %c0_41 = arith.constant 0 : index
    %36 = vector.load %arg4[%c2_39, %c0_40, %c0_41] : memref<9x8x8xf32, #tpu.memory_space<vmem>>, vector<1x8x8xf32>
    %37 = vector.shape_cast %36 : vector<1x8x8xf32> to vector<8x8xf32>
    %cst_42 = arith.constant dense<0.000000e+00> : vector<64x8xf32>
    %38 = tpu.matmul %35, %37, %cst_42 {dimension_numbers = #tpu.dot_dimension_numbers<[1], [0], [0], [1], [0, 0, 1, 1], [], []>} : vector<64x8xf32>, vector<8x8xf32>, vector<64x8xf32> -> vector<64x8xf32>
    %39 = arith.addf %33, %38 : vector<64x8xf32>
    %c1_43 = arith.constant 1 : index
    %c0_44 = arith.constant 0 : index
    %c0_45 = arith.constant 0 : index
    %40 = vector.load %arg8[%c1_43, %c0_44, %c0_45] : memref<10x10x8xf32, #tpu.memory_space<vmem>>, vector<8x8x8xf32>
    %41 = vector.shape_cast %40 : vector<8x8x8xf32> to vector<64x8xf32>
    %c3 = arith.constant 3 : index
    %c0_46 = arith.constant 0 : index
    %c0_47 = arith.constant 0 : index
    %42 = vector.load %arg4[%c3, %c0_46, %c0_47] : memref<9x8x8xf32, #tpu.memory_space<vmem>>, vector<1x8x8xf32>
    %43 = vector.shape_cast %42 : vector<1x8x8xf32> to vector<8x8xf32>
    %cst_48 = arith.constant dense<0.000000e+00> : vector<64x8xf32>
    %44 = tpu.matmul %41, %43, %cst_48 {dimension_numbers = #tpu.dot_dimension_numbers<[1], [0], [0], [1], [0, 0, 1, 1], [], []>} : vector<64x8xf32>, vector<8x8xf32>, vector<64x8xf32> -> vector<64x8xf32>
    %45 = arith.addf %39, %44 : vector<64x8xf32>
    %c1_49 = arith.constant 1 : index
    %c1_50 = arith.constant 1 : index
    %c0_51 = arith.constant 0 : index
    %46 = vector.load %arg8[%c1_49, %c1_50, %c0_51] : memref<10x10x8xf32, #tpu.memory_space<vmem>>, vector<8x8x8xf32>
    %47 = vector.shape_cast %46 : vector<8x8x8xf32> to vector<64x8xf32>
    %c4 = arith.constant 4 : index
    %c0_52 = arith.constant 0 : index
    %c0_53 = arith.constant 0 : index
    %48 = vector.load %arg4[%c4, %c0_52, %c0_53] : memref<9x8x8xf32, #tpu.memory_space<vmem>>, vector<1x8x8xf32>
    %49 = vector.shape_cast %48 : vector<1x8x8xf32> to vector<8x8xf32>
    %cst_54 = arith.constant dense<0.000000e+00> : vector<64x8xf32>
    %50 = tpu.matmul %47, %49, %cst_54 {dimension_numbers = #tpu.dot_dimension_numbers<[1], [0], [0], [1], [0, 0, 1, 1], [], []>} : vector<64x8xf32>, vector<8x8xf32>, vector<64x8xf32> -> vector<64x8xf32>
    %51 = arith.addf %45, %50 : vector<64x8xf32>
    %c1_55 = arith.constant 1 : index
    %c2_56 = arith.constant 2 : index
    %c0_57 = arith.constant 0 : index
    %52 = vector.load %arg8[%c1_55, %c2_56, %c0_57] : memref<10x10x8xf32, #tpu.memory_space<vmem>>, vector<8x8x8xf32>
    %53 = vector.shape_cast %52 : vector<8x8x8xf32> to vector<64x8xf32>
    %c5 = arith.constant 5 : index
    %c0_58 = arith.constant 0 : index
    %c0_59 = arith.constant 0 : index
    %54 = vector.load %arg4[%c5, %c0_58, %c0_59] : memref<9x8x8xf32, #tpu.memory_space<vmem>>, vector<1x8x8xf32>
    %55 = vector.shape_cast %54 : vector<1x8x8xf32> to vector<8x8xf32>
    %cst_60 = arith.constant dense<0.000000e+00> : vector<64x8xf32>
    %56 = tpu.matmul %53, %55, %cst_60 {dimension_numbers = #tpu.dot_dimension_numbers<[1], [0], [0], [1], [0, 0, 1, 1], [], []>} : vector<64x8xf32>, vector<8x8xf32>, vector<64x8xf32> -> vector<64x8xf32>
    %57 = arith.addf %51, %56 : vector<64x8xf32>
    %c2_61 = arith.constant 2 : index
    %c0_62 = arith.constant 0 : index
    %c0_63 = arith.constant 0 : index
    %58 = vector.load %arg8[%c2_61, %c0_62, %c0_63] : memref<10x10x8xf32, #tpu.memory_space<vmem>>, vector<8x8x8xf32>
    %59 = vector.shape_cast %58 : vector<8x8x8xf32> to vector<64x8xf32>
    %c6 = arith.constant 6 : index
    %c0_64 = arith.constant 0 : index
    %c0_65 = arith.constant 0 : index
    %60 = vector.load %arg4[%c6, %c0_64, %c0_65] : memref<9x8x8xf32, #tpu.memory_space<vmem>>, vector<1x8x8xf32>
    %61 = vector.shape_cast %60 : vector<1x8x8xf32> to vector<8x8xf32>
    %cst_66 = arith.constant dense<0.000000e+00> : vector<64x8xf32>
    %62 = tpu.matmul %59, %61, %cst_66 {dimension_numbers = #tpu.dot_dimension_numbers<[1], [0], [0], [1], [0, 0, 1, 1], [], []>} : vector<64x8xf32>, vector<8x8xf32>, vector<64x8xf32> -> vector<64x8xf32>
    %63 = arith.addf %57, %62 : vector<64x8xf32>
    %c2_67 = arith.constant 2 : index
    %c1_68 = arith.constant 1 : index
    %c0_69 = arith.constant 0 : index
    %64 = vector.load %arg8[%c2_67, %c1_68, %c0_69] : memref<10x10x8xf32, #tpu.memory_space<vmem>>, vector<8x8x8xf32>
    %65 = vector.shape_cast %64 : vector<8x8x8xf32> to vector<64x8xf32>
    %c7 = arith.constant 7 : index
    %c0_70 = arith.constant 0 : index
    %c0_71 = arith.constant 0 : index
    %66 = vector.load %arg4[%c7, %c0_70, %c0_71] : memref<9x8x8xf32, #tpu.memory_space<vmem>>, vector<1x8x8xf32>
    %67 = vector.shape_cast %66 : vector<1x8x8xf32> to vector<8x8xf32>
    %cst_72 = arith.constant dense<0.000000e+00> : vector<64x8xf32>
    %68 = tpu.matmul %65, %67, %cst_72 {dimension_numbers = #tpu.dot_dimension_numbers<[1], [0], [0], [1], [0, 0, 1, 1], [], []>} : vector<64x8xf32>, vector<8x8xf32>, vector<64x8xf32> -> vector<64x8xf32>
    %69 = arith.addf %63, %68 : vector<64x8xf32>
    %c2_73 = arith.constant 2 : index
    %c2_74 = arith.constant 2 : index
    %c0_75 = arith.constant 0 : index
    %70 = vector.load %arg8[%c2_73, %c2_74, %c0_75] : memref<10x10x8xf32, #tpu.memory_space<vmem>>, vector<8x8x8xf32>
    %71 = vector.shape_cast %70 : vector<8x8x8xf32> to vector<64x8xf32>
    %c8 = arith.constant 8 : index
    %c0_76 = arith.constant 0 : index
    %c0_77 = arith.constant 0 : index
    %72 = vector.load %arg4[%c8, %c0_76, %c0_77] : memref<9x8x8xf32, #tpu.memory_space<vmem>>, vector<1x8x8xf32>
    %73 = vector.shape_cast %72 : vector<1x8x8xf32> to vector<8x8xf32>
    %cst_78 = arith.constant dense<0.000000e+00> : vector<64x8xf32>
    %74 = tpu.matmul %71, %73, %cst_78 {dimension_numbers = #tpu.dot_dimension_numbers<[1], [0], [0], [1], [0, 0, 1, 1], [], []>} : vector<64x8xf32>, vector<8x8xf32>, vector<64x8xf32> -> vector<64x8xf32>
    %75 = arith.addf %69, %74 : vector<64x8xf32>
    %c0_79 = arith.constant 0 : index
    %c0_80 = arith.constant 0 : index
    %76 = vector.load %arg5[%c0_79, %c0_80] : memref<1x8xf32, #tpu.memory_space<vmem>>, vector<1x8xf32>
    %77 = vector.broadcast %76 : vector<1x8xf32> to vector<64x8xf32>
    %78 = arith.addf %75, %77 : vector<64x8xf32>
    %79 = vector.shape_cast %78 : vector<64x8xf32> to vector<8x8x8xf32>
    %c0_81 = arith.constant 0 : index
    %c0_82 = arith.constant 0 : index
    %c0_83 = arith.constant 0 : index
    %c0_84 = arith.constant 0 : index
    %80 = vector.load %arg6[%c0_81, %c0_82, %c0_83, %c0_84] : memref<1x8x8x8xf32, #tpu.memory_space<vmem>>, vector<1x8x8x8xf32>
    %81 = vector.shape_cast %80 : vector<1x8x8x8xf32> to vector<8x8x8xf32>
    %82 = vector.shape_cast %79 : vector<8x8x8xf32> to vector<1x8x8x8xf32>
    tpu.vector_store %arg6[%c0_81, %c0_82, %c0_83, %c0_84], %82 {strides = array<i32>} : memref<1x8x8x8xf32, #tpu.memory_space<vmem>>, vector<1x8x8x8xf32>,
    %cst_85 = arith.constant dense<0.000000e+00> : vector<8xf32>
    %83 = vector.multi_reduction <add>, %78, %cst_85 [0] : vector<64x8xf32> to vector<8xf32>
    %84 = vector.shape_cast %83 : vector<8xf32> to vector<1x8xf32>
    %c0_86 = arith.constant 0 : index
    %c0_87 = arith.constant 0 : index
    %c0_88 = arith.constant 0 : index
    %85 = vector.load %arg7[%c0_86, %c0_87, %c0_88] : memref<1x2x8xf32, #tpu.memory_space<vmem>>, vector<1x1x8xf32>
    %86 = vector.shape_cast %85 : vector<1x1x8xf32> to vector<1x8xf32>
    %87 = vector.shape_cast %84 : vector<1x8xf32> to vector<1x1x8xf32>
    tpu.vector_store %arg7[%c0_86, %c0_87, %c0_88], %87 {strides = array<i32>} : memref<1x2x8xf32, #tpu.memory_space<vmem>>, vector<1x1x8xf32>,
    %88 = arith.mulf %78, %78 : vector<64x8xf32>
    %cst_89 = arith.constant dense<0.000000e+00> : vector<8xf32>
    %89 = vector.multi_reduction <add>, %88, %cst_89 [0] : vector<64x8xf32> to vector<8xf32>
    %90 = vector.shape_cast %89 : vector<8xf32> to vector<1x8xf32>
    %c0_90 = arith.constant 0 : index
    %c1_91 = arith.constant 1 : index
    %c0_92 = arith.constant 0 : index
    %91 = vector.load %arg7[%c0_90, %c1_91, %c0_92] : memref<1x2x8xf32, #tpu.memory_space<vmem>>, vector<1x1x8xf32>
    %92 = vector.shape_cast %91 : vector<1x1x8xf32> to vector<1x8xf32>
    %93 = vector.shape_cast %90 : vector<1x8xf32> to vector<1x1x8xf32>
    tpu.vector_store %arg7[%c0_90, %c1_91, %c0_92], %93 {strides = array<i32>} : memref<1x2x8xf32, #tpu.memory_space<vmem>>, vector<1x1x8xf32>,
    return
  }
  func.func @transform_0(%arg0: i32) -> (i32, i32, i32, i32) {
    %c0_i32 = arith.constant 0 : i32
    %c0_i32_0 = arith.constant 0 : i32
    %c0_i32_1 = arith.constant 0 : i32
    %c0_i32_2 = arith.constant 0 : i32
    return %arg0, %c0_i32, %c0_i32_0, %c0_i32_1 : i32, i32, i32, i32
  }
  func.func @transform_1(%arg0: i32) -> (i32, i32) {
    %c0_i32 = arith.constant 0 : i32
    %c0_i32_0 = arith.constant 0 : i32
    %c0_i32_1 = arith.constant 0 : i32
    return %c0_i32, %c0_i32_0 : i32, i32
  }
  func.func @transform_2(%arg0: i32) -> (i32, i32) {
    %c0_i32 = arith.constant 0 : i32
    %c0_i32_0 = arith.constant 0 : i32
    %c0_i32_1 = arith.constant 0 : i32
    return %c0_i32, %c0_i32_0 : i32, i32
  }
  func.func @transform_3(%arg0: i32) -> (i32, i32, i32) {
    %c0_i32 = arith.constant 0 : i32
    %c0_i32_0 = arith.constant 0 : i32
    %c0_i32_1 = arith.constant 0 : i32
    %c0_i32_2 = arith.constant 0 : i32
    return %c0_i32, %c0_i32_0, %c0_i32_1 : i32, i32, i32
  }
  func.func @transform_4(%arg0: i32) -> (i32, i32) {
    %c0_i32 = arith.constant 0 : i32
    %c0_i32_0 = arith.constant 0 : i32
    %c0_i32_1 = arith.constant 0 : i32
    return %c0_i32, %c0_i32_0 : i32, i32
  }
  func.func @transform_5(%arg0: i32) -> (i32, i32, i32, i32) {
    %c0_i32 = arith.constant 0 : i32
    %c0_i32_0 = arith.constant 0 : i32
    %c0_i32_1 = arith.constant 0 : i32
    %c0_i32_2 = arith.constant 0 : i32
    return %arg0, %c0_i32, %c0_i32_0, %c0_i32_1 : i32, i32, i32, i32
  }
  func.func @transform_6(%arg0: i32) -> (i32, i32, i32) {
    %c0_i32 = arith.constant 0 : i32
    %c0_i32_0 = arith.constant 0 : i32
    %c0_i32_1 = arith.constant 0 : i32
    return %arg0, %c0_i32, %c0_i32_0 : i32, i32, i32
  }
}

module attributes {stable_mosaic.version = 11 : i64} {
  func.func @_bnrelu_kernel(%arg0: i32, %arg1: memref<1x8x8x8xf32, #tpu.memory_space<vmem>>, %arg2: memref<1x8xf32, #tpu.memory_space<vmem>>, %arg3: memref<1x8xf32, #tpu.memory_space<vmem>>, %arg4: memref<1x8x8x8xf32, #tpu.memory_space<vmem>>) attributes {dimension_semantics = [#tpu.dimension_semantics<parallel>], iteration_bounds = array<i64: 2>, scalar_prefetch = 0 : i64, scratch_operands = 0 : i64, tpu.core_type = #tpu.core_type<tc>, window_params = [{transform_indices = @transform_0, window_bounds = array<i64: 1, 8, 8, 8>}, {pipeline_mode = #tpu.pipeline_mode<synchronous>, transform_indices = @transform_1, window_bounds = array<i64: 1, 8>}, {pipeline_mode = #tpu.pipeline_mode<synchronous>, transform_indices = @transform_2, window_bounds = array<i64: 1, 8>}, {transform_indices = @transform_3, window_bounds = array<i64: 1, 8, 8, 8>}]} {
    %c0 = arith.constant 0 : index
    %c0_0 = arith.constant 0 : index
    %c0_1 = arith.constant 0 : index
    %c0_2 = arith.constant 0 : index
    %0 = vector.load %arg1[%c0, %c0_0, %c0_1, %c0_2] : memref<1x8x8x8xf32, #tpu.memory_space<vmem>>, vector<1x8x8x8xf32>
    %1 = vector.shape_cast %0 : vector<1x8x8x8xf32> to vector<8x8x8xf32>
    %c0_3 = arith.constant 0 : index
    %c0_4 = arith.constant 0 : index
    %2 = vector.load %arg2[%c0_3, %c0_4] : memref<1x8xf32, #tpu.memory_space<vmem>>, vector<1x8xf32>
    %3 = vector.shape_cast %2 : vector<1x8xf32> to vector<8xf32>
    %4 = vector.shape_cast %3 : vector<8xf32> to vector<1x1x8xf32>
    %5 = vector.broadcast %4 : vector<1x1x8xf32> to vector<8x8x8xf32>
    %6 = arith.mulf %1, %5 : vector<8x8x8xf32>
    %c0_5 = arith.constant 0 : index
    %c0_6 = arith.constant 0 : index
    %7 = vector.load %arg3[%c0_5, %c0_6] : memref<1x8xf32, #tpu.memory_space<vmem>>, vector<1x8xf32>
    %8 = vector.shape_cast %7 : vector<1x8xf32> to vector<8xf32>
    %9 = vector.shape_cast %8 : vector<8xf32> to vector<1x1x8xf32>
    %10 = vector.broadcast %9 : vector<1x1x8xf32> to vector<8x8x8xf32>
    %11 = arith.addf %6, %10 : vector<8x8x8xf32>
    %cst = arith.constant 0.000000e+00 : f32
    %12 = vector.broadcast %cst : f32 to vector<8x8x8xf32>
    %13 = arith.maximumf %11, %12 : vector<8x8x8xf32>
    %c0_7 = arith.constant 0 : index
    %c0_8 = arith.constant 0 : index
    %c0_9 = arith.constant 0 : index
    %c0_10 = arith.constant 0 : index
    %14 = vector.load %arg4[%c0_7, %c0_8, %c0_9, %c0_10] : memref<1x8x8x8xf32, #tpu.memory_space<vmem>>, vector<1x8x8x8xf32>
    %15 = vector.shape_cast %14 : vector<1x8x8x8xf32> to vector<8x8x8xf32>
    %16 = vector.shape_cast %13 : vector<8x8x8xf32> to vector<1x8x8x8xf32>
    tpu.vector_store %arg4[%c0_7, %c0_8, %c0_9, %c0_10], %16 {strides = array<i32>} : memref<1x8x8x8xf32, #tpu.memory_space<vmem>>, vector<1x8x8x8xf32>,
    return
  }
  func.func @transform_0(%arg0: i32) -> (i32, i32, i32, i32) {
    %c0_i32 = arith.constant 0 : i32
    %c0_i32_0 = arith.constant 0 : i32
    %c0_i32_1 = arith.constant 0 : i32
    %c0_i32_2 = arith.constant 0 : i32
    return %arg0, %c0_i32, %c0_i32_0, %c0_i32_1 : i32, i32, i32, i32
  }
  func.func @transform_1(%arg0: i32) -> (i32, i32) {
    %c0_i32 = arith.constant 0 : i32
    %c0_i32_0 = arith.constant 0 : i32
    %c0_i32_1 = arith.constant 0 : i32
    return %c0_i32, %c0_i32_0 : i32, i32
  }
  func.func @transform_2(%arg0: i32) -> (i32, i32) {
    %c0_i32 = arith.constant 0 : i32
    %c0_i32_0 = arith.constant 0 : i32
    %c0_i32_1 = arith.constant 0 : i32
    return %c0_i32, %c0_i32_0 : i32, i32
  }
  func.func @transform_3(%arg0: i32) -> (i32, i32, i32, i32) {
    %c0_i32 = arith.constant 0 : i32
    %c0_i32_0 = arith.constant 0 : i32
    %c0_i32_1 = arith.constant 0 : i32
    %c0_i32_2 = arith.constant 0 : i32
    return %arg0, %c0_i32, %c0_i32_0, %c0_i32_1 : i32, i32, i32, i32
  }
}

</mosaic_0001>

<llo_original>
// kernel: down_block.5
$region0: #{down_block.5}
  #allocation0 [shape = 'u32[]', space=smem, size = 0x4, offset = 0x4, fixed_abs, tag = 'smem constant byte address 0x4 - core index']
  #allocation1 [shape = 'u32[144,128]{1,0:T(1,128)}', space=vmem, size = 0x12000, scoped, tag = 'internal scratch']
  %s0 = inlined_call_operand.vmem [shape: f32[2,8,8,8], index: 0, kind: input, shape index: {}]
  %s1 = inlined_call_operand.vmem [shape: f32[1,8], index: 1, kind: input, shape index: {}]
  %s2 = inlined_call_operand.vmem [shape: f32[1,8], index: 2, kind: input, shape index: {}]
  %s3 = inlined_call_operand.vmem [shape: f32[2,8,8,8], index: 3, kind: output, shape index: {}]
  %s4 = sld [smem:[#allocation0]]
  $region45: #{down_block.5} parent=0
    _
  %s6 = ssub.s32 1, %s4
  %s7 = scalar_select 0, %s6, %s4
  loop: start=0, step=1, limit=4
  $region2: #{down_block.5} parent=0 // loop_pre_header
    _
  $region3: #{down_block.5} parent=0 // loop_header
    %s9 = sphi 0, %s13
    %p10 = scmp.ge.s32.totalorder %s9, 4
    %s19 = sphi 0, %s21
    %s22 = sphi 0, %s19
    %s23 = sphi 0, %s22
    %s39 = sphi 0, %s23
    %s43 = sphi 0, %s43
    %s45 = sphi 0, %s43
    %s46 = sphi 0, %s45
    %s60 = sphi 0, %s46
    %s64 = sphi 0, %s64
    %s66 = sphi 0, %s64
    %s67 = sphi 0, %s66
    %s81 = sphi 0, %s67
    %s87 = sphi 0, %s89
    %s90 = sphi 0, %s87
    %s91 = sphi 0, %s90
    %s107 = sphi 0, %s91
  $region4: #{down_block.5} parent=0 // loop_header_branch
    %12 = sbr.rel (%p10) target = $region8
  $region5: #{down_block.5} parent=0 // loop_body
    %s14 = ssub.s32 %s9, 1
    %s15 = ssub.s32 %s9, 2
    %s16 = sadd.s32 %s9, 1
    %s17 = ssub.s32 %s9, %s16
    %p18 = scmp.eq.s32.totalorder %s17, 0
    %s20 = sadd.s32 %s19, 1
    %s21 = scalar_select %p18, %s19, %s20
    %p24 = pneg %p18
    %p25 = scmp.eq.s32.totalorder %s9, 1
    %p26 = por %p24, %p25
    %p27 = scmp.ne.s32.totalorder %s19, %s22
    %p28 = scmp.eq.s32.totalorder %s9, 0
    %p29 = por %p27, %p28
    %p30 = scmp.ne.s32.totalorder %s19, %s22
    %p31 = scmp.eq.s32.totalorder %s14, 1
    %p32 = por %p30, %p31
    %p33 = scmp.ne.s32.totalorder %s22, %s23
    %p34 = scmp.eq.s32.totalorder %s14, 0
    %p35 = por %p33, %p34
    %p36 = scmp.ne.s32.totalorder %s22, %s23
    %p37 = scmp.eq.s32.totalorder %s15, 1
    %p38 = por %p36, %p37
    %p40 = scmp.ne.s32.totalorder %s23, %s39
    %p41 = scmp.eq.s32.totalorder %s15, 0
    %p42 = por %p40, %p41
    %s44 = sadd.s32 %s43, 1
    %p47 = scmp.eq.s32.totalorder %s9, 1
    %p48 = scmp.ne.s32.totalorder %s43, %s45
    %p49 = scmp.eq.s32.totalorder %s9, 0
    %p50 = por %p48, %p49
    %p51 = scmp.ne.s32.totalorder %s43, %s45
    %p52 = scmp.eq.s32.totalorder %s14, 1
    %p53 = por %p51, %p52
    %p54 = scmp.ne.s32.totalorder %s45, %s46
    %p55 = scmp.eq.s32.totalorder %s14, 0
    %p56 = por %p54, %p55
    %p57 = scmp.ne.s32.totalorder %s45, %s46
    %p58 = scmp.eq.s32.totalorder %s15, 1
    %p59 = por %p57, %p58
    %p61 = scmp.ne.s32.totalorder %s46, %s60
    %p62 = scmp.eq.s32.totalorder %s15, 0
    %p63 = por %p61, %p62
    %s65 = sadd.s32 %s64, 1
    %p68 = scmp.eq.s32.totalorder %s9, 1
    %p69 = scmp.ne.s32.totalorder %s64, %s66
    %p70 = scmp.eq.s32.totalorder %s9, 0
    %p71 = por %p69, %p70
    %p72 = scmp.ne.s32.totalorder %s64, %s66
    %p73 = scmp.eq.s32.totalorder %s14, 1
    %p74 = por %p72, %p73
    %p75 = scmp.ne.s32.totalorder %s66, %s67
    %p76 = scmp.eq.s32.totalorder %s14, 0
    %p77 = por %p75, %p76
    %p78 = scmp.ne.s32.totalorder %s66, %s67
    %p79 = scmp.eq.s32.totalorder %s15, 1
    %p80 = por %p78, %p79
    %p82 = scmp.ne.s32.totalorder %s67, %s81
    %p83 = scmp.eq.s32.totalorder %s15, 0
    %p84 = por %p82, %p83
    %s85 = ssub.s32 %s9, %s16
    %p86 = scmp.eq.s32.totalorder %s85, 0
    %s88 = sadd.s32 %s87, 1
    %s89 = scalar_select %p86, %s87, %s88
    %p92 = pneg %p86
    %p93 = scmp.eq.s32.totalorder %s9, 1
    %p94 = por %p92, %p93
    %p95 = scmp.ne.s32.totalorder %s87, %s90
    %p96 = scmp.eq.s32.totalorder %s9, 0
    %p97 = por %p95, %p96
    %p98 = scmp.ne.s32.totalorder %s87, %s90
    %p99 = scmp.eq.s32.totalorder %s14, 1
    %p100 = por %p98, %p99
    %p101 = scmp.ne.s32.totalorder %s90, %s91
    %p102 = scmp.eq.s32.totalorder %s14, 0
    %p103 = por %p101, %p102
    %p104 = scmp.ne.s32.totalorder %s90, %s91
    %p105 = scmp.eq.s32.totalorder %s15, 1
    %p106 = por %p104, %p105
    %p108 = scmp.ne.s32.totalorder %s91, %s107
    %p109 = scmp.eq.s32.totalorder %s15, 0
    %p110 = por %p108, %p109
    %p111 = scmp.le.s32.totalorder 1, %s9
    %p112 = scmp.lt.s32.totalorder %s9, 3
    %p113 = pnand %p111, %p112
    %p114 = pneg %p113
    // Predicated region
    $region9: #{down_block.5} parent=5 // pred_check
      _
    $region10: #{down_block.5} parent=5 // pred_check_branch
      %116 = sbr.rel (%p113) target = $region12
    $region11: #{down_block.5} parent=5 // pred_region
      %s117 = ssub.s32 %s9, 1
      // Predicated region
      $region13: #{down_block.5} parent=11 // pred_check
        %p118 = pneg %p56
      $region14: #{down_block.5} parent=11 // pred_check_branch
        %120 = sbr.rel (%p118) target = $region16
      $region15: #{down_block.5} parent=11 // pred_region
        _
      $region16: #{down_block.5} parent=11 // pred_fallthru
        _
      // Predicated region
      $region17: #{down_block.5} parent=11 // pred_check
        %p121 = pneg %p77
      $region18: #{down_block.5} parent=11 // pred_check_branch
        %123 = sbr.rel (%p121) target = $region20
      $region19: #{down_block.5} parent=11 // pred_region
        _
      $region20: #{down_block.5} parent=11 // pred_fallthru
        _
    $region12: #{down_block.5} parent=5 // pred_fallthru
      _
    %p124 = scmp.lt.s32.totalorder %s9, 2
    // Predicated region
    $region21: #{down_block.5} parent=5 // pred_check
      %p125 = pneg %p124
    $region22: #{down_block.5} parent=5 // pred_check_branch
      %127 = sbr.rel (%p125) target = $region24
    $region23: #{down_block.5} parent=5 // pred_region
      // Predicated region
      $region25: #{down_block.5} parent=23 // pred_check
        %p128 = pneg %p29
      $region26: #{down_block.5} parent=23 // pred_check_branch
        %130 = sbr.rel (%p128) target = $region28
      $region27: #{down_block.5} parent=23 // pred_region
        %p131 = scmp.lt.s32.totalorder %s9, 1
        %s132 = scalar_select %p131, %s9, 1
        %s133 = smul.addr %s132, 8
        %s134 = smul.addr %s133, 8
        %s135 = scalar_lea.vmem %s0, %s134
      $region28: #{down_block.5} parent=23 // pred_fallthru
        _
    $region24: #{down_block.5} parent=5 // pred_fallthru
      _
    %p136 = scmp.le.s32.totalorder 1, %s9
    %p137 = scmp.lt.s32.totalorder %s9, 3
    %p138 = pnand %p136, %p137
    %p139 = pneg %p138
    // Predicated region
    $region29: #{down_block.5} parent=5 // pred_check
      _
    $region30: #{down_block.5} parent=5 // pred_check_branch
      %141 = sbr.rel (%p138) target = $region32
    $region31: #{down_block.5} parent=5 // pred_region
      %s142 = ssub.s32 %s9, 1
      %p143 = scmp.lt.s32.totalorder %s14, 1
      %s144 = scalar_select %p143, %s14, 1
      %s145 = smul.addr %s144, 8
      %s146 = smul.addr %s145, 8
      %s147 = scalar_lea.vmem %s0, %s146
      %p148 = pneg %p35
      %p149 = pneg %p32
      %p150 = pneg %p56
      %p151 = pneg %p53
      %p152 = pneg %p77
      %p153 = pneg %p74
      %p154 = pneg %p103
      %p155 = pneg %p100
      %p156 = scmp.lt.s32.totalorder %s14, 1
      %s157 = scalar_select %p156, %s14, 1
      %s158 = smul.addr %s157, 8
      %s159 = smul.addr %s158, 8
      %s160 = scalar_lea.vmem %s3, %s159
      %p161 = scmp.lt.s32.totalorder %s14, 1
      %s162 = scalar_select %p161, %s14, 1
      %s163 = smul.addr %s162, 8
      %s164 = smul.addr %s163, 8
      %s165 = scalar_lea.vmem %s0, %s164
      %p166 = scmp.lt.s32.totalorder %s14, 1
      %s167 = scalar_select %p166, %s14, 1
      %s168 = smul.addr %s167, 8
      %s169 = smul.addr %s168, 8
      %s170 = scalar_lea.vmem %s3, %s169
      %v171 = vld [vmem:[%s165] sm:$0xff]
      %v172 = vld [vmem:[%s165 + $0x8] sm:$0xff]
      %v173 = vld [vmem:[%s165 + $0x10] sm:$0xff]
      %v174 = vld [vmem:[%s165 + $0x18] sm:$0xff]
      %v175 = vld [vmem:[%s165 + $0x20] sm:$0xff]
      %v176 = vld [vmem:[%s165 + $0x28] sm:$0xff]
      %v177 = vld [vmem:[%s165 + $0x30] sm:$0xff]
      %v178 = vld [vmem:[%s165 + $0x38] sm:$0xff]
      %v179 = vld [vmem:[%s1] sm:$0x1]
      %v181 = vlaneseq
      %v182 = vshrl.u32 %v181, 7
      %v183 = vsub.s32 0, %v182
      %v184 = vrot.slane %v179, %v183
      %v186 = vmul.f32 %v171, %v184
      %v187 = vmul.f32 %v172, %v184
      %v188 = vmul.f32 %v173, %v184
      %v189 = vmul.f32 %v174, %v184
      %v190 = vmul.f32 %v175, %v184
      %v191 = vmul.f32 %v176, %v184
      %v192 = vmul.f32 %v177, %v184
      %v193 = vmul.f32 %v178, %v184
      %v194 = vld [vmem:[%s2] sm:$0x1]
      %v196 = vlaneseq
      %v197 = vshrl.u32 %v196, 7
      %v198 = vsub.s32 0, %v197
      %v199 = vrot.slane %v194, %v198
      %v201 = vadd.f32 %v186, %v199
      %v202 = vadd.f32 %v187, %v199
      %v203 = vadd.f32 %v188, %v199
      %v204 = vadd.f32 %v189, %v199
      %v205 = vadd.f32 %v190, %v199
      %v206 = vadd.f32 %v191, %v199
      %v207 = vadd.f32 %v192, %v199
      %v208 = vadd.f32 %v193, %v199
      %v209 = vmax.f32 %v201, 0.0
      %v210 = vmax.f32 %v202, 0.0
      %v211 = vmax.f32 %v203, 0.0
      %v212 = vmax.f32 %v204, 0.0
      %v213 = vmax.f32 %v205, 0.0
      %v214 = vmax.f32 %v206, 0.0
      %v215 = vmax.f32 %v207, 0.0
      %v216 = vmax.f32 %v208, 0.0
      %vm217 = vcmask 64512
      %218 = vst.msk [vmem:[%s170] sm:$0xff] %vm217, %v209
      %219 = vst.msk [vmem:[%s170 + $0x8] sm:$0xff] %vm217, %v210
      %220 = vst.msk [vmem:[%s170 + $0x10] sm:$0xff] %vm217, %v211
      %221 = vst.msk [vmem:[%s170 + $0x18] sm:$0xff] %vm217, %v212
      %222 = vst.msk [vmem:[%s170 + $0x20] sm:$0xff] %vm217, %v213
      %223 = vst.msk [vmem:[%s170 + $0x28] sm:$0xff] %vm217, %v214
      %224 = vst.msk [vmem:[%s170 + $0x30] sm:$0xff] %vm217, %v215
      %225 = vst.msk [vmem:[%s170 + $0x38] sm:$0xff] %vm217, %v216
      %p226 = scmp.lt.s32.totalorder %s14, 1
      %s227 = scalar_select %p226, %s14, 1
      %s228 = smul.addr %s227, 8
      %s229 = smul.addr %s228, 8
      %s230 = scalar_lea.vmem %s3, %s229
      // Predicated region
      $region33: #{down_block.5} parent=31 // pred_check
        %p231 = pneg %p100
      $region34: #{down_block.5} parent=31 // pred_check_branch
        %233 = sbr.rel (%p231) target = $region36
      $region35: #{down_block.5} parent=31 // pred_region
        _
      $region36: #{down_block.5} parent=31 // pred_fallthru
        _
    $region32: #{down_block.5} parent=5 // pred_fallthru
      _
    %p234 = scmp.le.s32.totalorder 2, %s9
    // Predicated region
    $region37: #{down_block.5} parent=5 // pred_check
      %p235 = pneg %p234
    $region38: #{down_block.5} parent=5 // pred_check_branch
      %237 = sbr.rel (%p235) target = $region40
    $region39: #{down_block.5} parent=5 // pred_region
      %s238 = ssub.s32 %s9, 2
      // Predicated region
      $region41: #{down_block.5} parent=39 // pred_check
        %p239 = pneg %p106
      $region42: #{down_block.5} parent=39 // pred_check_branch
        %241 = sbr.rel (%p239) target = $region44
      $region43: #{down_block.5} parent=39 // pred_region
        %p242 = scmp.lt.s32.totalorder %s15, 1
        %s243 = scalar_select %p242, %s15, 1
        %s244 = smul.addr %s243, 8
        %s245 = smul.addr %s244, 8
        %s246 = scalar_lea.vmem %s3, %s245
      $region44: #{down_block.5} parent=39 // pred_fallthru
        _
    $region40: #{down_block.5} parent=5 // pred_fallthru
      _
  $region6: #{down_block.5} parent=0 // loop_footer
    %s13 = sadd.s32 1, %s9
  $region7: #{down_block.5} parent=0 // loop_footer_branch
    %8 = sbr.rel target = $region3
  $region8: #{down_block.5} parent=0 // loop_exit
    _

// kernel: down_block.4
$region0: #{down_block.4}
  #allocation0 [shape = 'u32[]', space=smem, size = 0x4, offset = 0x4, fixed_abs, tag = 'smem constant byte address 0x4 - core index']
  #allocation1 [shape = 'u32[144,128]{1,0:T(1,128)}', space=vmem, size = 0x12000, scoped, tag = 'internal scratch']
  #allocation2 [shape = 'f32[10,10,8]{2,1,0:T(8,128)}', space=vmem, size = 0x14000, scoped, tag = 'scratch operand']
  %s0 = inlined_call_operand.vmem [shape: f32[2,8,8,8], index: 0, kind: input, shape index: {}]
  %s1 = inlined_call_operand.vmem [shape: f32[1,8], index: 1, kind: input, shape index: {}]
  %s2 = inlined_call_operand.vmem [shape: f32[1,8], index: 2, kind: input, shape index: {}]
  %s3 = inlined_call_operand.vmem [shape: f32[9,8,8], index: 3, kind: input, shape index: {}]
  %s4 = inlined_call_operand.vmem [shape: f32[1,8], index: 4, kind: input, shape index: {}]
  %s5 = inlined_call_operand.vmem [shape: f32[2,8,8,8], index: 5, kind: output, shape index: {0}]
  %s6 = inlined_call_operand.vmem [shape: f32[2,2,8], index: 6, kind: output, shape index: {1}]
  %7 = xla_tuple %s5, %s6
  %s8 = sld [smem:[#allocation0]]
  $region61: #{down_block.4} parent=0
    _
  %s10 = ssub.s32 1, %s8
  %s11 = scalar_select 0, %s10, %s8
  loop: start=0, step=1, limit=4
  $region2: #{down_block.4} parent=0 // loop_pre_header
    _
  $region3: #{down_block.4} parent=0 // loop_header
    %s13 = sphi 0, %s17
    %p14 = scmp.ge.s32.totalorder %s13, 4
    %s23 = sphi 0, %s25
    %s26 = sphi 0, %s23
    %s27 = sphi 0, %s26
    %s43 = sphi 0, %s27
    %s47 = sphi 0, %s47
    %s49 = sphi 0, %s47
    %s50 = sphi 0, %s49
    %s64 = sphi 0, %s50
    %s68 = sphi 0, %s68
    %s70 = sphi 0, %s68
    %s71 = sphi 0, %s70
    %s85 = sphi 0, %s71
    %s89 = sphi 0, %s89
    %s91 = sphi 0, %s89
    %s92 = sphi 0, %s91
    %s106 = sphi 0, %s92
    %s110 = sphi 0, %s110
    %s112 = sphi 0, %s110
    %s113 = sphi 0, %s112
    %s127 = sphi 0, %s113
    %s133 = sphi 0, %s135
    %s136 = sphi 0, %s133
    %s137 = sphi 0, %s136
    %s153 = sphi 0, %s137
    %s159 = sphi 0, %s161
    %s162 = sphi 0, %s159
    %s163 = sphi 0, %s162
    %s179 = sphi 0, %s163
  $region4: #{down_block.4} parent=0 // loop_header_branch
    %16 = sbr.rel (%p14) target = $region8
  $region5: #{down_block.4} parent=0 // loop_body
    %s18 = ssub.s32 %s13, 1
    %s19 = ssub.s32 %s13, 2
    %s20 = sadd.s32 %s13, 1
    %s21 = ssub.s32 %s13, %s20
    %p22 = scmp.eq.s32.totalorder %s21, 0
    %s24 = sadd.s32 %s23, 1
    %s25 = scalar_select %p22, %s23, %s24
    %p28 = pneg %p22
    %p29 = scmp.eq.s32.totalorder %s13, 1
    %p30 = por %p28, %p29
    %p31 = scmp.ne.s32.totalorder %s23, %s26
    %p32 = scmp.eq.s32.totalorder %s13, 0
    %p33 = por %p31, %p32
    %p34 = scmp.ne.s32.totalorder %s23, %s26
    %p35 = scmp.eq.s32.totalorder %s18, 1
    %p36 = por %p34, %p35
    %p37 = scmp.ne.s32.totalorder %s26, %s27
    %p38 = scmp.eq.s32.totalorder %s18, 0
    %p39 = por %p37, %p38
    %p40 = scmp.ne.s32.totalorder %s26, %s27
    %p41 = scmp.eq.s32.totalorder %s19, 1
    %p42 = por %p40, %p41
    %p44 = scmp.ne.s32.totalorder %s27, %s43
    %p45 = scmp.eq.s32.totalorder %s19, 0
    %p46 = por %p44, %p45
    %s48 = sadd.s32 %s47, 1
    %p51 = scmp.eq.s32.totalorder %s13, 1
    %p52 = scmp.ne.s32.totalorder %s47, %s49
    %p53 = scmp.eq.s32.totalorder %s13, 0
    %p54 = por %p52, %p53
    %p55 = scmp.ne.s32.totalorder %s47, %s49
    %p56 = scmp.eq.s32.totalorder %s18, 1
    %p57 = por %p55, %p56
    %p58 = scmp.ne.s32.totalorder %s49, %s50
    %p59 = scmp.eq.s32.totalorder %s18, 0
    %p60 = por %p58, %p59
    %p61 = scmp.ne.s32.totalorder %s49, %s50
    %p62 = scmp.eq.s32.totalorder %s19, 1
    %p63 = por %p61, %p62
    %p65 = scmp.ne.s32.totalorder %s50, %s64
    %p66 = scmp.eq.s32.totalorder %s19, 0
    %p67 = por %p65, %p66
    %s69 = sadd.s32 %s68, 1
    %p72 = scmp.eq.s32.totalorder %s13, 1
    %p73 = scmp.ne.s32.totalorder %s68, %s70
    %p74 = scmp.eq.s32.totalorder %s13, 0
    %p75 = por %p73, %p74
    %p76 = scmp.ne.s32.totalorder %s68, %s70
    %p77 = scmp.eq.s32.totalorder %s18, 1
    %p78 = por %p76, %p77
    %p79 = scmp.ne.s32.totalorder %s70, %s71
    %p80 = scmp.eq.s32.totalorder %s18, 0
    %p81 = por %p79, %p80
    %p82 = scmp.ne.s32.totalorder %s70, %s71
    %p83 = scmp.eq.s32.totalorder %s19, 1
    %p84 = por %p82, %p83
    %p86 = scmp.ne.s32.totalorder %s71, %s85
    %p87 = scmp.eq.s32.totalorder %s19, 0
    %p88 = por %p86, %p87
    %s90 = sadd.s32 %s89, 1
    %p93 = scmp.eq.s32.totalorder %s13, 1
    %p94 = scmp.ne.s32.totalorder %s89, %s91
    %p95 = scmp.eq.s32.totalorder %s13, 0
    %p96 = por %p94, %p95
    %p97 = scmp.ne.s32.totalorder %s89, %s91
    %p98 = scmp.eq.s32.totalorder %s18, 1
    %p99 = por %p97, %p98
    %p100 = scmp.ne.s32.totalorder %s91, %s92
    %p101 = scmp.eq.s32.totalorder %s18, 0
    %p102 = por %p100, %p101
    %p103 = scmp.ne.s32.totalorder %s91, %s92
    %p104 = scmp.eq.s32.totalorder %s19, 1
    %p105 = por %p103, %p104
    %p107 = scmp.ne.s32.totalorder %s92, %s106
    %p108 = scmp.eq.s32.totalorder %s19, 0
    %p109 = por %p107, %p108
    %s111 = sadd.s32 %s110, 1
    %p114 = scmp.eq.s32.totalorder %s13, 1
    %p115 = scmp.ne.s32.totalorder %s110, %s112
    %p116 = scmp.eq.s32.totalorder %s13, 0
    %p117 = por %p115, %p116
    %p118 = scmp.ne.s32.totalorder %s110, %s112
    %p119 = scmp.eq.s32.totalorder %s18, 1
    %p120 = por %p118, %p119
    %p121 = scmp.ne.s32.totalorder %s112, %s113
    %p122 = scmp.eq.s32.totalorder %s18, 0
    %p123 = por %p121, %p122
    %p124 = scmp.ne.s32.totalorder %s112, %s113
    %p125 = scmp.eq.s32.totalorder %s19, 1
    %p126 = por %p124, %p125
    %p128 = scmp.ne.s32.totalorder %s113, %s127
    %p129 = scmp.eq.s32.totalorder %s19, 0
    %p130 = por %p128, %p129
    %s131 = ssub.s32 %s13, %s20
    %p132 = scmp.eq.s32.totalorder %s131, 0
    %s134 = sadd.s32 %s133, 1
    %s135 = scalar_select %p132, %s133, %s134
    %p138 = pneg %p132
    %p139 = scmp.eq.s32.totalorder %s13, 1
    %p140 = por %p138, %p139
    %p141 = scmp.ne.s32.totalorder %s133, %s136
    %p142 = scmp.eq.s32.totalorder %s13, 0
    %p143 = por %p141, %p142
    %p144 = scmp.ne.s32.totalorder %s133, %s136
    %p145 = scmp.eq.s32.totalorder %s18, 1
    %p146 = por %p144, %p145
    %p147 = scmp.ne.s32.totalorder %s136, %s137
    %p148 = scmp.eq.s32.totalorder %s18, 0
    %p149 = por %p147, %p148
    %p150 = scmp.ne.s32.totalorder %s136, %s137
    %p151 = scmp.eq.s32.totalorder %s19, 1
    %p152 = por %p150, %p151
    %p154 = scmp.ne.s32.totalorder %s137, %s153
    %p155 = scmp.eq.s32.totalorder %s19, 0
    %p156 = por %p154, %p155
    %s157 = ssub.s32 %s13, %s20
    %p158 = scmp.eq.s32.totalorder %s157, 0
    %s160 = sadd.s32 %s159, 1
    %s161 = scalar_select %p158, %s159, %s160
    %p164 = pneg %p158
    %p165 = scmp.eq.s32.totalorder %s13, 1
    %p166 = por %p164, %p165
    %p167 = scmp.ne.s32.totalorder %s159, %s162
    %p168 = scmp.eq.s32.totalorder %s13, 0
    %p169 = por %p167, %p168
    %p170 = scmp.ne.s32.totalorder %s159, %s162
    %p171 = scmp.eq.s32.totalorder %s18, 1
    %p172 = por %p170, %p171
    %p173 = scmp.ne.s32.totalorder %s162, %s163
    %p174 = scmp.eq.s32.totalorder %s18, 0
    %p175 = por %p173, %p174
    %p176 = scmp.ne.s32.totalorder %s162, %s163
    %p177 = scmp.eq.s32.totalorder %s19, 1
    %p178 = por %p176, %p177
    %p180 = scmp.ne.s32.totalorder %s163, %s179
    %p181 = scmp.eq.s32.totalorder %s19, 0
    %p182 = por %p180, %p181
    %p183 = scmp.le.s32.totalorder 1, %s13
    %p184 = scmp.lt.s32.totalorder %s13, 3
    %p185 = pnand %p183, %p184
    %p186 = pneg %p185
    // Predicated region
    $region9: #{down_block.4} parent=5 // pred_check
      _
    $region10: #{down_block.4} parent=5 // pred_check_branch
      %188 = sbr.rel (%p185) target = $region12
    $region11: #{down_block.4} parent=5 // pred_region
      %s189 = ssub.s32 %s13, 1
      // Predicated region
      $region13: #{down_block.4} parent=11 // pred_check
        %p190 = pneg %p60
      $region14: #{down_block.4} parent=11 // pred_check_branch
        %192 = sbr.rel (%p190) target = $region16
      $region15: #{down_block.4} parent=11 // pred_region
        _
      $region16: #{down_block.4} parent=11 // pred_fallthru
        _
      // Predicated region
      $region17: #{down_block.4} parent=11 // pred_check
        %p193 = pneg %p81
      $region18: #{down_block.4} parent=11 // pred_check_branch
        %195 = sbr.rel (%p193) target = $region20
      $region19: #{down_block.4} parent=11 // pred_region
        _
      $region20: #{down_block.4} parent=11 // pred_fallthru
        _
      // Predicated region
      $region21: #{down_block.4} parent=11 // pred_check
        %p196 = pneg %p102
      $region22: #{down_block.4} parent=11 // pred_check_branch
        %198 = sbr.rel (%p196) target = $region24
      $region23: #{down_block.4} parent=11 // pred_region
        _
      $region24: #{down_block.4} parent=11 // pred_fallthru
        _
      // Predicated region
      $region25: #{down_block.4} parent=11 // pred_check
        %p199 = pneg %p123
      $region26: #{down_block.4} parent=11 // pred_check_branch
        %201 = sbr.rel (%p199) target = $region28
      $region27: #{down_block.4} parent=11 // pred_region
        _
      $region28: #{down_block.4} parent=11 // pred_fallthru
        _
    $region12: #{down_block.4} parent=5 // pred_fallthru
      _
    %p202 = scmp.lt.s32.totalorder %s13, 2
    // Predicated region
    $region29: #{down_block.4} parent=5 // pred_check
      %p203 = pneg %p202
    $region30: #{down_block.4} parent=5 // pred_check_branch
      %205 = sbr.rel (%p203) target = $region32
    $region31: #{down_block.4} parent=5 // pred_region
      // Predicated region
      $region33: #{down_block.4} parent=31 // pred_check
        %p206 = pneg %p33
      $region34: #{down_block.4} parent=31 // pred_check_branch
        %208 = sbr.rel (%p206) target = $region36
      $region35: #{down_block.4} parent=31 // pred_region
        %p209 = scmp.lt.s32.totalorder %s13, 1
        %s210 = scalar_select %p209, %s13, 1
        %s211 = smul.addr %s210, 8
        %s212 = smul.addr %s211, 8
        %s213 = scalar_lea.vmem %s0, %s212
      $region36: #{down_block.4} parent=31 // pred_fallthru
        _
    $region32: #{down_block.4} parent=5 // pred_fallthru
      _
    %p214 = scmp.le.s32.totalorder 1, %s13
    %p215 = scmp.lt.s32.totalorder %s13, 3
    %p216 = pnand %p214, %p215
    %p217 = pneg %p216
    // Predicated region
    $region37: #{down_block.4} parent=5 // pred_check
      _
    $region38: #{down_block.4} parent=5 // pred_check_branch
      %219 = sbr.rel (%p216) target = $region40
    $region39: #{down_block.4} parent=5 // pred_region
      %s220 = ssub.s32 %s13, 1
      %p221 = scmp.lt.s32.totalorder %s18, 1
      %s222 = scalar_select %p221, %s18, 1
      %s223 = smul.addr %s222, 8
      %s224 = smul.addr %s223, 8
      %s225 = scalar_lea.vmem %s0, %s224
      %p226 = pneg %p39
      %p227 = pneg %p36
      %p228 = pneg %p60
      %p229 = pneg %p57
      %p230 = pneg %p81
      %p231 = pneg %p78
      %p232 = pneg %p102
      %p233 = pneg %p99
      %p234 = pneg %p123
      %p235 = pneg %p120
      %p236 = pneg %p149
      %p237 = pneg %p146
      %p238 = scmp.lt.s32.totalorder %s18, 1
      %s239 = scalar_select %p238, %s18, 1
      %s240 = smul.addr %s239, 8
      %s241 = smul.addr %s240, 8
      %s242 = scalar_lea.vmem %s5, %s241
      %p243 = pneg %p175
      %p244 = pneg %p172
      %p245 = scmp.lt.s32.totalorder %s18, 1
      %s246 = scalar_select %p245, %s18, 1
      %s247 = smul.addr %s246, 2
      %s248 = scalar_lea.vmem %s6, %s247
      %p249 = scmp.lt.s32.totalorder %s18, 1
      %s250 = scalar_select %p249, %s18, 1
      %s251 = smul.addr %s250, 8
      %s252 = smul.addr %s251, 8
      %s253 = scalar_lea.vmem %s0, %s252
      %p254 = scmp.lt.s32.totalorder %s18, 1
      %s255 = scalar_select %p254, %s18, 1
      %s256 = smul.addr %s255, 8
      %s257 = smul.addr %s256, 8
      %s258 = scalar_lea.vmem %s5, %s257
      %p259 = scmp.lt.s32.totalorder %s18, 1
      %s260 = scalar_select %p259, %s18, 1
      %s261 = smul.addr %s260, 2
      %s262 = scalar_lea.vmem %s6, %s261
      %v263 = vld [vmem:[%s253] sm:$0xff]
      %v264 = vld [vmem:[%s253 + $0x8] sm:$0xff]
      %v265 = vld [vmem:[%s253 + $0x10] sm:$0xff]
      %v266 = vld [vmem:[%s253 + $0x18] sm:$0xff]
      %v267 = vld [vmem:[%s253 + $0x20] sm:$0xff]
      %v268 = vld [vmem:[%s253 + $0x28] sm:$0xff]
      %v269 = vld [vmem:[%s253 + $0x30] sm:$0xff]
      %v270 = vld [vmem:[%s253 + $0x38] sm:$0xff]
      %v271 = vld [vmem:[%s1] sm:$0x1]
      %v273 = vlaneseq
      %v274 = vshrl.u32 %v273, 7
      %v275 = vsub.s32 0, %v274
      %v276 = vrot.slane %v271, %v275
      %v278 = vmul.f32 %v263, %v276
      %v279 = vmul.f32 %v264, %v276
      %v280 = vmul.f32 %v265, %v276
      %v281 = vmul.f32 %v266, %v276
      %v282 = vmul.f32 %v267, %v276
      %v283 = vmul.f32 %v268, %v276
      %v284 = vmul.f32 %v269, %v276
      %v285 = vmul.f32 %v270, %v276
      %v286 = vld [vmem:[%s2] sm:$0x1]
      %v288 = vlaneseq
      %v289 = vshrl.u32 %v288, 7
      %v290 = vsub.s32 0, %v289
      %v291 = vrot.slane %v286, %v290
      %v293 = vadd.f32 %v278, %v291
      %v294 = vadd.f32 %v279, %v291
      %v295 = vadd.f32 %v280, %v291
      %v296 = vadd.f32 %v281, %v291
      %v297 = vadd.f32 %v282, %v291
      %v298 = vadd.f32 %v283, %v291
      %v299 = vadd.f32 %v284, %v291
      %v300 = vadd.f32 %v285, %v291
      %v301 = vmax.f32 %v293, 0.0
      %v302 = vmax.f32 %v294, 0.0
      %v303 = vmax.f32 %v295, 0.0
      %v304 = vmax.f32 %v296, 0.0
      %v305 = vmax.f32 %v297, 0.0
      %v306 = vmax.f32 %v298, 0.0
      %v307 = vmax.f32 %v299, 0.0
      %v308 = vmax.f32 %v300, 0.0
      %vm309 = vcmask 64512
      %310 = vst.msk [vmem:[#allocation2] sm:$0xff] %vm309, 0.0
      %vm311 = vcmask 58368
      %312 = vst.msk [vmem:[#allocation2 + $0x8] sm:$0x3] %vm311, 0.0
      %s313 = scalar_lea.vmem [#allocation2], 144
      %314 = vst.msk [vmem:[%s313] sm:$0xff] %vm309, 0.0
      %315 = vst.msk [vmem:[%s313 + $0x8] sm:$0x3] %vm311, 0.0
      %vm316 = vcmask 57344
      %317 = vst.msk [vmem:[#allocation2] sm:$0x1] %vm316, 0.0
      %318 = vst.msk [vmem:[#allocation2 + $0x10] sm:$0x1] %vm316, 0.0
      %319 = vst.msk [vmem:[#allocation2 + $0x20] sm:$0x1] %vm316, 0.0
      %320 = vst.msk [vmem:[#allocation2 + $0x30] sm:$0x1] %vm316, 0.0
      %321 = vst.msk [vmem:[#allocation2 + $0x40] sm:$0x1] %vm316, 0.0
      %322 = vst.msk [vmem:[#allocation2 + $0x50] sm:$0x1] %vm316, 0.0
      %323 = vst.msk [vmem:[#allocation2 + $0x60] sm:$0x1] %vm316, 0.0
      %324 = vst.msk [vmem:[#allocation2 + $0x70] sm:$0x1] %vm316, 0.0
      %325 = vst.msk [vmem:[#allocation2 + $0x80] sm:$0x1] %vm316, 0.0
      %326 = vst.msk [vmem:[#allocation2 + $0x90] sm:$0x1] %vm316, 0.0
      %327 = vst.msk [vmem:[#allocation2 + $0x9] sm:$0x1] %vm316, 0.0
      %328 = vst.msk [vmem:[#allocation2 + $0x19] sm:$0x1] %vm316, 0.0
      %329 = vst.msk [vmem:[#allocation2 + $0x29] sm:$0x1] %vm316, 0.0
      %330 = vst.msk [vmem:[#allocation2 + $0x39] sm:$0x1] %vm316, 0.0
      %331 = vst.msk [vmem:[#allocation2 + $0x49] sm:$0x1] %vm316, 0.0
      %332 = vst.msk [vmem:[#allocation2 + $0x59] sm:$0x1] %vm316, 0.0
      %333 = vst.msk [vmem:[#allocation2 + $0x69] sm:$0x1] %vm316, 0.0
      %334 = vst.msk [vmem:[#allocation2 + $0x79] sm:$0x1] %vm316, 0.0
      %335 = vst.msk [vmem:[#allocation2 + $0x89] sm:$0x1] %vm316, 0.0
      %336 = vst.msk [vmem:[#allocation2 + $0x99] sm:$0x1] %vm316, 0.0
      %s337 = scalar_lea.vmem [#allocation2], 16
      %338 = vst.msk [vmem:[%s337 + $0x1] sm:$0xff] %vm309, %v301
      %339 = vst.msk [vmem:[%s337 + $0x11] sm:$0xff] %vm309, %v302
      %340 = vst.msk [vmem:[%s337 + $0x21] sm:$0xff] %vm309, %v303
      %341 = vst.msk [vmem:[%s337 + $0x31] sm:$0xff] %vm309, %v304
      %342 = vst.msk [vmem:[%s337 + $0x41] sm:$0xff] %vm309, %v305
      %343 = vst.msk [vmem:[%s337 + $0x51] sm:$0xff] %vm309, %v306
      %344 = vst.msk [vmem:[%s337 + $0x61] sm:$0xff] %vm309, %v307
      %345 = vst.msk [vmem:[%s337 + $0x71] sm:$0xff] %vm309, %v308
      %v346 = vld [vmem:[#allocation2] sm:$0xff]
      %v347 = vld [vmem:[#allocation2 + $0x10] sm:$0xff]
      %v348 = vld [vmem:[#allocation2 + $0x20] sm:$0xff]
      %v349 = vld [vmem:[#allocation2 + $0x30] sm:$0xff]
      %v350 = vld [vmem:[#allocation2 + $0x40] sm:$0xff]
      %v351 = vld [vmem:[#allocation2 + $0x50] sm:$0xff]
      %v352 = vld [vmem:[#allocation2 + $0x60] sm:$0xff]
      %v353 = vld [vmem:[#allocation2 + $0x70] sm:$0xff]
      %v354 = vld [vmem:[%s3] sm:$0xff]
      %v355 = vld [vmem:[#allocation2 + $0x1] sm:$0xff]
      %v356 = vld [vmem:[#allocation2 + $0x11] sm:$0xff]
      %v357 = vld [vmem:[#allocation2 + $0x21] sm:$0xff]
      %v358 = vld [vmem:[#allocation2 + $0x31] sm:$0xff]
      %v359 = vld [vmem:[#allocation2 + $0x41] sm:$0xff]
      %v360 = vld [vmem:[#allocation2 + $0x51] sm:$0xff]
      %v361 = vld [vmem:[#allocation2 + $0x61] sm:$0xff]
      %v362 = vld [vmem:[#allocation2 + $0x71] sm:$0xff]
      %s363 = scalar_lea.vmem %s3, 8
      %v364 = vld [vmem:[%s363] sm:$0xff]
      %v366 = vsel %vm309, %v355, 0
      %v369 = vsel %vm309, %v356, 0
      %v372 = vsel %vm309, %v357, 0
      %v375 = vsel %vm309, %v358, 0
      %v378 = vsel %vm309, %v359, 0
      %v381 = vsel %vm309, %v360, 0
      %v384 = vsel %vm309, %v361, 0
      %v387 = vsel %vm309, %v362, 0
      %389 = vmatprep.subr.mxu0 0.0
      %390 = vmatpush1.msra.mxu0 0.0
      %391 = vmatprep.subr.mxu0 0.0
      %392 = vmatpush1.msra.mxu0 0.0
      %393 = vmatprep.subr.mxu0 0.0
      %394 = vmatpush1.msra.mxu0 0.0
      %395 = vmatprep.subr.mxu0 0.0
      %396 = vmatpush1.msra.mxu0 0.0
      %397 = vmatprep.subr.mxu0 0.0
      %398 = vmatpush1.msra.mxu0 0.0
      %399 = vmatprep.subr.mxu0 0.0
      %400 = vmatpush1.msra.mxu0 0.0
      %401 = vmatprep.subr.mxu0 0.0
      %402 = vmatpush1.msra.mxu0 0.0
      %403 = vmatprep.subr.mxu0 0.0
      %404 = vmatpush1.msra.mxu0 0.0
      %405 = vmatprep.subr.mxu0 0.0
      %406 = vmatpush1.msra.mxu0 0.0
      %407 = vmatprep.subr.mxu0 0.0
      %408 = vmatpush1.msra.mxu0 0.0
      %409 = vmatprep.subr.mxu0 0.0
      %410 = vmatpush1.msra.mxu0 0.0
      %411 = vmatprep.subr.mxu0 0.0
      %412 = vmatpush1.msra.mxu0 0.0
      %413 = vmatprep.subr.mxu0 0.0
      %414 = vmatpush1.msra.mxu0 0.0
      %415 = vmatprep.subr.mxu0 0.0
      %416 = vmatpush1.msra.mxu0 0.0
      %417 = vmatprep.subr.mxu0 0.0
      %418 = vmatpush1.msra.mxu0 0.0
      %419 = vmatprep.subr.mxu0 0.0
      %420 = vmatpush1.msra.mxu0 %v364
      %421 = vmatprep.subr.mxu0 0.0
      %422 = vmatpush2.msra.mxu0 0.0
      %423 = vmatprep.subr.mxu0 0.0
      %424 = vmatpush2.msra.mxu0 0.0
      %425 = vmatprep.subr.mxu0 0.0
      %426 = vmatpush2.msra.mxu0 0.0
      %427 = vmatprep.subr.mxu0 0.0
      %428 = vmatpush2.msra.mxu0 0.0
      %429 = vmatprep.subr.mxu0 0.0
      %430 = vmatpush2.msra.mxu0 0.0
      %431 = vmatprep.subr.mxu0 0.0
      %432 = vmatpush2.msra.mxu0 0.0
      %433 = vmatprep.subr.mxu0 0.0
      %434 = vmatpush2.msra.mxu0 0.0
      %435 = vmatprep.subr.mxu0 0.0
      %436 = vmatpush2.msra.mxu0 0.0
      %437 = vmatprep.subr.mxu0 0.0
      %438 = vmatpush2.msra.mxu0 0.0
      %439 = vmatprep.subr.mxu0 0.0
      %440 = vmatpush2.msra.mxu0 0.0
      %441 = vmatprep.subr.mxu0 0.0
      %442 = vmatpush2.msra.mxu0 0.0
      %443 = vmatprep.subr.mxu0 0.0
      %444 = vmatpush2.msra.mxu0 0.0
      %445 = vmatprep.subr.mxu0 0.0
      %446 = vmatpush2.msra.mxu0 0.0
      %447 = vmatprep.subr.mxu0 0.0
      %448 = vmatpush2.msra.mxu0 0.0
      %449 = vmatprep.subr.mxu0 0.0
      %450 = vmatpush2.msra.mxu0 0.0
      %451 = vmatprep.subr.mxu0 0.0
      %452 = vmatpush2.msra.mxu0 0.0
      %453 = vmatprep.mubr.f32.mxu0 0.0
      %454 = vmatmul.mubr.f32.gmra.mxu0 %v366
      %v455 = vpop.f32.mrf.mxu0
      %v456 = vadd.f32 0.0, %v455
      %v457 = vpop.f32.mrf.mxu0
      %458 = vmatprep.mubr.f32.mxu0 0.0
      %459 = vmatmul.mubr.f32.gmra.mxu0 %v369
      %v460 = vpop.f32.mrf.mxu0
      %v461 = vadd.f32 0.0, %v460
      %v462 = vpop.f32.mrf.mxu0
      %463 = vmatprep.mubr.f32.mxu0 0.0
      %464 = vmatmul.mubr.f32.gmra.mxu0 %v372
      %v465 = vpop.f32.mrf.mxu0
      %v466 = vadd.f32 0.0, %v465
      %v467 = vpop.f32.mrf.mxu0
      %468 = vmatprep.mubr.f32.mxu0 0.0
      %469 = vmatmul.mubr.f32.gmra.mxu0 %v375
      %v470 = vpop.f32.mrf.mxu0
      %v471 = vadd.f32 0.0, %v470
      %v472 = vpop.f32.mrf.mxu0
      %473 = vmatprep.mubr.f32.mxu0 0.0
      %474 = vmatmul.mubr.f32.gmra.mxu0 %v378
      %v475 = vpop.f32.mrf.mxu0
      %v476 = vadd.f32 0.0, %v475
      %v477 = vpop.f32.mrf.mxu0
      %478 = vmatprep.mubr.f32.mxu0 0.0
      %479 = vmatmul.mubr.f32.gmra.mxu0 %v381
      %v480 = vpop.f32.mrf.mxu0
      %v481 = vadd.f32 0.0, %v480
      %v482 = vpop.f32.mrf.mxu0
      %483 = vmatprep.mubr.f32.mxu0 0.0
      %484 = vmatmul.mubr.f32.gmra.mxu0 %v384
      %v485 = vpop.f32.mrf.mxu0
      %v486 = vadd.f32 0.0, %v485
      %v487 = vpop.f32.mrf.mxu0
      %488 = vmatprep.mubr.f32.mxu0 0.0
      %489 = vmatmul.mubr.f32.gmra.mxu0 %v387
      %v490 = vpop.f32.mrf.mxu0
      %v491 = vadd.f32 0.0, %v490
      %v492 = vpop.f32.mrf.mxu0
      %493 = vdwg.mxu0
      %v495 = vsel %vm309, %v346, 0
      %v498 = vsel %vm309, %v347, 0
      %v501 = vsel %vm309, %v348, 0
      %v504 = vsel %vm309, %v349, 0
      %v507 = vsel %vm309, %v350, 0
      %v510 = vsel %vm309, %v351, 0
      %v513 = vsel %vm309, %v352, 0
      %v516 = vsel %vm309, %v353, 0
      %518 = vmatprep.subr.mxu0 0.0
      %519 = vmatpush1.msra.mxu0 0.0
      %520 = vmatprep.subr.mxu0 0.0
      %521 = vmatpush1.msra.mxu0 0.0
      %522 = vmatprep.subr.mxu0 0.0
      %523 = vmatpush1.msra.mxu0 0.0
      %524 = vmatprep.subr.mxu0 0.0
      %525 = vmatpush1.msra.mxu0 0.0
      %526 = vmatprep.subr.mxu0 0.0
      %527 = vmatpush1.msra.mxu0 0.0
      %528 = vmatprep.subr.mxu0 0.0
      %529 = vmatpush1.msra.mxu0 0.0
      %530 = vmatprep.subr.mxu0 0.0
      %531 = vmatpush1.msra.mxu0 0.0
      %532 = vmatprep.subr.mxu0 0.0
      %533 = vmatpush1.msra.mxu0 0.0
      %534 = vmatprep.subr.mxu0 0.0
      %535 = vmatpush1.msra.mxu0 0.0
      %536 = vmatprep.subr.mxu0 0.0
      %537 = vmatpush1.msra.mxu0 0.0
      %538 = vmatprep.subr.mxu0 0.0
      %539 = vmatpush1.msra.mxu0 0.0
      %540 = vmatprep.subr.mxu0 0.0
      %541 = vmatpush1.msra.mxu0 0.0
      %542 = vmatprep.subr.mxu0 0.0
      %543 = vmatpush1.msra.mxu0 0.0
      %544 = vmatprep.subr.mxu0 0.0
      %545 = vmatpush1.msra.mxu0 0.0
      %546 = vmatprep.subr.mxu0 0.0
      %547 = vmatpush1.msra.mxu0 0.0
      %548 = vmatprep.subr.mxu0 0.0
      %549 = vmatpush1.msra.mxu0 %v354
      %550 = vmatprep.subr.mxu0 0.0
      %551 = vmatpush2.msra.mxu0 0.0
      %552 = vmatprep.subr.mxu0 0.0
      %553 = vmatpush2.msra.mxu0 0.0
      %554 = vmatprep.subr.mxu0 0.0
      %555 = vmatpush2.msra.mxu0 0.0
      %556 = vmatprep.subr.mxu0 0.0
      %557 = vmatpush2.msra.mxu0 0.0
      %558 = vmatprep.subr.mxu0 0.0
      %559 = vmatpush2.msra.mxu0 0.0
      %560 = vmatprep.subr.mxu0 0.0
      %561 = vmatpush2.msra.mxu0 0.0
      %562 = vmatprep.subr.mxu0 0.0
      %563 = vmatpush2.msra.mxu0 0.0
      %564 = vmatprep.subr.mxu0 0.0
      %565 = vmatpush2.msra.mxu0 0.0
      %566 = vmatprep.subr.mxu0 0.0
      %567 = vmatpush2.msra.mxu0 0.0
      %568 = vmatprep.subr.mxu0 0.0
      %569 = vmatpush2.msra.mxu0 0.0
      %570 = vmatprep.subr.mxu0 0.0
      %571 = vmatpush2.msra.mxu0 0.0
      %572 = vmatprep.subr.mxu0 0.0
      %573 = vmatpush2.msra.mxu0 0.0
      %574 = vmatprep.subr.mxu0 0.0
      %575 = vmatpush2.msra.mxu0 0.0
      %576 = vmatprep.subr.mxu0 0.0
      %577 = vmatpush2.msra.mxu0 0.0
      %578 = vmatprep.subr.mxu0 0.0
      %579 = vmatpush2.msra.mxu0 0.0
      %580 = vmatprep.subr.mxu0 0.0
      %581 = vmatpush2.msra.mxu0 0.0
      %582 = vmatprep.mubr.f32.mxu0 0.0
      %583 = vmatmul.mubr.f32.gmra.mxu0 %v495
      %v584 = vpop.f32.mrf.mxu0
      %v585 = vadd.f32 %v456, %v584
      %v586 = vpop.f32.mrf.mxu0
      %587 = vmatprep.mubr.f32.mxu0 0.0
      %588 = vmatmul.mubr.f32.gmra.mxu0 %v498
      %v589 = vpop.f32.mrf.mxu0
      %v590 = vadd.f32 %v461, %v589
      %v591 = vpop.f32.mrf.mxu0
      %592 = vmatprep.mubr.f32.mxu0 0.0
      %593 = vmatmul.mubr.f32.gmra.mxu0 %v501
      %v594 = vpop.f32.mrf.mxu0
      %v595 = vadd.f32 %v466, %v594
      %v596 = vpop.f32.mrf.mxu0
      %597 = vmatprep.mubr.f32.mxu0 0.0
      %598 = vmatmul.mubr.f32.gmra.mxu0 %v504
      %v599 = vpop.f32.mrf.mxu0
      %v600 = vadd.f32 %v471, %v599
      %v601 = vpop.f32.mrf.mxu0
      %602 = vmatprep.mubr.f32.mxu0 0.0
      %603 = vmatmul.mubr.f32.gmra.mxu0 %v507
      %v604 = vpop.f32.mrf.mxu0
      %v605 = vadd.f32 %v476, %v604
      %v606 = vpop.f32.mrf.mxu0
      %607 = vmatprep.mubr.f32.mxu0 0.0
      %608 = vmatmul.mubr.f32.gmra.mxu0 %v510
      %v609 = vpop.f32.mrf.mxu0
      %v610 = vadd.f32 %v481, %v609
      %v611 = vpop.f32.mrf.mxu0
      %612 = vmatprep.mubr.f32.mxu0 0.0
      %613 = vmatmul.mubr.f32.gmra.mxu0 %v513
      %v614 = vpop.f32.mrf.mxu0
      %v615 = vadd.f32 %v486, %v614
      %v616 = vpop.f32.mrf.mxu0
      %617 = vmatprep.mubr.f32.mxu0 0.0
      %618 = vmatmul.mubr.f32.gmra.mxu0 %v516
      %v619 = vpop.f32.mrf.mxu0
      %v620 = vadd.f32 %v491, %v619
      %v621 = vpop.f32.mrf.mxu0
      %622 = vdwg.mxu0
      %v623 = vld [vmem:[#allocation2 + $0x2] sm:$0xff]
      %v624 = vld [vmem:[#allocation2 + $0x12] sm:$0xff]
      %v625 = vld [vmem:[#allocation2 + $0x22] sm:$0xff]
      %v626 = vld [vmem:[#allocation2 + $0x32] sm:$0xff]
      %v627 = vld [vmem:[#allocation2 + $0x42] sm:$0xff]
      %v628 = vld [vmem:[#allocation2 + $0x52] sm:$0xff]
      %v629 = vld [vmem:[#allocation2 + $0x62] sm:$0xff]
      %v630 = vld [vmem:[#allocation2 + $0x72] sm:$0xff]
      %s631 = scalar_lea.vmem %s3, 16
      %v632 = vld [vmem:[%s631] sm:$0xff]
      %v634 = vsel %vm309, %v623, 0
      %v637 = vsel %vm309, %v624, 0
      %v640 = vsel %vm309, %v625, 0
      %v643 = vsel %vm309, %v626, 0
      %v646 = vsel %vm309, %v627, 0
      %v649 = vsel %vm309, %v628, 0
      %v652 = vsel %vm309, %v629, 0
      %v655 = vsel %vm309, %v630, 0
      %657 = vmatprep.subr.mxu0 0.0
      %658 = vmatpush1.msra.mxu0 0.0
      %659 = vmatprep.subr.mxu0 0.0
      %660 = vmatpush1.msra.mxu0 0.0
      %661 = vmatprep.subr.mxu0 0.0
      %662 = vmatpush1.msra.mxu0 0.0
      %663 = vmatprep.subr.mxu0 0.0
      %664 = vmatpush1.msra.mxu0 0.0
      %665 = vmatprep.subr.mxu0 0.0
      %666 = vmatpush1.msra.mxu0 0.0
      %667 = vmatprep.subr.mxu0 0.0
      %668 = vmatpush1.msra.mxu0 0.0
      %669 = vmatprep.subr.mxu0 0.0
      %670 = vmatpush1.msra.mxu0 0.0
      %671 = vmatprep.subr.mxu0 0.0
      %672 = vmatpush1.msra.mxu0 0.0
      %673 = vmatprep.subr.mxu0 0.0
      %674 = vmatpush1.msra.mxu0 0.0
      %675 = vmatprep.subr.mxu0 0.0
      %676 = vmatpush1.msra.mxu0 0.0
      %677 = vmatprep.subr.mxu0 0.0
      %678 = vmatpush1.msra.mxu0 0.0
      %679 = vmatprep.subr.mxu0 0.0
      %680 = vmatpush1.msra.mxu0 0.0
      %681 = vmatprep.subr.mxu0 0.0
      %682 = vmatpush1.msra.mxu0 0.0
      %683 = vmatprep.subr.mxu0 0.0
      %684 = vmatpush1.msra.mxu0 0.0
      %685 = vmatprep.subr.mxu0 0.0
      %686 = vmatpush1.msra.mxu0 0.0
      %687 = vmatprep.subr.mxu0 0.0
      %688 = vmatpush1.msra.mxu0 %v632
      %689 = vmatprep.subr.mxu0 0.0
      %690 = vmatpush2.msra.mxu0 0.0
      %691 = vmatprep.subr.mxu0 0.0
      %692 = vmatpush2.msra.mxu0 0.0
      %693 = vmatprep.subr.mxu0 0.0
      %694 = vmatpush2.msra.mxu0 0.0
      %695 = vmatprep.subr.mxu0 0.0
      %696 = vmatpush2.msra.mxu0 0.0
      %697 = vmatprep.subr.mxu0 0.0
      %698 = vmatpush2.msra.mxu0 0.0
      %699 = vmatprep.subr.mxu0 0.0
      %700 = vmatpush2.msra.mxu0 0.0
      %701 = vmatprep.subr.mxu0 0.0
      %702 = vmatpush2.msra.mxu0 0.0
      %703 = vmatprep.subr.mxu0 0.0
      %704 = vmatpush2.msra.mxu0 0.0
      %705 = vmatprep.subr.mxu0 0.0
      %706 = vmatpush2.msra.mxu0 0.0
      %707 = vmatprep.subr.mxu0 0.0
      %708 = vmatpush2.msra.mxu0 0.0
      %709 = vmatprep.subr.mxu0 0.0
      %710 = vmatpush2.msra.mxu0 0.0
      %711 = vmatprep.subr.mxu0 0.0
      %712 = vmatpush2.msra.mxu0 0.0
      %713 = vmatprep.subr.mxu0 0.0
      %714 = vmatpush2.msra.mxu0 0.0
      %715 = vmatprep.subr.mxu0 0.0
      %716 = vmatpush2.msra.mxu0 0.0
      %717 = vmatprep.subr.mxu0 0.0
      %718 = vmatpush2.msra.mxu0 0.0
      %719 = vmatprep.subr.mxu0 0.0
      %720 = vmatpush2.msra.mxu0 0.0
      %721 = vmatprep.mubr.f32.mxu0 0.0
      %722 = vmatmul.mubr.f32.gmra.mxu0 %v634
      %v723 = vpop.f32.mrf.mxu0
      %v724 = vadd.f32 0.0, %v723
      %v725 = vpop.f32.mrf.mxu0
      %726 = vmatprep.mubr.f32.mxu0 0.0
      %727 = vmatmul.mubr.f32.gmra.mxu0 %v637
      %v728 = vpop.f32.mrf.mxu0
      %v729 = vadd.f32 0.0, %v728
      %v730 = vpop.f32.mrf.mxu0
      %731 = vmatprep.mubr.f32.mxu0 0.0
      %732 = vmatmul.mubr.f32.gmra.mxu0 %v640
      %v733 = vpop.f32.mrf.mxu0
      %v734 = vadd.f32 0.0, %v733
      %v735 = vpop.f32.mrf.mxu0
      %736 = vmatprep.mubr.f32.mxu0 0.0
      %737 = vmatmul.mubr.f32.gmra.mxu0 %v643
      %v738 = vpop.f32.mrf.mxu0
      %v739 = vadd.f32 0.0, %v738
      %v740 = vpop.f32.mrf.mxu0
      %741 = vmatprep.mubr.f32.mxu0 0.0
      %742 = vmatmul.mubr.f32.gmra.mxu0 %v646
      %v743 = vpop.f32.mrf.mxu0
      %v744 = vadd.f32 0.0, %v743
      %v745 = vpop.f32.mrf.mxu0
      %746 = vmatprep.mubr.f32.mxu0 0.0
      %747 = vmatmul.mubr.f32.gmra.mxu0 %v649
      %v748 = vpop.f32.mrf.mxu0
      %v749 = vadd.f32 0.0, %v748
      %v750 = vpop.f32.mrf.mxu0
      %751 = vmatprep.mubr.f32.mxu0 0.0
      %752 = vmatmul.mubr.f32.gmra.mxu0 %v652
      %v753 = vpop.f32.mrf.mxu0
      %v754 = vadd.f32 0.0, %v753
      %v755 = vpop.f32.mrf.mxu0
      %756 = vmatprep.mubr.f32.mxu0 0.0
      %757 = vmatmul.mubr.f32.gmra.mxu0 %v655
      %v758 = vpop.f32.mrf.mxu0
      %v759 = vadd.f32 0.0, %v758
      %v760 = vpop.f32.mrf.mxu0
      %761 = vdwg.mxu0
      %v762 = vadd.f32 %v585, %v724
      %v763 = vadd.f32 %v590, %v729
      %v764 = vadd.f32 %v595, %v734
      %v765 = vadd.f32 %v600, %v739
      %v766 = vadd.f32 %v605, %v744
      %v767 = vadd.f32 %v610, %v749
      %v768 = vadd.f32 %v615, %v754
      %v769 = vadd.f32 %v620, %v759
      %v770 = vld [vmem:[%s337] sm:$0xff]
      %v771 = vld [vmem:[%s337 + $0x10] sm:$0xff]
      %v772 = vld [vmem:[%s337 + $0x20] sm:$0xff]
      %v773 = vld [vmem:[%s337 + $0x30] sm:$0xff]
      %v774 = vld [vmem:[%s337 + $0x40] sm:$0xff]
      %v775 = vld [vmem:[%s337 + $0x50] sm:$0xff]
      %v776 = vld [vmem:[%s337 + $0x60] sm:$0xff]
      %v777 = vld [vmem:[%s337 + $0x70] sm:$0xff]
      %s778 = scalar_lea.vmem %s3, 24
      %v779 = vld [vmem:[%s778] sm:$0xff]
      %v781 = vsel %vm309, %v770, 0
      %v784 = vsel %vm309, %v771, 0
      %v787 = vsel %vm309, %v772, 0
      %v790 = vsel %vm309, %v773, 0
      %v793 = vsel %vm309, %v774, 0
      %v796 = vsel %vm309, %v775, 0
      %v799 = vsel %vm309, %v776, 0
      %v802 = vsel %vm309, %v777, 0
      %804 = vmatprep.subr.mxu0 0.0
      %805 = vmatpush1.msra.mxu0 0.0
      %806 = vmatprep.subr.mxu0 0.0
      %807 = vmatpush1.msra.mxu0 0.0
      %808 = vmatprep.subr.mxu0 0.0
      %809 = vmatpush1.msra.mxu0 0.0
      %810 = vmatprep.subr.mxu0 0.0
      %811 = vmatpush1.msra.mxu0 0.0
      %812 = vmatprep.subr.mxu0 0.0
      %813 = vmatpush1.msra.mxu0 0.0
      %814 = vmatprep.subr.mxu0 0.0
      %815 = vmatpush1.msra.mxu0 0.0
      %816 = vmatprep.subr.mxu0 0.0
      %817 = vmatpush1.msra.mxu0 0.0
      %818 = vmatprep.subr.mxu0 0.0
      %819 = vmatpush1.msra.mxu0 0.0
      %820 = vmatprep.subr.mxu0 0.0
      %821 = vmatpush1.msra.mxu0 0.0
      %822 = vmatprep.subr.mxu0 0.0
      %823 = vmatpush1.msra.mxu0 0.0
      %824 = vmatprep.subr.mxu0 0.0
      %825 = vmatpush1.msra.mxu0 0.0
      %826 = vmatprep.subr.mxu0 0.0
      %827 = vmatpush1.msra.mxu0 0.0
      %828 = vmatprep.subr.mxu0 0.0
      %829 = vmatpush1.msra.mxu0 0.0
      %830 = vmatprep.subr.mxu0 0.0
      %831 = vmatpush1.msra.mxu0 0.0
      %832 = vmatprep.subr.mxu0 0.0
      %833 = vmatpush1.msra.mxu0 0.0
      %834 = vmatprep.subr.mxu0 0.0
      %835 = vmatpush1.msra.mxu0 %v779
      %836 = vmatprep.subr.mxu0 0.0
      %837 = vmatpush2.msra.mxu0 0.0
      %838 = vmatprep.subr.mxu0 0.0
      %839 = vmatpush2.msra.mxu0 0.0
      %840 = vmatprep.subr.mxu0 0.0
      %841 = vmatpush2.msra.mxu0 0.0
      %842 = vmatprep.subr.mxu0 0.0
      %843 = vmatpush2.msra.mxu0 0.0
      %844 = vmatprep.subr.mxu0 0.0
      %845 = vmatpush2.msra.mxu0 0.0
      %846 = vmatprep.subr.mxu0 0.0
      %847 = vmatpush2.msra.mxu0 0.0
      %848 = vmatprep.subr.mxu0 0.0
      %849 = vmatpush2.msra.mxu0 0.0
      %850 = vmatprep.subr.mxu0 0.0
      %851 = vmatpush2.msra.mxu0 0.0
      %852 = vmatprep.subr.mxu0 0.0
      %853 = vmatpush2.msra.mxu0 0.0
      %854 = vmatprep.subr.mxu0 0.0
      %855 = vmatpush2.msra.mxu0 0.0
      %856 = vmatprep.subr.mxu0 0.0
      %857 = vmatpush2.msra.mxu0 0.0
      %858 = vmatprep.subr.mxu0 0.0
      %859 = vmatpush2.msra.mxu0 0.0
      %860 = vmatprep.subr.mxu0 0.0
      %861 = vmatpush2.msra.mxu0 0.0
      %862 = vmatprep.subr.mxu0 0.0
      %863 = vmatpush2.msra.mxu0 0.0
      %864 = vmatprep.subr.mxu0 0.0
      %865 = vmatpush2.msra.mxu0 0.0
      %866 = vmatprep.subr.mxu0 0.0
      %867 = vmatpush2.msra.mxu0 0.0
      %868 = vmatprep.mubr.f32.mxu0 0.0
      %869 = vmatmul.mubr.f32.gmra.mxu0 %v781
      %v870 = vpop.f32.mrf.mxu0
      %v871 = vadd.f32 0.0, %v870
      %v872 = vpop.f32.mrf.mxu0
      %873 = vmatprep.mubr.f32.mxu0 0.0
      %874 = vmatmul.mubr.f32.gmra.mxu0 %v784
      %v875 = vpop.f32.mrf.mxu0
      %v876 = vadd.f32 0.0, %v875
      %v877 = vpop.f32.mrf.mxu0
      %878 = vmatprep.mubr.f32.mxu0 0.0
      %879 = vmatmul.mubr.f32.gmra.mxu0 %v787
      %v880 = vpop.f32.mrf.mxu0
      %v881 = vadd.f32 0.0, %v880
      %v882 = vpop.f32.mrf.mxu0
      %883 = vmatprep.mubr.f32.mxu0 0.0
      %884 = vmatmul.mubr.f32.gmra.mxu0 %v790
      %v885 = vpop.f32.mrf.mxu0
      %v886 = vadd.f32 0.0, %v885
      %v887 = vpop.f32.mrf.mxu0
      %888 = vmatprep.mubr.f32.mxu0 0.0
      %889 = vmatmul.mubr.f32.gmra.mxu0 %v793
      %v890 = vpop.f32.mrf.mxu0
      %v891 = vadd.f32 0.0, %v890
      %v892 = vpop.f32.mrf.mxu0
      %893 = vmatprep.mubr.f32.mxu0 0.0
      %894 = vmatmul.mubr.f32.gmra.mxu0 %v796
      %v895 = vpop.f32.mrf.mxu0
      %v896 = vadd.f32 0.0, %v895
      %v897 = vpop.f32.mrf.mxu0
      %898 = vmatprep.mubr.f32.mxu0 0.0
      %899 = vmatmul.mubr.f32.gmra.mxu0 %v799
      %v900 = vpop.f32.mrf.mxu0
      %v901 = vadd.f32 0.0, %v900
      %v902 = vpop.f32.mrf.mxu0
      %903 = vmatprep.mubr.f32.mxu0 0.0
      %904 = vmatmul.mubr.f32.gmra.mxu0 %v802
      %v905 = vpop.f32.mrf.mxu0
      %v906 = vadd.f32 0.0, %v905
      %v907 = vpop.f32.mrf.mxu0
      %908 = vdwg.mxu0
      %v909 = vadd.f32 %v762, %v871
      %v910 = vadd.f32 %v763, %v876
      %v911 = vadd.f32 %v764, %v881
      %v912 = vadd.f32 %v765, %v886
      %v913 = vadd.f32 %v766, %v891
      %v914 = vadd.f32 %v767, %v896
      %v915 = vadd.f32 %v768, %v901
      %v916 = vadd.f32 %v769, %v906
      %v917 = vld [vmem:[%s337 + $0x1] sm:$0xff]
      %v918 = vld [vmem:[%s337 + $0x11] sm:$0xff]
      %v919 = vld [vmem:[%s337 + $0x21] sm:$0xff]
      %v920 = vld [vmem:[%s337 + $0x31] sm:$0xff]
      %v921 = vld [vmem:[%s337 + $0x41] sm:$0xff]
      %v922 = vld [vmem:[%s337 + $0x51] sm:$0xff]
      %v923 = vld [vmem:[%s337 + $0x61] sm:$0xff]
      %v924 = vld [vmem:[%s337 + $0x71] sm:$0xff]
      %s925 = scalar_lea.vmem %s3, 32
      %v926 = vld [vmem:[%s925] sm:$0xff]
      %v928 = vsel %vm309, %v917, 0
      %v931 = vsel %vm309, %v918, 0
      %v934 = vsel %vm309, %v919, 0
      %v937 = vsel %vm309, %v920, 0
      %v940 = vsel %vm309, %v921, 0
      %v943 = vsel %vm309, %v922, 0
      %v946 = vsel %vm309, %v923, 0
      %v949 = vsel %vm309, %v924, 0
      %951 = vmatprep.subr.mxu0 0.0
      %952 = vmatpush1.msra.mxu0 0.0
      %953 = vmatprep.subr.mxu0 0.0
      %954 = vmatpush1.msra.mxu0 0.0
      %955 = vmatprep.subr.mxu0 0.0
      %956 = vmatpush1.msra.mxu0 0.0
      %957 = vmatprep.subr.mxu0 0.0
      %958 = vmatpush1.msra.mxu0 0.0
      %959 = vmatprep.subr.mxu0 0.0
      %960 = vmatpush1.msra.mxu0 0.0
      %961 = vmatprep.subr.mxu0 0.0
      %962 = vmatpush1.msra.mxu0 0.0
      %963 = vmatprep.subr.mxu0 0.0
      %964 = vmatpush1.msra.mxu0 0.0
      %965 = vmatprep.subr.mxu0 0.0
      %966 = vmatpush1.msra.mxu0 0.0
      %967 = vmatprep.subr.mxu0 0.0
      %968 = vmatpush1.msra.mxu0 0.0
      %969 = vmatprep.subr.mxu0 0.0
      %970 = vmatpush1.msra.mxu0 0.0
      %971 = vmatprep.subr.mxu0 0.0
      %972 = vmatpush1.msra.mxu0 0.0
      %973 = vmatprep.subr.mxu0 0.0
      %974 = vmatpush1.msra.mxu0 0.0
      %975 = vmatprep.subr.mxu0 0.0
      %976 = vmatpush1.msra.mxu0 0.0
      %977 = vmatprep.subr.mxu0 0.0
      %978 = vmatpush1.msra.mxu0 0.0
      %979 = vmatprep.subr.mxu0 0.0
      %980 = vmatpush1.msra.mxu0 0.0
      %981 = vmatprep.subr.mxu0 0.0
      %982 = vmatpush1.msra.mxu0 %v926
      %983 = vmatprep.subr.mxu0 0.0
      %984 = vmatpush2.msra.mxu0 0.0
      %985 = vmatprep.subr.mxu0 0.0
      %986 = vmatpush2.msra.mxu0 0.0
      %987 = vmatprep.subr.mxu0 0.0
      %988 = vmatpush2.msra.mxu0 0.0
      %989 = vmatprep.subr.mxu0 0.0
      %990 = vmatpush2.msra.mxu0 0.0
      %991 = vmatprep.subr.mxu0 0.0
      %992 = vmatpush2.msra.mxu0 0.0
      %993 = vmatprep.subr.mxu0 0.0
      %994 = vmatpush2.msra.mxu0 0.0
      %995 = vmatprep.subr.mxu0 0.0
      %996 = vmatpush2.msra.mxu0 0.0
      %997 = vmatprep.subr.mxu0 0.0
      %998 = vmatpush2.msra.mxu0 0.0
      %999 = vmatprep.subr.mxu0 0.0
      %1000 = vmatpush2.msra.mxu0 0.0
      %1001 = vmatprep.subr.mxu0 0.0
      %1002 = vmatpush2.msra.mxu0 0.0
      %1003 = vmatprep.subr.mxu0 0.0
      %1004 = vmatpush2.msra.mxu0 0.0
      %1005 = vmatprep.subr.mxu0 0.0
      %1006 = vmatpush2.msra.mxu0 0.0
      %1007 = vmatprep.subr.mxu0 0.0
      %1008 = vmatpush2.msra.mxu0 0.0
      %1009 = vmatprep.subr.mxu0 0.0
      %1010 = vmatpush2.msra.mxu0 0.0
      %1011 = vmatprep.subr.mxu0 0.0
      %1012 = vmatpush2.msra.mxu0 0.0
      %1013 = vmatprep.subr.mxu0 0.0
      %1014 = vmatpush2.msra.mxu0 0.0
      %1015 = vmatprep.mubr.f32.mxu0 0.0
      %1016 = vmatmul.mubr.f32.gmra.mxu0 %v928
      %v1017 = vpop.f32.mrf.mxu0
      %v1018 = vadd.f32 0.0, %v1017
      %v1019 = vpop.f32.mrf.mxu0
      %1020 = vmatprep.mubr.f32.mxu0 0.0
      %1021 = vmatmul.mubr.f32.gmra.mxu0 %v931
      %v1022 = vpop.f32.mrf.mxu0
      %v1023 = vadd.f32 0.0, %v1022
      %v1024 = vpop.f32.mrf.mxu0
      %1025 = vmatprep.mubr.f32.mxu0 0.0
      %1026 = vmatmul.mubr.f32.gmra.mxu0 %v934
      %v1027 = vpop.f32.mrf.mxu0
      %v1028 = vadd.f32 0.0, %v1027
      %v1029 = vpop.f32.mrf.mxu0
      %1030 = vmatprep.mubr.f32.mxu0 0.0
      %1031 = vmatmul.mubr.f32.gmra.mxu0 %v937
      %v1032 = vpop.f32.mrf.mxu0
      %v1033 = vadd.f32 0.0, %v1032
      %v1034 = vpop.f32.mrf.mxu0
      %1035 = vmatprep.mubr.f32.mxu0 0.0
      %1036 = vmatmul.mubr.f32.gmra.mxu0 %v940
      %v1037 = vpop.f32.mrf.mxu0
      %v1038 = vadd.f32 0.0, %v1037
      %v1039 = vpop.f32.mrf.mxu0
      %1040 = vmatprep.mubr.f32.mxu0 0.0
      %1041 = vmatmul.mubr.f32.gmra.mxu0 %v943
      %v1042 = vpop.f32.mrf.mxu0
      %v1043 = vadd.f32 0.0, %v1042
      %v1044 = vpop.f32.mrf.mxu0
      %1045 = vmatprep.mubr.f32.mxu0 0.0
      %1046 = vmatmul.mubr.f32.gmra.mxu0 %v946
      %v1047 = vpop.f32.mrf.mxu0
      %v1048 = vadd.f32 0.0, %v1047
      %v1049 = vpop.f32.mrf.mxu0
      %1050 = vmatprep.mubr.f32.mxu0 0.0
      %1051 = vmatmul.mubr.f32.gmra.mxu0 %v949
      %v1052 = vpop.f32.mrf.mxu0
      %v1053 = vadd.f32 0.0, %v1052
      %v1054 = vpop.f32.mrf.mxu0
      %1055 = vdwg.mxu0
      %v1056 = vadd.f32 %v909, %v1018
      %v1057 = vadd.f32 %v910, %v1023
      %v1058 = vadd.f32 %v911, %v1028
      %v1059 = vadd.f32 %v912, %v1033
      %v1060 = vadd.f32 %v913, %v1038
      %v1061 = vadd.f32 %v914, %v1043
      %v1062 = vadd.f32 %v915, %v1048
      %v1063 = vadd.f32 %v916, %v1053
      %v1064 = vld [vmem:[%s337 + $0x2] sm:$0xff]
      %v1065 = vld [vmem:[%s337 + $0x12] sm:$0xff]
      %v1066 = vld [vmem:[%s337 + $0x22] sm:$0xff]
      %v1067 = vld [vmem:[%s337 + $0x32] sm:$0xff]
      %v1068 = vld [vmem:[%s337 + $0x42] sm:$0xff]
      %v1069 = vld [vmem:[%s337 + $0x52] sm:$0xff]
      %v1070 = vld [vmem:[%s337 + $0x62] sm:$0xff]
      %v1071 = vld [vmem:[%s337 + $0x72] sm:$0xff]
      %s1072 = scalar_lea.vmem %s3, 40
      %v1073 = vld [vmem:[%s1072] sm:$0xff]
      %v1075 = vsel %vm309, %v1064, 0
      %v1078 = vsel %vm309, %v1065, 0
      %v1081 = vsel %vm309, %v1066, 0
      %v1084 = vsel %vm309, %v1067, 0
      %v1087 = vsel %vm309, %v1068, 0
      %v1090 = vsel %vm309, %v1069, 0
      %v1093 = vsel %vm309, %v1070, 0
      %v1096 = vsel %vm309, %v1071, 0
      %1098 = vmatprep.subr.mxu0 0.0
      %1099 = vmatpush1.msra.mxu0 0.0
      %1100 = vmatprep.subr.mxu0 0.0
      %1101 = vmatpush1.msra.mxu0 0.0
      %1102 = vmatprep.subr.mxu0 0.0
      %1103 = vmatpush1.msra.mxu0 0.0
      %1104 = vmatprep.subr.mxu0 0.0
      %1105 = vmatpush1.msra.mxu0 0.0
      %1106 = vmatprep.subr.mxu0 0.0
      %1107 = vmatpush1.msra.mxu0 0.0
      %1108 = vmatprep.subr.mxu0 0.0
      %1109 = vmatpush1.msra.mxu0 0.0
      %1110 = vmatprep.subr.mxu0 0.0
      %1111 = vmatpush1.msra.mxu0 0.0
      %1112 = vmatprep.subr.mxu0 0.0
      %1113 = vmatpush1.msra.mxu0 0.0
      %1114 = vmatprep.subr.mxu0 0.0
      %1115 = vmatpush1.msra.mxu0 0.0
      %1116 = vmatprep.subr.mxu0 0.0
      %1117 = vmatpush1.msra.mxu0 0.0
      %1118 = vmatprep.subr.mxu0 0.0
      %1119 = vmatpush1.msra.mxu0 0.0
      %1120 = vmatprep.subr.mxu0 0.0
      %1121 = vmatpush1.msra.mxu0 0.0
      %1122 = vmatprep.subr.mxu0 0.0
      %1123 = vmatpush1.msra.mxu0 0.0
      %1124 = vmatprep.subr.mxu0 0.0
      %1125 = vmatpush1.msra.mxu0 0.0
      %1126 = vmatprep.subr.mxu0 0.0
      %1127 = vmatpush1.msra.mxu0 0.0
      %1128 = vmatprep.subr.mxu0 0.0
      %1129 = vmatpush1.msra.mxu0 %v1073
      %1130 = vmatprep.subr.mxu0 0.0
      %1131 = vmatpush2.msra.mxu0 0.0
      %1132 = vmatprep.subr.mxu0 0.0
      %1133 = vmatpush2.msra.mxu0 0.0
      %1134 = vmatprep.subr.mxu0 0.0
      %1135 = vmatpush2.msra.mxu0 0.0
      %1136 = vmatprep.subr.mxu0 0.0
      %1137 = vmatpush2.msra.mxu0 0.0
      %1138 = vmatprep.subr.mxu0 0.0
      %1139 = vmatpush2.msra.mxu0 0.0
      %1140 = vmatprep.subr.mxu0 0.0
      %1141 = vmatpush2.msra.mxu0 0.0
      %1142 = vmatprep.subr.mxu0 0.0
      %1143 = vmatpush2.msra.mxu0 0.0
      %1144 = vmatprep.subr.mxu0 0.0
      %1145 = vmatpush2.msra.mxu0 0.0
      %1146 = vmatprep.subr.mxu0 0.0
      %1147 = vmatpush2.msra.mxu0 0.0
      %1148 = vmatprep.subr.mxu0 0.0
      %1149 = vmatpush2.msra.mxu0 0.0
      %1150 = vmatprep.subr.mxu0 0.0
      %1151 = vmatpush2.msra.mxu0 0.0
      %1152 = vmatprep.subr.mxu0 0.0
      %1153 = vmatpush2.msra.mxu0 0.0
      %1154 = vmatprep.subr.mxu0 0.0
      %1155 = vmatpush2.msra.mxu0 0.0
      %1156 = vmatprep.subr.mxu0 0.0
      %1157 = vmatpush2.msra.mxu0 0.0
      %1158 = vmatprep.subr.mxu0 0.0
      %1159 = vmatpush2.msra.mxu0 0.0
      %1160 = vmatprep.subr.mxu0 0.0
      %1161 = vmatpush2.msra.mxu0 0.0
      %1162 = vmatprep.mubr.f32.mxu0 0.0
      %1163 = vmatmul.mubr.f32.gmra.mxu0 %v1075
      %v1164 = vpop.f32.mrf.mxu0
      %v1165 = vadd.f32 0.0, %v1164
      %v1166 = vpop.f32.mrf.mxu0
      %1167 = vmatprep.mubr.f32.mxu0 0.0
      %1168 = vmatmul.mubr.f32.gmra.mxu0 %v1078
      %v1169 = vpop.f32.mrf.mxu0
      %v1170 = vadd.f32 0.0, %v1169
      %v1171 = vpop.f32.mrf.mxu0
      %1172 = vmatprep.mubr.f32.mxu0 0.0
      %1173 = vmatmul.mubr.f32.gmra.mxu0 %v1081
      %v1174 = vpop.f32.mrf.mxu0
      %v1175 = vadd.f32 0.0, %v1174
      %v1176 = vpop.f32.mrf.mxu0
      %1177 = vmatprep.mubr.f32.mxu0 0.0
      %1178 = vmatmul.mubr.f32.gmra.mxu0 %v1084
      %v1179 = vpop.f32.mrf.mxu0
      %v1180 = vadd.f32 0.0, %v1179
      %v1181 = vpop.f32.mrf.mxu0
      %1182 = vmatprep.mubr.f32.mxu0 0.0
      %1183 = vmatmul.mubr.f32.gmra.mxu0 %v1087
      %v1184 = vpop.f32.mrf.mxu0
      %v1185 = vadd.f32 0.0, %v1184
      %v1186 = vpop.f32.mrf.mxu0
      %1187 = vmatprep.mubr.f32.mxu0 0.0
      %1188 = vmatmul.mubr.f32.gmra.mxu0 %v1090
      %v1189 = vpop.f32.mrf.mxu0
      %v1190 = vadd.f32 0.0, %v1189
      %v1191 = vpop.f32.mrf.mxu0
      %1192 = vmatprep.mubr.f32.mxu0 0.0
      %1193 = vmatmul.mubr.f32.gmra.mxu0 %v1093
      %v1194 = vpop.f32.mrf.mxu0
      %v1195 = vadd.f32 0.0, %v1194
      %v1196 = vpop.f32.mrf.mxu0
      %1197 = vmatprep.mubr.f32.mxu0 0.0
      %1198 = vmatmul.mubr.f32.gmra.mxu0 %v1096
      %v1199 = vpop.f32.mrf.mxu0
      %v1200 = vadd.f32 0.0, %v1199
      %v1201 = vpop.f32.mrf.mxu0
      %1202 = vdwg.mxu0
      %v1203 = vadd.f32 %v1056, %v1165
      %v1204 = vadd.f32 %v1057, %v1170
      %v1205 = vadd.f32 %v1058, %v1175
      %v1206 = vadd.f32 %v1059, %v1180
      %v1207 = vadd.f32 %v1060, %v1185
      %v1208 = vadd.f32 %v1061, %v1190
      %v1209 = vadd.f32 %v1062, %v1195
      %v1210 = vadd.f32 %v1063, %v1200
      %s1211 = scalar_lea.vmem [#allocation2], 32
      %v1212 = vld [vmem:[%s1211] sm:$0xff]
      %v1213 = vld [vmem:[%s1211 + $0x10] sm:$0xff]
      %v1214 = vld [vmem:[%s1211 + $0x20] sm:$0xff]
      %v1215 = vld [vmem:[%s1211 + $0x30] sm:$0xff]
      %v1216 = vld [vmem:[%s1211 + $0x40] sm:$0xff]
      %v1217 = vld [vmem:[%s1211 + $0x50] sm:$0xff]
      %v1218 = vld [vmem:[%s1211 + $0x60] sm:$0xff]
      %v1219 = vld [vmem:[%s1211 + $0x70] sm:$0xff]
      %s1220 = scalar_lea.vmem %s3, 48
      %v1221 = vld [vmem:[%s1220] sm:$0xff]
      %v1223 = vsel %vm309, %v1212, 0
      %v1226 = vsel %vm309, %v1213, 0
      %v1229 = vsel %vm309, %v1214, 0
      %v1232 = vsel %vm309, %v1215, 0
      %v1235 = vsel %vm309, %v1216, 0
      %v1238 = vsel %vm309, %v1217, 0
      %v1241 = vsel %vm309, %v1218, 0
      %v1244 = vsel %vm309, %v1219, 0
      %1246 = vmatprep.subr.mxu0 0.0
      %1247 = vmatpush1.msra.mxu0 0.0
      %1248 = vmatprep.subr.mxu0 0.0
      %1249 = vmatpush1.msra.mxu0 0.0
      %1250 = vmatprep.subr.mxu0 0.0
      %1251 = vmatpush1.msra.mxu0 0.0
      %1252 = vmatprep.subr.mxu0 0.0
      %1253 = vmatpush1.msra.mxu0 0.0
      %1254 = vmatprep.subr.mxu0 0.0
      %1255 = vmatpush1.msra.mxu0 0.0
      %1256 = vmatprep.subr.mxu0 0.0
      %1257 = vmatpush1.msra.mxu0 0.0
      %1258 = vmatprep.subr.mxu0 0.0
      %1259 = vmatpush1.msra.mxu0 0.0
      %1260 = vmatprep.subr.mxu0 0.0
      %1261 = vmatpush1.msra.mxu0 0.0
      %1262 = vmatprep.subr.mxu0 0.0
      %1263 = vmatpush1.msra.mxu0 0.0
      %1264 = vmatprep.subr.mxu0 0.0
      %1265 = vmatpush1.msra.mxu0 0.0
      %1266 = vmatprep.subr.mxu0 0.0
      %1267 = vmatpush1.msra.mxu0 0.0
      %1268 = vmatprep.subr.mxu0 0.0
      %1269 = vmatpush1.msra.mxu0 0.0
      %1270 = vmatprep.subr.mxu0 0.0
      %1271 = vmatpush1.msra.mxu0 0.0
      %1272 = vmatprep.subr.mxu0 0.0
      %1273 = vmatpush1.msra.mxu0 0.0
      %1274 = vmatprep.subr.mxu0 0.0
      %1275 = vmatpush1.msra.mxu0 0.0
      %1276 = vmatprep.subr.mxu0 0.0
      %1277 = vmatpush1.msra.mxu0 %v1221
      %1278 = vmatprep.subr.mxu0 0.0
      %1279 = vmatpush2.msra.mxu0 0.0
      %1280 = vmatprep.subr.mxu0 0.0
      %1281 = vmatpush2.msra.mxu0 0.0
      %1282 = vmatprep.subr.mxu0 0.0
      %1283 = vmatpush2.msra.mxu0 0.0
      %1284 = vmatprep.subr.mxu0 0.0
      %1285 = vmatpush2.msra.mxu0 0.0
      %1286 = vmatprep.subr.mxu0 0.0
      %1287 = vmatpush2.msra.mxu0 0.0
      %1288 = vmatprep.subr.mxu0 0.0
      %1289 = vmatpush2.msra.mxu0 0.0
      %1290 = vmatprep.subr.mxu0 0.0
      %1291 = vmatpush2.msra.mxu0 0.0
      %1292 = vmatprep.subr.mxu0 0.0
      %1293 = vmatpush2.msra.mxu0 0.0
      %1294 = vmatprep.subr.mxu0 0.0
      %1295 = vmatpush2.msra.mxu0 0.0
      %1296 = vmatprep.subr.mxu0 0.0
      %1297 = vmatpush2.msra.mxu0 0.0
      %1298 = vmatprep.subr.mxu0 0.0
      %1299 = vmatpush2.msra.mxu0 0.0
      %1300 = vmatprep.subr.mxu0 0.0
      %1301 = vmatpush2.msra.mxu0 0.0
      %1302 = vmatprep.subr.mxu0 0.0
      %1303 = vmatpush2.msra.mxu0 0.0
      %1304 = vmatprep.subr.mxu0 0.0
      %1305 = vmatpush2.msra.mxu0 0.0
      %1306 = vmatprep.subr.mxu0 0.0
      %1307 = vmatpush2.msra.mxu0 0.0
      %1308 = vmatprep.subr.mxu0 0.0
      %1309 = vmatpush2.msra.mxu0 0.0
      %1310 = vmatprep.mubr.f32.mxu0 0.0
      %1311 = vmatmul.mubr.f32.gmra.mxu0 %v1223
      %v1312 = vpop.f32.mrf.mxu0
      %v1313 = vadd.f32 0.0, %v1312
      %v1314 = vpop.f32.mrf.mxu0
      %1315 = vmatprep.mubr.f32.mxu0 0.0
      %1316 = vmatmul.mubr.f32.gmra.mxu0 %v1226
      %v1317 = vpop.f32.mrf.mxu0
      %v1318 = vadd.f32 0.0, %v1317
      %v1319 = vpop.f32.mrf.mxu0
      %1320 = vmatprep.mubr.f32.mxu0 0.0
      %1321 = vmatmul.mubr.f32.gmra.mxu0 %v1229
      %v1322 = vpop.f32.mrf.mxu0
      %v1323 = vadd.f32 0.0, %v1322
      %v1324 = vpop.f32.mrf.mxu0
      %1325 = vmatprep.mubr.f32.mxu0 0.0
      %1326 = vmatmul.mubr.f32.gmra.mxu0 %v1232
      %v1327 = vpop.f32.mrf.mxu0
      %v1328 = vadd.f32 0.0, %v1327
      %v1329 = vpop.f32.mrf.mxu0
      %1330 = vmatprep.mubr.f32.mxu0 0.0
      %1331 = vmatmul.mubr.f32.gmra.mxu0 %v1235
      %v1332 = vpop.f32.mrf.mxu0
      %v1333 = vadd.f32 0.0, %v1332
      %v1334 = vpop.f32.mrf.mxu0
      %1335 = vmatprep.mubr.f32.mxu0 0.0
      %1336 = vmatmul.mubr.f32.gmra.mxu0 %v1238
      %v1337 = vpop.f32.mrf.mxu0
      %v1338 = vadd.f32 0.0, %v1337
      %v1339 = vpop.f32.mrf.mxu0
      %1340 = vmatprep.mubr.f32.mxu0 0.0
      %1341 = vmatmul.mubr.f32.gmra.mxu0 %v1241
      %v1342 = vpop.f32.mrf.mxu0
      %v1343 = vadd.f32 0.0, %v1342
      %v1344 = vpop.f32.mrf.mxu0
      %1345 = vmatprep.mubr.f32.mxu0 0.0
      %1346 = vmatmul.mubr.f32.gmra.mxu0 %v1244
      %v1347 = vpop.f32.mrf.mxu0
      %v1348 = vadd.f32 0.0, %v1347
      %v1349 = vpop.f32.mrf.mxu0
      %1350 = vdwg.mxu0
      %v1351 = vadd.f32 %v1203, %v1313
      %v1352 = vadd.f32 %v1204, %v1318
      %v1353 = vadd.f32 %v1205, %v1323
      %v1354 = vadd.f32 %v1206, %v1328
      %v1355 = vadd.f32 %v1207, %v1333
      %v1356 = vadd.f32 %v1208, %v1338
      %v1357 = vadd.f32 %v1209, %v1343
      %v1358 = vadd.f32 %v1210, %v1348
      %v1359 = vld [vmem:[%s1211 + $0x1] sm:$0xff]
      %v1360 = vld [vmem:[%s1211 + $0x11] sm:$0xff]
      %v1361 = vld [vmem:[%s1211 + $0x21] sm:$0xff]
      %v1362 = vld [vmem:[%s1211 + $0x31] sm:$0xff]
      %v1363 = vld [vmem:[%s1211 + $0x41] sm:$0xff]
      %v1364 = vld [vmem:[%s1211 + $0x51] sm:$0xff]
      %v1365 = vld [vmem:[%s1211 + $0x61] sm:$0xff]
      %v1366 = vld [vmem:[%s1211 + $0x71] sm:$0xff]
      %s1367 = scalar_lea.vmem %s3, 56
      %v1368 = vld [vmem:[%s1367] sm:$0xff]
      %v1370 = vsel %vm309, %v1359, 0
      %v1373 = vsel %vm309, %v1360, 0
      %v1376 = vsel %vm309, %v1361, 0
      %v1379 = vsel %vm309, %v1362, 0
      %v1382 = vsel %vm309, %v1363, 0
      %v1385 = vsel %vm309, %v1364, 0
      %v1388 = vsel %vm309, %v1365, 0
      %v1391 = vsel %vm309, %v1366, 0
      %1393 = vmatprep.subr.mxu0 0.0
      %1394 = vmatpush1.msra.mxu0 0.0
      %1395 = vmatprep.subr.mxu0 0.0
      %1396 = vmatpush1.msra.mxu0 0.0
      %1397 = vmatprep.subr.mxu0 0.0
      %1398 = vmatpush1.msra.mxu0 0.0
      %1399 = vmatprep.subr.mxu0 0.0
      %1400 = vmatpush1.msra.mxu0 0.0
      %1401 = vmatprep.subr.mxu0 0.0
      %1402 = vmatpush1.msra.mxu0 0.0
      %1403 = vmatprep.subr.mxu0 0.0
      %1404 = vmatpush1.msra.mxu0 0.0
      %1405 = vmatprep.subr.mxu0 0.0
      %1406 = vmatpush1.msra.mxu0 0.0
      %1407 = vmatprep.subr.mxu0 0.0
      %1408 = vmatpush1.msra.mxu0 0.0
      %1409 = vmatprep.subr.mxu0 0.0
      %1410 = vmatpush1.msra.mxu0 0.0
      %1411 = vmatprep.subr.mxu0 0.0
      %1412 = vmatpush1.msra.mxu0 0.0
      %1413 = vmatprep.subr.mxu0 0.0
      %1414 = vmatpush1.msra.mxu0 0.0
      %1415 = vmatprep.subr.mxu0 0.0
      %1416 = vmatpush1.msra.mxu0 0.0
      %1417 = vmatprep.subr.mxu0 0.0
      %1418 = vmatpush1.msra.mxu0 0.0
      %1419 = vmatprep.subr.mxu0 0.0
      %1420 = vmatpush1.msra.mxu0 0.0
      %1421 = vmatprep.subr.mxu0 0.0
      %1422 = vmatpush1.msra.mxu0 0.0
      %1423 = vmatprep.subr.mxu0 0.0
      %1424 = vmatpush1.msra.mxu0 %v1368
      %1425 = vmatprep.subr.mxu0 0.0
      %1426 = vmatpush2.msra.mxu0 0.0
      %1427 = vmatprep.subr.mxu0 0.0
      %1428 = vmatpush2.msra.mxu0 0.0
      %1429 = vmatprep.subr.mxu0 0.0
      %1430 = vmatpush2.msra.mxu0 0.0
      %1431 = vmatprep.subr.mxu0 0.0
      %1432 = vmatpush2.msra.mxu0 0.0
      %1433 = vmatprep.subr.mxu0 0.0
      %1434 = vmatpush2.msra.mxu0 0.0
      %1435 = vmatprep.subr.mxu0 0.0
      %1436 = vmatpush2.msra.mxu0 0.0
      %1437 = vmatprep.subr.mxu0 0.0
      %1438 = vmatpush2.msra.mxu0 0.0
      %1439 = vmatprep.subr.mxu0 0.0
      %1440 = vmatpush2.msra.mxu0 0.0
      %1441 = vmatprep.subr.mxu0 0.0
      %1442 = vmatpush2.msra.mxu0 0.0
      %1443 = vmatprep.subr.mxu0 0.0
      %1444 = vmatpush2.msra.mxu0 0.0
      %1445 = vmatprep.subr.mxu0 0.0
      %1446 = vmatpush2.msra.mxu0 0.0
      %1447 = vmatprep.subr.mxu0 0.0
      %1448 = vmatpush2.msra.mxu0 0.0
      %1449 = vmatprep.subr.mxu0 0.0
      %1450 = vmatpush2.msra.mxu0 0.0
      %1451 = vmatprep.subr.mxu0 0.0
      %1452 = vmatpush2.msra.mxu0 0.0
      %1453 = vmatprep.subr.mxu0 0.0
      %1454 = vmatpush2.msra.mxu0 0.0
      %1455 = vmatprep.subr.mxu0 0.0
      %1456 = vmatpush2.msra.mxu0 0.0
      %1457 = vmatprep.mubr.f32.mxu0 0.0
      %1458 = vmatmul.mubr.f32.gmra.mxu0 %v1370
      %v1459 = vpop.f32.mrf.mxu0
      %v1460 = vadd.f32 0.0, %v1459
      %v1461 = vpop.f32.mrf.mxu0
      %1462 = vmatprep.mubr.f32.mxu0 0.0
      %1463 = vmatmul.mubr.f32.gmra.mxu0 %v1373
      %v1464 = vpop.f32.mrf.mxu0
      %v1465 = vadd.f32 0.0, %v1464
      %v1466 = vpop.f32.mrf.mxu0
      %1467 = vmatprep.mubr.f32.mxu0 0.0
      %1468 = vmatmul.mubr.f32.gmra.mxu0 %v1376
      %v1469 = vpop.f32.mrf.mxu0
      %v1470 = vadd.f32 0.0, %v1469
      %v1471 = vpop.f32.mrf.mxu0
      %1472 = vmatprep.mubr.f32.mxu0 0.0
      %1473 = vmatmul.mubr.f32.gmra.mxu0 %v1379
      %v1474 = vpop.f32.mrf.mxu0
      %v1475 = vadd.f32 0.0, %v1474
      %v1476 = vpop.f32.mrf.mxu0
      %1477 = vmatprep.mubr.f32.mxu0 0.0
      %1478 = vmatmul.mubr.f32.gmra.mxu0 %v1382
      %v1479 = vpop.f32.mrf.mxu0
      %v1480 = vadd.f32 0.0, %v1479
      %v1481 = vpop.f32.mrf.mxu0
      %1482 = vmatprep.mubr.f32.mxu0 0.0
      %1483 = vmatmul.mubr.f32.gmra.mxu0 %v1385
      %v1484 = vpop.f32.mrf.mxu0
      %v1485 = vadd.f32 0.0, %v1484
      %v1486 = vpop.f32.mrf.mxu0
      %1487 = vmatprep.mubr.f32.mxu0 0.0
      %1488 = vmatmul.mubr.f32.gmra.mxu0 %v1388
      %v1489 = vpop.f32.mrf.mxu0
      %v1490 = vadd.f32 0.0, %v1489
      %v1491 = vpop.f32.mrf.mxu0
      %1492 = vmatprep.mubr.f32.mxu0 0.0
      %1493 = vmatmul.mubr.f32.gmra.mxu0 %v1391
      %v1494 = vpop.f32.mrf.mxu0
      %v1495 = vadd.f32 0.0, %v1494
      %v1496 = vpop.f32.mrf.mxu0
      %1497 = vdwg.mxu0
      %v1498 = vadd.f32 %v1351, %v1460
      %v1499 = vadd.f32 %v1352, %v1465
      %v1500 = vadd.f32 %v1353, %v1470
      %v1501 = vadd.f32 %v1354, %v1475
      %v1502 = vadd.f32 %v1355, %v1480
      %v1503 = vadd.f32 %v1356, %v1485
      %v1504 = vadd.f32 %v1357, %v1490
      %v1505 = vadd.f32 %v1358, %v1495
      %v1506 = vld [vmem:[%s1211 + $0x2] sm:$0xff]
      %v1507 = vld [vmem:[%s1211 + $0x12] sm:$0xff]
      %v1508 = vld [vmem:[%s1211 + $0x22] sm:$0xff]
      %v1509 = vld [vmem:[%s1211 + $0x32] sm:$0xff]
      %v1510 = vld [vmem:[%s1211 + $0x42] sm:$0xff]
      %v1511 = vld [vmem:[%s1211 + $0x52] sm:$0xff]
      %v1512 = vld [vmem:[%s1211 + $0x62] sm:$0xff]
      %v1513 = vld [vmem:[%s1211 + $0x72] sm:$0xff]
      %s1514 = scalar_lea.vmem %s3, 64
      %v1515 = vld [vmem:[%s1514] sm:$0xff]
      %v1517 = vsel %vm309, %v1506, 0
      %v1520 = vsel %vm309, %v1507, 0
      %v1523 = vsel %vm309, %v1508, 0
      %v1526 = vsel %vm309, %v1509, 0
      %v1529 = vsel %vm309, %v1510, 0
      %v1532 = vsel %vm309, %v1511, 0
      %v1535 = vsel %vm309, %v1512, 0
      %v1538 = vsel %vm309, %v1513, 0
      %1540 = vmatprep.subr.mxu0 0.0
      %1541 = vmatpush1.msra.mxu0 0.0
      %1542 = vmatprep.subr.mxu0 0.0
      %1543 = vmatpush1.msra.mxu0 0.0
      %1544 = vmatprep.subr.mxu0 0.0
      %1545 = vmatpush1.msra.mxu0 0.0
      %1546 = vmatprep.subr.mxu0 0.0
      %1547 = vmatpush1.msra.mxu0 0.0
      %1548 = vmatprep.subr.mxu0 0.0
      %1549 = vmatpush1.msra.mxu0 0.0
      %1550 = vmatprep.subr.mxu0 0.0
      %1551 = vmatpush1.msra.mxu0 0.0
      %1552 = vmatprep.subr.mxu0 0.0
      %1553 = vmatpush1.msra.mxu0 0.0
      %1554 = vmatprep.subr.mxu0 0.0
      %1555 = vmatpush1.msra.mxu0 0.0
      %1556 = vmatprep.subr.mxu0 0.0
      %1557 = vmatpush1.msra.mxu0 0.0
      %1558 = vmatprep.subr.mxu0 0.0
      %1559 = vmatpush1.msra.mxu0 0.0
      %1560 = vmatprep.subr.mxu0 0.0
      %1561 = vmatpush1.msra.mxu0 0.0
      %1562 = vmatprep.subr.mxu0 0.0
      %1563 = vmatpush1.msra.mxu0 0.0
      %1564 = vmatprep.subr.mxu0 0.0
      %1565 = vmatpush1.msra.mxu0 0.0
      %1566 = vmatprep.subr.mxu0 0.0
      %1567 = vmatpush1.msra.mxu0 0.0
      %1568 = vmatprep.subr.mxu0 0.0
      %1569 = vmatpush1.msra.mxu0 0.0
      %1570 = vmatprep.subr.mxu0 0.0
      %1571 = vmatpush1.msra.mxu0 %v1515
      %1572 = vmatprep.subr.mxu0 0.0
      %1573 = vmatpush2.msra.mxu0 0.0
      %1574 = vmatprep.subr.mxu0 0.0
      %1575 = vmatpush2.msra.mxu0 0.0
      %1576 = vmatprep.subr.mxu0 0.0
      %1577 = vmatpush2.msra.mxu0 0.0
      %1578 = vmatprep.subr.mxu0 0.0
      %1579 = vmatpush2.msra.mxu0 0.0
      %1580 = vmatprep.subr.mxu0 0.0
      %1581 = vmatpush2.msra.mxu0 0.0
      %1582 = vmatprep.subr.mxu0 0.0
      %1583 = vmatpush2.msra.mxu0 0.0
      %1584 = vmatprep.subr.mxu0 0.0
      %1585 = vmatpush2.msra.mxu0 0.0
      %1586 = vmatprep.subr.mxu0 0.0
      %1587 = vmatpush2.msra.mxu0 0.0
      %1588 = vmatprep.subr.mxu0 0.0
      %1589 = vmatpush2.msra.mxu0 0.0
      %1590 = vmatprep.subr.mxu0 0.0
      %1591 = vmatpush2.msra.mxu0 0.0
      %1592 = vmatprep.subr.mxu0 0.0
      %1593 = vmatpush2.msra.mxu0 0.0
      %1594 = vmatprep.subr.mxu0 0.0
      %1595 = vmatpush2.msra.mxu0 0.0
      %1596 = vmatprep.subr.mxu0 0.0
      %1597 = vmatpush2.msra.mxu0 0.0
      %1598 = vmatprep.subr.mxu0 0.0
      %1599 = vmatpush2.msra.mxu0 0.0
      %1600 = vmatprep.subr.mxu0 0.0
      %1601 = vmatpush2.msra.mxu0 0.0
      %1602 = vmatprep.subr.mxu0 0.0
      %1603 = vmatpush2.msra.mxu0 0.0
      %1604 = vmatprep.mubr.f32.mxu0 0.0
      %1605 = vmatmul.mubr.f32.gmra.mxu0 %v1517
      %v1606 = vpop.f32.mrf.mxu0
      %v1607 = vadd.f32 0.0, %v1606
      %v1608 = vpop.f32.mrf.mxu0
      %1609 = vmatprep.mubr.f32.mxu0 0.0
      %1610 = vmatmul.mubr.f32.gmra.mxu0 %v1520
      %v1611 = vpop.f32.mrf.mxu0
      %v1612 = vadd.f32 0.0, %v1611
      %v1613 = vpop.f32.mrf.mxu0
      %1614 = vmatprep.mubr.f32.mxu0 0.0
      %1615 = vmatmul.mubr.f32.gmra.mxu0 %v1523
      %v1616 = vpop.f32.mrf.mxu0
      %v1617 = vadd.f32 0.0, %v1616
      %v1618 = vpop.f32.mrf.mxu0
      %1619 = vmatprep.mubr.f32.mxu0 0.0
      %1620 = vmatmul.mubr.f32.gmra.mxu0 %v1526
      %v1621 = vpop.f32.mrf.mxu0
      %v1622 = vadd.f32 0.0, %v1621
      %v1623 = vpop.f32.mrf.mxu0
      %1624 = vmatprep.mubr.f32.mxu0 0.0
      %1625 = vmatmul.mubr.f32.gmra.mxu0 %v1529
      %v1626 = vpop.f32.mrf.mxu0
      %v1627 = vadd.f32 0.0, %v1626
      %v1628 = vpop.f32.mrf.mxu0
      %1629 = vmatprep.mubr.f32.mxu0 0.0
      %1630 = vmatmul.mubr.f32.gmra.mxu0 %v1532
      %v1631 = vpop.f32.mrf.mxu0
      %v1632 = vadd.f32 0.0, %v1631
      %v1633 = vpop.f32.mrf.mxu0
      %1634 = vmatprep.mubr.f32.mxu0 0.0
      %1635 = vmatmul.mubr.f32.gmra.mxu0 %v1535
      %v1636 = vpop.f32.mrf.mxu0
      %v1637 = vadd.f32 0.0, %v1636
      %v1638 = vpop.f32.mrf.mxu0
      %1639 = vmatprep.mubr.f32.mxu0 0.0
      %1640 = vmatmul.mubr.f32.gmra.mxu0 %v1538
      %v1641 = vpop.f32.mrf.mxu0
      %v1642 = vadd.f32 0.0, %v1641
      %v1643 = vpop.f32.mrf.mxu0
      %1644 = vdwg.mxu0
      %v1645 = vadd.f32 %v1498, %v1607
      %v1646 = vadd.f32 %v1499, %v1612
      %v1647 = vadd.f32 %v1500, %v1617
      %v1648 = vadd.f32 %v1501, %v1622
      %v1649 = vadd.f32 %v1502, %v1627
      %v1650 = vadd.f32 %v1503, %v1632
      %v1651 = vadd.f32 %v1504, %v1637
      %v1652 = vadd.f32 %v1505, %v1642
      %v1653 = vld [vmem:[%s4] sm:$0x1]
      %v1655 = vlaneseq
      %v1656 = vshrl.u32 %v1655, 7
      %v1657 = vsub.s32 0, %v1656
      %v1658 = vrot.slane %v1653, %v1657
      %v1660 = vadd.f32 %v1645, %v1658
      %v1661 = vadd.f32 %v1646, %v1658
      %v1662 = vadd.f32 %v1647, %v1658
      %v1663 = vadd.f32 %v1648, %v1658
      %v1664 = vadd.f32 %v1649, %v1658
      %v1665 = vadd.f32 %v1650, %v1658
      %v1666 = vadd.f32 %v1651, %v1658
      %v1667 = vadd.f32 %v1652, %v1658
      %1668 = vst.msk [vmem:[%s258] sm:$0xff] %vm309, %v1660
      %1669 = vst.msk [vmem:[%s258 + $0x8] sm:$0xff] %vm309, %v1661
      %1670 = vst.msk [vmem:[%s258 + $0x10] sm:$0xff] %vm309, %v1662
      %1671 = vst.msk [vmem:[%s258 + $0x18] sm:$0xff] %vm309, %v1663
      %1672 = vst.msk [vmem:[%s258 + $0x20] sm:$0xff] %vm309, %v1664
      %1673 = vst.msk [vmem:[%s258 + $0x28] sm:$0xff] %vm309, %v1665
      %1674 = vst.msk [vmem:[%s258 + $0x30] sm:$0xff] %vm309, %v1666
      %1675 = vst.msk [vmem:[%s258 + $0x38] sm:$0xff] %vm309, %v1667
      %v1676 = vsel %vm309, %v1660, 0.0
      %v1677 = vsel %vm309, %v1661, 0.0
      %v1678 = vadd.f32 %v1676, %v1677
      %v1679 = vsel %vm309, %v1662, 0.0
      %v1680 = vadd.f32 %v1678, %v1679
      %v1681 = vsel %vm309, %v1663, 0.0
      %v1682 = vadd.f32 %v1680, %v1681
      %v1683 = vsel %vm309, %v1664, 0.0
      %v1684 = vadd.f32 %v1682, %v1683
      %v1685 = vsel %vm309, %v1665, 0.0
      %v1686 = vadd.f32 %v1684, %v1685
      %v1687 = vsel %vm309, %v1666, 0.0
      %v1688 = vadd.f32 %v1686, %v1687
      %v1689 = vsel %vm309, %v1667, 0.0
      %v1690 = vadd.f32 %v1688, %v1689
      %v1691 = vrot.slane %v1690, 4
      %v1692 = vadd.f32 %v1690, %v1691
      %v1693 = vrot.slane %v1692, 2
      %v1694 = vadd.f32 %v1692, %v1693
      %v1695 = vrot.slane %v1694, 1
      %v1696 = vadd.f32 %v1694, %v1695
      %1697 = vst.msk [vmem:[%s262] sm:$0x1] %vm316, %v1696
      %v1698 = vmul.f32 %v1660, %v1660
      %v1699 = vmul.f32 %v1661, %v1661
      %v1700 = vmul.f32 %v1662, %v1662
      %v1701 = vmul.f32 %v1663, %v1663
      %v1702 = vmul.f32 %v1664, %v1664
      %v1703 = vmul.f32 %v1665, %v1665
      %v1704 = vmul.f32 %v1666, %v1666
      %v1705 = vmul.f32 %v1667, %v1667
      %v1706 = vsel %vm309, %v1698, 0.0
      %v1707 = vsel %vm309, %v1699, 0.0
      %v1708 = vadd.f32 %v1706, %v1707
      %v1709 = vsel %vm309, %v1700, 0.0
      %v1710 = vadd.f32 %v1708, %v1709
      %v1711 = vsel %vm309, %v1701, 0.0
      %v1712 = vadd.f32 %v1710, %v1711
      %v1713 = vsel %vm309, %v1702, 0.0
      %v1714 = vadd.f32 %v1712, %v1713
      %v1715 = vsel %vm309, %v1703, 0.0
      %v1716 = vadd.f32 %v1714, %v1715
      %v1717 = vsel %vm309, %v1704, 0.0
      %v1718 = vadd.f32 %v1716, %v1717
      %v1719 = vsel %vm309, %v1705, 0.0
      %v1720 = vadd.f32 %v1718, %v1719
      %v1721 = vrot.slane %v1720, 4
      %v1722 = vadd.f32 %v1720, %v1721
      %v1723 = vrot.slane %v1722, 2
      %v1724 = vadd.f32 %v1722, %v1723
      %v1725 = vrot.slane %v1724, 1
      %v1726 = vadd.f32 %v1724, %v1725
      %1727 = vst.msk [vmem:[%s262 + $0x1] sm:$0x1] %vm316, %v1726
      %p1728 = scmp.lt.s32.totalorder %s18, 1
      %s1729 = scalar_select %p1728, %s18, 1
      %s1730 = smul.addr %s1729, 8
      %s1731 = smul.addr %s1730, 8
      %s1732 = scalar_lea.vmem %s5, %s1731
      %p1733 = scmp.lt.s32.totalorder %s18, 1
      %s1734 = scalar_select %p1733, %s18, 1
      %s1735 = smul.addr %s1734, 2
      %s1736 = scalar_lea.vmem %s6, %s1735
      // Predicated region
      $region41: #{down_block.4} parent=39 // pred_check
        %p1737 = pneg %p146
      $region42: #{down_block.4} parent=39 // pred_check_branch
        %1739 = sbr.rel (%p1737) target = $region44
      $region43: #{down_block.4} parent=39 // pred_region
        _
      $region44: #{down_block.4} parent=39 // pred_fallthru
        _
      // Predicated region
      $region45: #{down_block.4} parent=39 // pred_check
        %p1740 = pneg %p172
      $region46: #{down_block.4} parent=39 // pred_check_branch
        %1742 = sbr.rel (%p1740) target = $region48
      $region47: #{down_block.4} parent=39 // pred_region
        _
      $region48: #{down_block.4} parent=39 // pred_fallthru
        _
    $region40: #{down_block.4} parent=5 // pred_fallthru
      _
    %p1743 = scmp.le.s32.totalorder 2, %s13
    // Predicated region
    $region49: #{down_block.4} parent=5 // pred_check
      %p1744 = pneg %p1743
    $region50: #{down_block.4} parent=5 // pred_check_branch
      %1746 = sbr.rel (%p1744) target = $region52
    $region51: #{down_block.4} parent=5 // pred_region
      %s1747 = ssub.s32 %s13, 2
      // Predicated region
      $region53: #{down_block.4} parent=51 // pred_check
        %p1748 = pneg %p152
      $region54: #{down_block.4} parent=51 // pred_check_branch
        %1750 = sbr.rel (%p1748) target = $region56
      $region55: #{down_block.4} parent=51 // pred_region
        %p1751 = scmp.lt.s32.totalorder %s19, 1
        %s1752 = scalar_select %p1751, %s19, 1
        %s1753 = smul.addr %s1752, 8
        %s1754 = smul.addr %s1753, 8
        %s1755 = scalar_lea.vmem %s5, %s1754
      $region56: #{down_block.4} parent=51 // pred_fallthru
        _
      // Predicated region
      $region57: #{down_block.4} parent=51 // pred_check
        %p1756 = pneg %p178
      $region58: #{down_block.4} parent=51 // pred_check_branch
        %1758 = sbr.rel (%p1756) target = $region60
      $region59: #{down_block.4} parent=51 // pred_region
        %p1759 = scmp.lt.s32.totalorder %s19, 1
        %s1760 = scalar_select %p1759, %s19, 1
        %s1761 = smul.addr %s1760, 2
        %s1762 = scalar_lea.vmem %s6, %s1761
      $region60: #{down_block.4} parent=51 // pred_fallthru
        _
    $region52: #{down_block.4} parent=5 // pred_fallthru
      _
  $region6: #{down_block.4} parent=0 // loop_footer
    %s17 = sadd.s32 1, %s13
  $region7: #{down_block.4} parent=0 // loop_footer_branch
    %12 = sbr.rel target = $region3
  $region8: #{down_block.4} parent=0 // loop_exit
    _

// kernel: down_block.3
$region0: #{down_block.3}
  #allocation0 [shape = 'u32[]', space=smem, size = 0x4, offset = 0x4, fixed_abs, tag = 'smem constant byte address 0x4 - core index']
  #allocation1 [shape = 'u32[144,128]{1,0:T(1,128)}', space=vmem, size = 0x12000, scoped, tag = 'internal scratch']
  #allocation2 [shape = 'f32[10,10,4]{2,1,0:T(8,128)}', space=vmem, size = 0x14000, scoped, tag = 'scratch operand']
  %s0 = inlined_call_operand.vmem [shape: f32[2,16,16,4], index: 0, kind: input, shape index: {}]
  %s1 = inlined_call_operand.vmem [shape: f32[9,4,8], index: 1, kind: input, shape index: {}]
  %s2 = inlined_call_operand.vmem [shape: f32[1,8], index: 2, kind: input, shape index: {}]
  %s3 = inlined_call_operand.vmem [shape: f32[2,8,8,8], index: 3, kind: output, shape index: {0}]
  %s4 = inlined_call_operand.vmem [shape: f32[2,2,8], index: 4, kind: output, shape index: {1}]
  %5 = xla_tuple %s3, %s4
  %s6 = sld [smem:[#allocation0]]
  $region53: #{down_block.3} parent=0
    _
  %s8 = ssub.s32 1, %s6
  %s9 = scalar_select 0, %s8, %s6
  loop: start=0, step=1, limit=4
  $region2: #{down_block.3} parent=0 // loop_pre_header
    _
  $region3: #{down_block.3} parent=0 // loop_header
    %s11 = sphi 0, %s15
    %p12 = scmp.ge.s32.totalorder %s11, 4
    %s21 = sphi 0, %s23
    %s24 = sphi 0, %s21
    %s25 = sphi 0, %s24
    %s41 = sphi 0, %s25
    %s45 = sphi 0, %s45
    %s47 = sphi 0, %s45
    %s48 = sphi 0, %s47
    %s62 = sphi 0, %s48
    %s66 = sphi 0, %s66
    %s68 = sphi 0, %s66
    %s69 = sphi 0, %s68
    %s83 = sphi 0, %s69
    %s89 = sphi 0, %s91
    %s92 = sphi 0, %s89
    %s93 = sphi 0, %s92
    %s109 = sphi 0, %s93
    %s115 = sphi 0, %s117
    %s118 = sphi 0, %s115
    %s119 = sphi 0, %s118
    %s135 = sphi 0, %s119
  $region4: #{down_block.3} parent=0 // loop_header_branch
    %14 = sbr.rel (%p12) target = $region8
  $region5: #{down_block.3} parent=0 // loop_body
    %s16 = ssub.s32 %s11, 1
    %s17 = ssub.s32 %s11, 2
    %s18 = sadd.s32 %s11, 1
    %s19 = ssub.s32 %s11, %s18
    %p20 = scmp.eq.s32.totalorder %s19, 0
    %s22 = sadd.s32 %s21, 1
    %s23 = scalar_select %p20, %s21, %s22
    %p26 = pneg %p20
    %p27 = scmp.eq.s32.totalorder %s11, 1
    %p28 = por %p26, %p27
    %p29 = scmp.ne.s32.totalorder %s21, %s24
    %p30 = scmp.eq.s32.totalorder %s11, 0
    %p31 = por %p29, %p30
    %p32 = scmp.ne.s32.totalorder %s21, %s24
    %p33 = scmp.eq.s32.totalorder %s16, 1
    %p34 = por %p32, %p33
    %p35 = scmp.ne.s32.totalorder %s24, %s25
    %p36 = scmp.eq.s32.totalorder %s16, 0
    %p37 = por %p35, %p36
    %p38 = scmp.ne.s32.totalorder %s24, %s25
    %p39 = scmp.eq.s32.totalorder %s17, 1
    %p40 = por %p38, %p39
    %p42 = scmp.ne.s32.totalorder %s25, %s41
    %p43 = scmp.eq.s32.totalorder %s17, 0
    %p44 = por %p42, %p43
    %s46 = sadd.s32 %s45, 1
    %p49 = scmp.eq.s32.totalorder %s11, 1
    %p50 = scmp.ne.s32.totalorder %s45, %s47
    %p51 = scmp.eq.s32.totalorder %s11, 0
    %p52 = por %p50, %p51
    %p53 = scmp.ne.s32.totalorder %s45, %s47
    %p54 = scmp.eq.s32.totalorder %s16, 1
    %p55 = por %p53, %p54
    %p56 = scmp.ne.s32.totalorder %s47, %s48
    %p57 = scmp.eq.s32.totalorder %s16, 0
    %p58 = por %p56, %p57
    %p59 = scmp.ne.s32.totalorder %s47, %s48
    %p60 = scmp.eq.s32.totalorder %s17, 1
    %p61 = por %p59, %p60
    %p63 = scmp.ne.s32.totalorder %s48, %s62
    %p64 = scmp.eq.s32.totalorder %s17, 0
    %p65 = por %p63, %p64
    %s67 = sadd.s32 %s66, 1
    %p70 = scmp.eq.s32.totalorder %s11, 1
    %p71 = scmp.ne.s32.totalorder %s66, %s68
    %p72 = scmp.eq.s32.totalorder %s11, 0
    %p73 = por %p71, %p72
    %p74 = scmp.ne.s32.totalorder %s66, %s68
    %p75 = scmp.eq.s32.totalorder %s16, 1
    %p76 = por %p74, %p75
    %p77 = scmp.ne.s32.totalorder %s68, %s69
    %p78 = scmp.eq.s32.totalorder %s16, 0
    %p79 = por %p77, %p78
    %p80 = scmp.ne.s32.totalorder %s68, %s69
    %p81 = scmp.eq.s32.totalorder %s17, 1
    %p82 = por %p80, %p81
    %p84 = scmp.ne.s32.totalorder %s69, %s83
    %p85 = scmp.eq.s32.totalorder %s17, 0
    %p86 = por %p84, %p85
    %s87 = ssub.s32 %s11, %s18
    %p88 = scmp.eq.s32.totalorder %s87, 0
    %s90 = sadd.s32 %s89, 1
    %s91 = scalar_select %p88, %s89, %s90
    %p94 = pneg %p88
    %p95 = scmp.eq.s32.totalorder %s11, 1
    %p96 = por %p94, %p95
    %p97 = scmp.ne.s32.totalorder %s89, %s92
    %p98 = scmp.eq.s32.totalorder %s11, 0
    %p99 = por %p97, %p98
    %p100 = scmp.ne.s32.totalorder %s89, %s92
    %p101 = scmp.eq.s32.totalorder %s16, 1
    %p102 = por %p100, %p101
    %p103 = scmp.ne.s32.totalorder %s92, %s93
    %p104 = scmp.eq.s32.totalorder %s16, 0
    %p105 = por %p103, %p104
    %p106 = scmp.ne.s32.totalorder %s92, %s93
    %p107 = scmp.eq.s32.totalorder %s17, 1
    %p108 = por %p106, %p107
    %p110 = scmp.ne.s32.totalorder %s93, %s109
    %p111 = scmp.eq.s32.totalorder %s17, 0
    %p112 = por %p110, %p111
    %s113 = ssub.s32 %s11, %s18
    %p114 = scmp.eq.s32.totalorder %s113, 0
    %s116 = sadd.s32 %s115, 1
    %s117 = scalar_select %p114, %s115, %s116
    %p120 = pneg %p114
    %p121 = scmp.eq.s32.totalorder %s11, 1
    %p122 = por %p120, %p121
    %p123 = scmp.ne.s32.totalorder %s115, %s118
    %p124 = scmp.eq.s32.totalorder %s11, 0
    %p125 = por %p123, %p124
    %p126 = scmp.ne.s32.totalorder %s115, %s118
    %p127 = scmp.eq.s32.totalorder %s16, 1
    %p128 = por %p126, %p127
    %p129 = scmp.ne.s32.totalorder %s118, %s119
    %p130 = scmp.eq.s32.totalorder %s16, 0
    %p131 = por %p129, %p130
    %p132 = scmp.ne.s32.totalorder %s118, %s119
    %p133 = scmp.eq.s32.totalorder %s17, 1
    %p134 = por %p132, %p133
    %p136 = scmp.ne.s32.totalorder %s119, %s135
    %p137 = scmp.eq.s32.totalorder %s17, 0
    %p138 = por %p136, %p137
    %p139 = scmp.le.s32.totalorder 1, %s11
    %p140 = scmp.lt.s32.totalorder %s11, 3
    %p141 = pnand %p139, %p140
    %p142 = pneg %p141
    // Predicated region
    $region9: #{down_block.3} parent=5 // pred_check
      _
    $region10: #{down_block.3} parent=5 // pred_check_branch
      %144 = sbr.rel (%p141) target = $region12
    $region11: #{down_block.3} parent=5 // pred_region
      %s145 = ssub.s32 %s11, 1
      // Predicated region
      $region13: #{down_block.3} parent=11 // pred_check
        %p146 = pneg %p58
      $region14: #{down_block.3} parent=11 // pred_check_branch
        %148 = sbr.rel (%p146) target = $region16
      $region15: #{down_block.3} parent=11 // pred_region
        _
      $region16: #{down_block.3} parent=11 // pred_fallthru
        _
      // Predicated region
      $region17: #{down_block.3} parent=11 // pred_check
        %p149 = pneg %p79
      $region18: #{down_block.3} parent=11 // pred_check_branch
        %151 = sbr.rel (%p149) target = $region20
      $region19: #{down_block.3} parent=11 // pred_region
        _
      $region20: #{down_block.3} parent=11 // pred_fallthru
        _
    $region12: #{down_block.3} parent=5 // pred_fallthru
      _
    %p152 = scmp.lt.s32.totalorder %s11, 2
    // Predicated region
    $region21: #{down_block.3} parent=5 // pred_check
      %p153 = pneg %p152
    $region22: #{down_block.3} parent=5 // pred_check_branch
      %155 = sbr.rel (%p153) target = $region24
    $region23: #{down_block.3} parent=5 // pred_region
      // Predicated region
      $region25: #{down_block.3} parent=23 // pred_check
        %p156 = pneg %p31
      $region26: #{down_block.3} parent=23 // pred_check_branch
        %158 = sbr.rel (%p156) target = $region28
      $region27: #{down_block.3} parent=23 // pred_region
        %p159 = scmp.lt.s32.totalorder %s11, 1
        %s160 = scalar_select %p159, %s11, 1
        %s161 = smul.addr %s160, 32
        %s162 = smul.addr %s161, 8
        %s163 = scalar_lea.vmem %s0, %s162
      $region28: #{down_block.3} parent=23 // pred_fallthru
        _
    $region24: #{down_block.3} parent=5 // pred_fallthru
      _
    %p164 = scmp.le.s32.totalorder 1, %s11
    %p165 = scmp.lt.s32.totalorder %s11, 3
    %p166 = pnand %p164, %p165
    %p167 = pneg %p166
    // Predicated region
    $region29: #{down_block.3} parent=5 // pred_check
      _
    $region30: #{down_block.3} parent=5 // pred_check_branch
      %169 = sbr.rel (%p166) target = $region32
    $region31: #{down_block.3} parent=5 // pred_region
      %s170 = ssub.s32 %s11, 1
      %p171 = scmp.lt.s32.totalorder %s16, 1
      %s172 = scalar_select %p171, %s16, 1
      %s173 = smul.addr %s172, 32
      %s174 = smul.addr %s173, 8
      %s175 = scalar_lea.vmem %s0, %s174
      %p176 = pneg %p37
      %p177 = pneg %p34
      %p178 = pneg %p58
      %p179 = pneg %p55
      %p180 = pneg %p79
      %p181 = pneg %p76
      %p182 = pneg %p105
      %p183 = pneg %p102
      %p184 = scmp.lt.s32.totalorder %s16, 1
      %s185 = scalar_select %p184, %s16, 1
      %s186 = smul.addr %s185, 8
      %s187 = smul.addr %s186, 8
      %s188 = scalar_lea.vmem %s3, %s187
      %p189 = pneg %p131
      %p190 = pneg %p128
      %p191 = scmp.lt.s32.totalorder %s16, 1
      %s192 = scalar_select %p191, %s16, 1
      %s193 = smul.addr %s192, 2
      %s194 = scalar_lea.vmem %s4, %s193
      %p195 = scmp.lt.s32.totalorder %s16, 1
      %s196 = scalar_select %p195, %s16, 1
      %s197 = smul.addr %s196, 32
      %s198 = smul.addr %s197, 8
      %s199 = scalar_lea.vmem %s0, %s198
      %p200 = scmp.lt.s32.totalorder %s16, 1
      %s201 = scalar_select %p200, %s16, 1
      %s202 = smul.addr %s201, 8
      %s203 = smul.addr %s202, 8
      %s204 = scalar_lea.vmem %s3, %s203
      %p205 = scmp.lt.s32.totalorder %s16, 1
      %s206 = scalar_select %p205, %s16, 1
      %s207 = smul.addr %s206, 2
      %s208 = scalar_lea.vmem %s4, %s207
      %v209 = vld [vmem:[%s199] ss:$2 sm:$0xff]
      %s210 = scalar_lea.vmem %s199, 32
      %v211 = vld [vmem:[%s210] ss:$2 sm:$0xff]
      %s212 = scalar_lea.vmem %s199, 64
      %v213 = vld [vmem:[%s212] ss:$2 sm:$0xff]
      %s214 = scalar_lea.vmem %s199, 96
      %v215 = vld [vmem:[%s214] ss:$2 sm:$0xff]
      %s216 = scalar_lea.vmem %s199, 128
      %v217 = vld [vmem:[%s216] ss:$2 sm:$0xff]
      %s218 = scalar_lea.vmem %s199, 160
      %v219 = vld [vmem:[%s218] ss:$2 sm:$0xff]
      %s220 = scalar_lea.vmem %s199, 192
      %v221 = vld [vmem:[%s220] ss:$2 sm:$0xff]
      %s222 = scalar_lea.vmem %s199, 224
      %v223 = vld [vmem:[%s222] ss:$2 sm:$0xff]
      %s224 = scalar_lea.vmem %s199, 1
      %v225 = vld [vmem:[%s224] ss:$2 sm:$0xff]
      %s226 = scalar_lea.vmem %s199, 33
      %v227 = vld [vmem:[%s226] ss:$2 sm:$0xff]
      %s228 = scalar_lea.vmem %s199, 65
      %v229 = vld [vmem:[%s228] ss:$2 sm:$0xff]
      %s230 = scalar_lea.vmem %s199, 97
      %v231 = vld [vmem:[%s230] ss:$2 sm:$0xff]
      %s232 = scalar_lea.vmem %s199, 129
      %v233 = vld [vmem:[%s232] ss:$2 sm:$0xff]
      %s234 = scalar_lea.vmem %s199, 161
      %v235 = vld [vmem:[%s234] ss:$2 sm:$0xff]
      %s236 = scalar_lea.vmem %s199, 193
      %v237 = vld [vmem:[%s236] ss:$2 sm:$0xff]
      %s238 = scalar_lea.vmem %s199, 225
      %v239 = vld [vmem:[%s238] ss:$2 sm:$0xff]
      %s240 = scalar_lea.vmem %s199, 16
      %v241 = vld [vmem:[%s240] ss:$2 sm:$0xff]
      %s242 = scalar_lea.vmem %s240, 32
      %v243 = vld [vmem:[%s242] ss:$2 sm:$0xff]
      %s244 = scalar_lea.vmem %s240, 64
      %v245 = vld [vmem:[%s244] ss:$2 sm:$0xff]
      %s246 = scalar_lea.vmem %s240, 96
      %v247 = vld [vmem:[%s246] ss:$2 sm:$0xff]
      %s248 = scalar_lea.vmem %s240, 128
      %v249 = vld [vmem:[%s248] ss:$2 sm:$0xff]
      %s250 = scalar_lea.vmem %s240, 160
      %v251 = vld [vmem:[%s250] ss:$2 sm:$0xff]
      %s252 = scalar_lea.vmem %s240, 192
      %v253 = vld [vmem:[%s252] ss:$2 sm:$0xff]
      %s254 = scalar_lea.vmem %s240, 224
      %v255 = vld [vmem:[%s254] ss:$2 sm:$0xff]
      %s256 = scalar_lea.vmem %s240, 1
      %v257 = vld [vmem:[%s256] ss:$2 sm:$0xff]
      %s258 = scalar_lea.vmem %s240, 33
      %v259 = vld [vmem:[%s258] ss:$2 sm:$0xff]
      %s260 = scalar_lea.vmem %s240, 65
      %v261 = vld [vmem:[%s260] ss:$2 sm:$0xff]
      %s262 = scalar_lea.vmem %s240, 97
      %v263 = vld [vmem:[%s262] ss:$2 sm:$0xff]
      %s264 = scalar_lea.vmem %s240, 129
      %v265 = vld [vmem:[%s264] ss:$2 sm:$0xff]
      %s266 = scalar_lea.vmem %s240, 161
      %v267 = vld [vmem:[%s266] ss:$2 sm:$0xff]
      %s268 = scalar_lea.vmem %s240, 193
      %v269 = vld [vmem:[%s268] ss:$2 sm:$0xff]
      %s270 = scalar_lea.vmem %s240, 225
      %v271 = vld [vmem:[%s270] ss:$2 sm:$0xff]
      %v272 = vmax.f32 %v209, %v225
      %v273 = vmax.f32 %v211, %v227
      %v274 = vmax.f32 %v213, %v229
      %v275 = vmax.f32 %v215, %v231
      %v276 = vmax.f32 %v217, %v233
      %v277 = vmax.f32 %v219, %v235
      %v278 = vmax.f32 %v221, %v237
      %v279 = vmax.f32 %v223, %v239
      %v280 = vmax.f32 %v241, %v257
      %v281 = vmax.f32 %v243, %v259
      %v282 = vmax.f32 %v245, %v261
      %v283 = vmax.f32 %v247, %v263
      %v284 = vmax.f32 %v249, %v265
      %v285 = vmax.f32 %v251, %v267
      %v286 = vmax.f32 %v253, %v269
      %v287 = vmax.f32 %v255, %v271
      %v288 = vmax.f32 %v272, %v280
      %v289 = vmax.f32 %v273, %v281
      %v290 = vmax.f32 %v274, %v282
      %v291 = vmax.f32 %v275, %v283
      %v292 = vmax.f32 %v276, %v284
      %v293 = vmax.f32 %v277, %v285
      %v294 = vmax.f32 %v278, %v286
      %v295 = vmax.f32 %v279, %v287
      %vm296 = vcmask 31744
      %297 = vst.msk [vmem:[#allocation2] sm:$0xff] %vm296, 0.0
      %vm298 = vcmask 25600
      %299 = vst.msk [vmem:[#allocation2 + $0x8] sm:$0x3] %vm298, 0.0
      %s300 = scalar_lea.vmem [#allocation2], 144
      %301 = vst.msk [vmem:[%s300] sm:$0xff] %vm296, 0.0
      %302 = vst.msk [vmem:[%s300 + $0x8] sm:$0x3] %vm298, 0.0
      %vm303 = vcmask 24576
      %304 = vst.msk [vmem:[#allocation2] sm:$0x1] %vm303, 0.0
      %305 = vst.msk [vmem:[#allocation2 + $0x10] sm:$0x1] %vm303, 0.0
      %306 = vst.msk [vmem:[#allocation2 + $0x20] sm:$0x1] %vm303, 0.0
      %307 = vst.msk [vmem:[#allocation2 + $0x30] sm:$0x1] %vm303, 0.0
      %308 = vst.msk [vmem:[#allocation2 + $0x40] sm:$0x1] %vm303, 0.0
      %309 = vst.msk [vmem:[#allocation2 + $0x50] sm:$0x1] %vm303, 0.0
      %310 = vst.msk [vmem:[#allocation2 + $0x60] sm:$0x1] %vm303, 0.0
      %311 = vst.msk [vmem:[#allocation2 + $0x70] sm:$0x1] %vm303, 0.0
      %312 = vst.msk [vmem:[#allocation2 + $0x80] sm:$0x1] %vm303, 0.0
      %313 = vst.msk [vmem:[#allocation2 + $0x90] sm:$0x1] %vm303, 0.0
      %314 = vst.msk [vmem:[#allocation2 + $0x9] sm:$0x1] %vm303, 0.0
      %315 = vst.msk [vmem:[#allocation2 + $0x19] sm:$0x1] %vm303, 0.0
      %316 = vst.msk [vmem:[#allocation2 + $0x29] sm:$0x1] %vm303, 0.0
      %317 = vst.msk [vmem:[#allocation2 + $0x39] sm:$0x1] %vm303, 0.0
      %318 = vst.msk [vmem:[#allocation2 + $0x49] sm:$0x1] %vm303, 0.0
      %319 = vst.msk [vmem:[#allocation2 + $0x59] sm:$0x1] %vm303, 0.0
      %320 = vst.msk [vmem:[#allocation2 + $0x69] sm:$0x1] %vm303, 0.0
      %321 = vst.msk [vmem:[#allocation2 + $0x79] sm:$0x1] %vm303, 0.0
      %322 = vst.msk [vmem:[#allocation2 + $0x89] sm:$0x1] %vm303, 0.0
      %323 = vst.msk [vmem:[#allocation2 + $0x99] sm:$0x1] %vm303, 0.0
      %s324 = scalar_lea.vmem [#allocation2], 16
      %325 = vst.msk [vmem:[%s324 + $0x1] sm:$0xff] %vm296, %v288
      %326 = vst.msk [vmem:[%s324 + $0x11] sm:$0xff] %vm296, %v289
      %327 = vst.msk [vmem:[%s324 + $0x21] sm:$0xff] %vm296, %v290
      %328 = vst.msk [vmem:[%s324 + $0x31] sm:$0xff] %vm296, %v291
      %329 = vst.msk [vmem:[%s324 + $0x41] sm:$0xff] %vm296, %v292
      %330 = vst.msk [vmem:[%s324 + $0x51] sm:$0xff] %vm296, %v293
      %331 = vst.msk [vmem:[%s324 + $0x61] sm:$0xff] %vm296, %v294
      %332 = vst.msk [vmem:[%s324 + $0x71] sm:$0xff] %vm296, %v295
      %v333 = vld [vmem:[#allocation2] sm:$0xff]
      %v334 = vld [vmem:[#allocation2 + $0x10] sm:$0xff]
      %v335 = vld [vmem:[#allocation2 + $0x20] sm:$0xff]
      %v336 = vld [vmem:[#allocation2 + $0x30] sm:$0xff]
      %v337 = vld [vmem:[#allocation2 + $0x40] sm:$0xff]
      %v338 = vld [vmem:[#allocation2 + $0x50] sm:$0xff]
      %v339 = vld [vmem:[#allocation2 + $0x60] sm:$0xff]
      %v340 = vld [vmem:[#allocation2 + $0x70] sm:$0xff]
      %v341 = vld [vmem:[%s1] sm:$0xf]
      %v342 = vld [vmem:[#allocation2 + $0x1] sm:$0xff]
      %v343 = vld [vmem:[#allocation2 + $0x11] sm:$0xff]
      %v344 = vld [vmem:[#allocation2 + $0x21] sm:$0xff]
      %v345 = vld [vmem:[#allocation2 + $0x31] sm:$0xff]
      %v346 = vld [vmem:[#allocation2 + $0x41] sm:$0xff]
      %v347 = vld [vmem:[#allocation2 + $0x51] sm:$0xff]
      %v348 = vld [vmem:[#allocation2 + $0x61] sm:$0xff]
      %v349 = vld [vmem:[#allocation2 + $0x71] sm:$0xff]
      %s350 = scalar_lea.vmem %s1, 4
      %v351 = vld [vmem:[%s350] sm:$0xf]
      %v353 = vsel %vm296, %v342, 0
      %v356 = vsel %vm296, %v343, 0
      %v359 = vsel %vm296, %v344, 0
      %v362 = vsel %vm296, %v345, 0
      %v365 = vsel %vm296, %v346, 0
      %v368 = vsel %vm296, %v347, 0
      %v371 = vsel %vm296, %v348, 0
      %v374 = vsel %vm296, %v349, 0
      %vm376 = vcmask 1043456
      %v378 = vsel %vm376, %v351, 0
      %380 = vmatprep.subr.mxu0 0.0
      %381 = vmatpush1.msra.mxu0 0.0
      %382 = vmatprep.subr.mxu0 0.0
      %383 = vmatpush1.msra.mxu0 0.0
      %384 = vmatprep.subr.mxu0 0.0
      %385 = vmatpush1.msra.mxu0 0.0
      %386 = vmatprep.subr.mxu0 0.0
      %387 = vmatpush1.msra.mxu0 0.0
      %388 = vmatprep.subr.mxu0 0.0
      %389 = vmatpush1.msra.mxu0 0.0
      %390 = vmatprep.subr.mxu0 0.0
      %391 = vmatpush1.msra.mxu0 0.0
      %392 = vmatprep.subr.mxu0 0.0
      %393 = vmatpush1.msra.mxu0 0.0
      %394 = vmatprep.subr.mxu0 0.0
      %395 = vmatpush1.msra.mxu0 0.0
      %396 = vmatprep.subr.mxu0 0.0
      %397 = vmatpush1.msra.mxu0 0.0
      %398 = vmatprep.subr.mxu0 0.0
      %399 = vmatpush1.msra.mxu0 0.0
      %400 = vmatprep.subr.mxu0 0.0
      %401 = vmatpush1.msra.mxu0 0.0
      %402 = vmatprep.subr.mxu0 0.0
      %403 = vmatpush1.msra.mxu0 0.0
      %404 = vmatprep.subr.mxu0 0.0
      %405 = vmatpush1.msra.mxu0 0.0
      %406 = vmatprep.subr.mxu0 0.0
      %407 = vmatpush1.msra.mxu0 0.0
      %408 = vmatprep.subr.mxu0 0.0
      %409 = vmatpush1.msra.mxu0 0.0
      %410 = vmatprep.subr.mxu0 0.0
      %411 = vmatpush1.msra.mxu0 %v378
      %412 = vmatprep.subr.mxu0 0.0
      %413 = vmatpush2.msra.mxu0 0.0
      %414 = vmatprep.subr.mxu0 0.0
      %415 = vmatpush2.msra.mxu0 0.0
      %416 = vmatprep.subr.mxu0 0.0
      %417 = vmatpush2.msra.mxu0 0.0
      %418 = vmatprep.subr.mxu0 0.0
      %419 = vmatpush2.msra.mxu0 0.0
      %420 = vmatprep.subr.mxu0 0.0
      %421 = vmatpush2.msra.mxu0 0.0
      %422 = vmatprep.subr.mxu0 0.0
      %423 = vmatpush2.msra.mxu0 0.0
      %424 = vmatprep.subr.mxu0 0.0
      %425 = vmatpush2.msra.mxu0 0.0
      %426 = vmatprep.subr.mxu0 0.0
      %427 = vmatpush2.msra.mxu0 0.0
      %428 = vmatprep.subr.mxu0 0.0
      %429 = vmatpush2.msra.mxu0 0.0
      %430 = vmatprep.subr.mxu0 0.0
      %431 = vmatpush2.msra.mxu0 0.0
      %432 = vmatprep.subr.mxu0 0.0
      %433 = vmatpush2.msra.mxu0 0.0
      %434 = vmatprep.subr.mxu0 0.0
      %435 = vmatpush2.msra.mxu0 0.0
      %436 = vmatprep.subr.mxu0 0.0
      %437 = vmatpush2.msra.mxu0 0.0
      %438 = vmatprep.subr.mxu0 0.0
      %439 = vmatpush2.msra.mxu0 0.0
      %440 = vmatprep.subr.mxu0 0.0
      %441 = vmatpush2.msra.mxu0 0.0
      %442 = vmatprep.subr.mxu0 0.0
      %443 = vmatpush2.msra.mxu0 0.0
      %444 = vmatprep.mubr.f32.mxu0 0.0
      %445 = vmatmul.mubr.f32.gmra.mxu0 %v353
      %v446 = vpop.f32.mrf.mxu0
      %v447 = vadd.f32 0.0, %v446
      %v448 = vpop.f32.mrf.mxu0
      %449 = vmatprep.mubr.f32.mxu0 0.0
      %450 = vmatmul.mubr.f32.gmra.mxu0 %v356
      %v451 = vpop.f32.mrf.mxu0
      %v452 = vadd.f32 0.0, %v451
      %v453 = vpop.f32.mrf.mxu0
      %454 = vmatprep.mubr.f32.mxu0 0.0
      %455 = vmatmul.mubr.f32.gmra.mxu0 %v359
      %v456 = vpop.f32.mrf.mxu0
      %v457 = vadd.f32 0.0, %v456
      %v458 = vpop.f32.mrf.mxu0
      %459 = vmatprep.mubr.f32.mxu0 0.0
      %460 = vmatmul.mubr.f32.gmra.mxu0 %v362
      %v461 = vpop.f32.mrf.mxu0
      %v462 = vadd.f32 0.0, %v461
      %v463 = vpop.f32.mrf.mxu0
      %464 = vmatprep.mubr.f32.mxu0 0.0
      %465 = vmatmul.mubr.f32.gmra.mxu0 %v365
      %v466 = vpop.f32.mrf.mxu0
      %v467 = vadd.f32 0.0, %v466
      %v468 = vpop.f32.mrf.mxu0
      %469 = vmatprep.mubr.f32.mxu0 0.0
      %470 = vmatmul.mubr.f32.gmra.mxu0 %v368
      %v471 = vpop.f32.mrf.mxu0
      %v472 = vadd.f32 0.0, %v471
      %v473 = vpop.f32.mrf.mxu0
      %474 = vmatprep.mubr.f32.mxu0 0.0
      %475 = vmatmul.mubr.f32.gmra.mxu0 %v371
      %v476 = vpop.f32.mrf.mxu0
      %v477 = vadd.f32 0.0, %v476
      %v478 = vpop.f32.mrf.mxu0
      %479 = vmatprep.mubr.f32.mxu0 0.0
      %480 = vmatmul.mubr.f32.gmra.mxu0 %v374
      %v481 = vpop.f32.mrf.mxu0
      %v482 = vadd.f32 0.0, %v481
      %v483 = vpop.f32.mrf.mxu0
      %484 = vdwg.mxu0
      %v486 = vsel %vm296, %v333, 0
      %v489 = vsel %vm296, %v334, 0
      %v492 = vsel %vm296, %v335, 0
      %v495 = vsel %vm296, %v336, 0
      %v498 = vsel %vm296, %v337, 0
      %v501 = vsel %vm296, %v338, 0
      %v504 = vsel %vm296, %v339, 0
      %v507 = vsel %vm296, %v340, 0
      %v510 = vsel %vm376, %v341, 0
      %512 = vmatprep.subr.mxu0 0.0
      %513 = vmatpush1.msra.mxu0 0.0
      %514 = vmatprep.subr.mxu0 0.0
      %515 = vmatpush1.msra.mxu0 0.0
      %516 = vmatprep.subr.mxu0 0.0
      %517 = vmatpush1.msra.mxu0 0.0
      %518 = vmatprep.subr.mxu0 0.0
      %519 = vmatpush1.msra.mxu0 0.0
      %520 = vmatprep.subr.mxu0 0.0
      %521 = vmatpush1.msra.mxu0 0.0
      %522 = vmatprep.subr.mxu0 0.0
      %523 = vmatpush1.msra.mxu0 0.0
      %524 = vmatprep.subr.mxu0 0.0
      %525 = vmatpush1.msra.mxu0 0.0
      %526 = vmatprep.subr.mxu0 0.0
      %527 = vmatpush1.msra.mxu0 0.0
      %528 = vmatprep.subr.mxu0 0.0
      %529 = vmatpush1.msra.mxu0 0.0
      %530 = vmatprep.subr.mxu0 0.0
      %531 = vmatpush1.msra.mxu0 0.0
      %532 = vmatprep.subr.mxu0 0.0
      %533 = vmatpush1.msra.mxu0 0.0
      %534 = vmatprep.subr.mxu0 0.0
      %535 = vmatpush1.msra.mxu0 0.0
      %536 = vmatprep.subr.mxu0 0.0
      %537 = vmatpush1.msra.mxu0 0.0
      %538 = vmatprep.subr.mxu0 0.0
      %539 = vmatpush1.msra.mxu0 0.0
      %540 = vmatprep.subr.mxu0 0.0
      %541 = vmatpush1.msra.mxu0 0.0
      %542 = vmatprep.subr.mxu0 0.0
      %543 = vmatpush1.msra.mxu0 %v510
      %544 = vmatprep.subr.mxu0 0.0
      %545 = vmatpush2.msra.mxu0 0.0
      %546 = vmatprep.subr.mxu0 0.0
      %547 = vmatpush2.msra.mxu0 0.0
      %548 = vmatprep.subr.mxu0 0.0
      %549 = vmatpush2.msra.mxu0 0.0
      %550 = vmatprep.subr.mxu0 0.0
      %551 = vmatpush2.msra.mxu0 0.0
      %552 = vmatprep.subr.mxu0 0.0
      %553 = vmatpush2.msra.mxu0 0.0
      %554 = vmatprep.subr.mxu0 0.0
      %555 = vmatpush2.msra.mxu0 0.0
      %556 = vmatprep.subr.mxu0 0.0
      %557 = vmatpush2.msra.mxu0 0.0
      %558 = vmatprep.subr.mxu0 0.0
      %559 = vmatpush2.msra.mxu0 0.0
      %560 = vmatprep.subr.mxu0 0.0
      %561 = vmatpush2.msra.mxu0 0.0
      %562 = vmatprep.subr.mxu0 0.0
      %563 = vmatpush2.msra.mxu0 0.0
      %564 = vmatprep.subr.mxu0 0.0
      %565 = vmatpush2.msra.mxu0 0.0
      %566 = vmatprep.subr.mxu0 0.0
      %567 = vmatpush2.msra.mxu0 0.0
      %568 = vmatprep.subr.mxu0 0.0
      %569 = vmatpush2.msra.mxu0 0.0
      %570 = vmatprep.subr.mxu0 0.0
      %571 = vmatpush2.msra.mxu0 0.0
      %572 = vmatprep.subr.mxu0 0.0
      %573 = vmatpush2.msra.mxu0 0.0
      %574 = vmatprep.subr.mxu0 0.0
      %575 = vmatpush2.msra.mxu0 0.0
      %576 = vmatprep.mubr.f32.mxu0 0.0
      %577 = vmatmul.mubr.f32.gmra.mxu0 %v486
      %v578 = vpop.f32.mrf.mxu0
      %v579 = vadd.f32 %v447, %v578
      %v580 = vpop.f32.mrf.mxu0
      %581 = vmatprep.mubr.f32.mxu0 0.0
      %582 = vmatmul.mubr.f32.gmra.mxu0 %v489
      %v583 = vpop.f32.mrf.mxu0
      %v584 = vadd.f32 %v452, %v583
      %v585 = vpop.f32.mrf.mxu0
      %586 = vmatprep.mubr.f32.mxu0 0.0
      %587 = vmatmul.mubr.f32.gmra.mxu0 %v492
      %v588 = vpop.f32.mrf.mxu0
      %v589 = vadd.f32 %v457, %v588
      %v590 = vpop.f32.mrf.mxu0
      %591 = vmatprep.mubr.f32.mxu0 0.0
      %592 = vmatmul.mubr.f32.gmra.mxu0 %v495
      %v593 = vpop.f32.mrf.mxu0
      %v594 = vadd.f32 %v462, %v593
      %v595 = vpop.f32.mrf.mxu0
      %596 = vmatprep.mubr.f32.mxu0 0.0
      %597 = vmatmul.mubr.f32.gmra.mxu0 %v498
      %v598 = vpop.f32.mrf.mxu0
      %v599 = vadd.f32 %v467, %v598
      %v600 = vpop.f32.mrf.mxu0
      %601 = vmatprep.mubr.f32.mxu0 0.0
      %602 = vmatmul.mubr.f32.gmra.mxu0 %v501
      %v603 = vpop.f32.mrf.mxu0
      %v604 = vadd.f32 %v472, %v603
      %v605 = vpop.f32.mrf.mxu0
      %606 = vmatprep.mubr.f32.mxu0 0.0
      %607 = vmatmul.mubr.f32.gmra.mxu0 %v504
      %v608 = vpop.f32.mrf.mxu0
      %v609 = vadd.f32 %v477, %v608
      %v610 = vpop.f32.mrf.mxu0
      %611 = vmatprep.mubr.f32.mxu0 0.0
      %612 = vmatmul.mubr.f32.gmra.mxu0 %v507
      %v613 = vpop.f32.mrf.mxu0
      %v614 = vadd.f32 %v482, %v613
      %v615 = vpop.f32.mrf.mxu0
      %616 = vdwg.mxu0
      %v617 = vld [vmem:[#allocation2 + $0x2] sm:$0xff]
      %v618 = vld [vmem:[#allocation2 + $0x12] sm:$0xff]
      %v619 = vld [vmem:[#allocation2 + $0x22] sm:$0xff]
      %v620 = vld [vmem:[#allocation2 + $0x32] sm:$0xff]
      %v621 = vld [vmem:[#allocation2 + $0x42] sm:$0xff]
      %v622 = vld [vmem:[#allocation2 + $0x52] sm:$0xff]
      %v623 = vld [vmem:[#allocation2 + $0x62] sm:$0xff]
      %v624 = vld [vmem:[#allocation2 + $0x72] sm:$0xff]
      %s625 = scalar_lea.vmem %s1, 8
      %v626 = vld [vmem:[%s625] sm:$0xf]
      %v628 = vsel %vm296, %v617, 0
      %v631 = vsel %vm296, %v618, 0
      %v634 = vsel %vm296, %v619, 0
      %v637 = vsel %vm296, %v620, 0
      %v640 = vsel %vm296, %v621, 0
      %v643 = vsel %vm296, %v622, 0
      %v646 = vsel %vm296, %v623, 0
      %v649 = vsel %vm296, %v624, 0
      %v652 = vsel %vm376, %v626, 0
      %654 = vmatprep.subr.mxu0 0.0
      %655 = vmatpush1.msra.mxu0 0.0
      %656 = vmatprep.subr.mxu0 0.0
      %657 = vmatpush1.msra.mxu0 0.0
      %658 = vmatprep.subr.mxu0 0.0
      %659 = vmatpush1.msra.mxu0 0.0
      %660 = vmatprep.subr.mxu0 0.0
      %661 = vmatpush1.msra.mxu0 0.0
      %662 = vmatprep.subr.mxu0 0.0
      %663 = vmatpush1.msra.mxu0 0.0
      %664 = vmatprep.subr.mxu0 0.0
      %665 = vmatpush1.msra.mxu0 0.0
      %666 = vmatprep.subr.mxu0 0.0
      %667 = vmatpush1.msra.mxu0 0.0
      %668 = vmatprep.subr.mxu0 0.0
      %669 = vmatpush1.msra.mxu0 0.0
      %670 = vmatprep.subr.mxu0 0.0
      %671 = vmatpush1.msra.mxu0 0.0
      %672 = vmatprep.subr.mxu0 0.0
      %673 = vmatpush1.msra.mxu0 0.0
      %674 = vmatprep.subr.mxu0 0.0
      %675 = vmatpush1.msra.mxu0 0.0
      %676 = vmatprep.subr.mxu0 0.0
      %677 = vmatpush1.msra.mxu0 0.0
      %678 = vmatprep.subr.mxu0 0.0
      %679 = vmatpush1.msra.mxu0 0.0
      %680 = vmatprep.subr.mxu0 0.0
      %681 = vmatpush1.msra.mxu0 0.0
      %682 = vmatprep.subr.mxu0 0.0
      %683 = vmatpush1.msra.mxu0 0.0
      %684 = vmatprep.subr.mxu0 0.0
      %685 = vmatpush1.msra.mxu0 %v652
      %686 = vmatprep.subr.mxu0 0.0
      %687 = vmatpush2.msra.mxu0 0.0
      %688 = vmatprep.subr.mxu0 0.0
      %689 = vmatpush2.msra.mxu0 0.0
      %690 = vmatprep.subr.mxu0 0.0
      %691 = vmatpush2.msra.mxu0 0.0
      %692 = vmatprep.subr.mxu0 0.0
      %693 = vmatpush2.msra.mxu0 0.0
      %694 = vmatprep.subr.mxu0 0.0
      %695 = vmatpush2.msra.mxu0 0.0
      %696 = vmatprep.subr.mxu0 0.0
      %697 = vmatpush2.msra.mxu0 0.0
      %698 = vmatprep.subr.mxu0 0.0
      %699 = vmatpush2.msra.mxu0 0.0
      %700 = vmatprep.subr.mxu0 0.0
      %701 = vmatpush2.msra.mxu0 0.0
      %702 = vmatprep.subr.mxu0 0.0
      %703 = vmatpush2.msra.mxu0 0.0
      %704 = vmatprep.subr.mxu0 0.0
      %705 = vmatpush2.msra.mxu0 0.0
      %706 = vmatprep.subr.mxu0 0.0
      %707 = vmatpush2.msra.mxu0 0.0
      %708 = vmatprep.subr.mxu0 0.0
      %709 = vmatpush2.msra.mxu0 0.0
      %710 = vmatprep.subr.mxu0 0.0
      %711 = vmatpush2.msra.mxu0 0.0
      %712 = vmatprep.subr.mxu0 0.0
      %713 = vmatpush2.msra.mxu0 0.0
      %714 = vmatprep.subr.mxu0 0.0
      %715 = vmatpush2.msra.mxu0 0.0
      %716 = vmatprep.subr.mxu0 0.0
      %717 = vmatpush2.msra.mxu0 0.0
      %718 = vmatprep.mubr.f32.mxu0 0.0
      %719 = vmatmul.mubr.f32.gmra.mxu0 %v628
      %v720 = vpop.f32.mrf.mxu0
      %v721 = vadd.f32 0.0, %v720
      %v722 = vpop.f32.mrf.mxu0
      %723 = vmatprep.mubr.f32.mxu0 0.0
      %724 = vmatmul.mubr.f32.gmra.mxu0 %v631
      %v725 = vpop.f32.mrf.mxu0
      %v726 = vadd.f32 0.0, %v725
      %v727 = vpop.f32.mrf.mxu0
      %728 = vmatprep.mubr.f32.mxu0 0.0
      %729 = vmatmul.mubr.f32.gmra.mxu0 %v634
      %v730 = vpop.f32.mrf.mxu0
      %v731 = vadd.f32 0.0, %v730
      %v732 = vpop.f32.mrf.mxu0
      %733 = vmatprep.mubr.f32.mxu0 0.0
      %734 = vmatmul.mubr.f32.gmra.mxu0 %v637
      %v735 = vpop.f32.mrf.mxu0
      %v736 = vadd.f32 0.0, %v735
      %v737 = vpop.f32.mrf.mxu0
      %738 = vmatprep.mubr.f32.mxu0 0.0
      %739 = vmatmul.mubr.f32.gmra.mxu0 %v640
      %v740 = vpop.f32.mrf.mxu0
      %v741 = vadd.f32 0.0, %v740
      %v742 = vpop.f32.mrf.mxu0
      %743 = vmatprep.mubr.f32.mxu0 0.0
      %744 = vmatmul.mubr.f32.gmra.mxu0 %v643
      %v745 = vpop.f32.mrf.mxu0
      %v746 = vadd.f32 0.0, %v745
      %v747 = vpop.f32.mrf.mxu0
      %748 = vmatprep.mubr.f32.mxu0 0.0
      %749 = vmatmul.mubr.f32.gmra.mxu0 %v646
      %v750 = vpop.f32.mrf.mxu0
      %v751 = vadd.f32 0.0, %v750
      %v752 = vpop.f32.mrf.mxu0
      %753 = vmatprep.mubr.f32.mxu0 0.0
      %754 = vmatmul.mubr.f32.gmra.mxu0 %v649
      %v755 = vpop.f32.mrf.mxu0
      %v756 = vadd.f32 0.0, %v755
      %v757 = vpop.f32.mrf.mxu0
      %758 = vdwg.mxu0
      %v759 = vadd.f32 %v579, %v721
      %v760 = vadd.f32 %v584, %v726
      %v761 = vadd.f32 %v589, %v731
      %v762 = vadd.f32 %v594, %v736
      %v763 = vadd.f32 %v599, %v741
      %v764 = vadd.f32 %v604, %v746
      %v765 = vadd.f32 %v609, %v751
      %v766 = vadd.f32 %v614, %v756
      %v767 = vld [vmem:[%s324] sm:$0xff]
      %v768 = vld [vmem:[%s324 + $0x10] sm:$0xff]
      %v769 = vld [vmem:[%s324 + $0x20] sm:$0xff]
      %v770 = vld [vmem:[%s324 + $0x30] sm:$0xff]
      %v771 = vld [vmem:[%s324 + $0x40] sm:$0xff]
      %v772 = vld [vmem:[%s324 + $0x50] sm:$0xff]
      %v773 = vld [vmem:[%s324 + $0x60] sm:$0xff]
      %v774 = vld [vmem:[%s324 + $0x70] sm:$0xff]
      %s775 = scalar_lea.vmem %s1, 12
      %v776 = vld [vmem:[%s775] sm:$0xf]
      %v778 = vsel %vm296, %v767, 0
      %v781 = vsel %vm296, %v768, 0
      %v784 = vsel %vm296, %v769, 0
      %v787 = vsel %vm296, %v770, 0
      %v790 = vsel %vm296, %v771, 0
      %v793 = vsel %vm296, %v772, 0
      %v796 = vsel %vm296, %v773, 0
      %v799 = vsel %vm296, %v774, 0
      %v802 = vsel %vm376, %v776, 0
      %804 = vmatprep.subr.mxu0 0.0
      %805 = vmatpush1.msra.mxu0 0.0
      %806 = vmatprep.subr.mxu0 0.0
      %807 = vmatpush1.msra.mxu0 0.0
      %808 = vmatprep.subr.mxu0 0.0
      %809 = vmatpush1.msra.mxu0 0.0
      %810 = vmatprep.subr.mxu0 0.0
      %811 = vmatpush1.msra.mxu0 0.0
      %812 = vmatprep.subr.mxu0 0.0
      %813 = vmatpush1.msra.mxu0 0.0
      %814 = vmatprep.subr.mxu0 0.0
      %815 = vmatpush1.msra.mxu0 0.0
      %816 = vmatprep.subr.mxu0 0.0
      %817 = vmatpush1.msra.mxu0 0.0
      %818 = vmatprep.subr.mxu0 0.0
      %819 = vmatpush1.msra.mxu0 0.0
      %820 = vmatprep.subr.mxu0 0.0
      %821 = vmatpush1.msra.mxu0 0.0
      %822 = vmatprep.subr.mxu0 0.0
      %823 = vmatpush1.msra.mxu0 0.0
      %824 = vmatprep.subr.mxu0 0.0
      %825 = vmatpush1.msra.mxu0 0.0
      %826 = vmatprep.subr.mxu0 0.0
      %827 = vmatpush1.msra.mxu0 0.0
      %828 = vmatprep.subr.mxu0 0.0
      %829 = vmatpush1.msra.mxu0 0.0
      %830 = vmatprep.subr.mxu0 0.0
      %831 = vmatpush1.msra.mxu0 0.0
      %832 = vmatprep.subr.mxu0 0.0
      %833 = vmatpush1.msra.mxu0 0.0
      %834 = vmatprep.subr.mxu0 0.0
      %835 = vmatpush1.msra.mxu0 %v802
      %836 = vmatprep.subr.mxu0 0.0
      %837 = vmatpush2.msra.mxu0 0.0
      %838 = vmatprep.subr.mxu0 0.0
      %839 = vmatpush2.msra.mxu0 0.0
      %840 = vmatprep.subr.mxu0 0.0
      %841 = vmatpush2.msra.mxu0 0.0
      %842 = vmatprep.subr.mxu0 0.0
      %843 = vmatpush2.msra.mxu0 0.0
      %844 = vmatprep.subr.mxu0 0.0
      %845 = vmatpush2.msra.mxu0 0.0
      %846 = vmatprep.subr.mxu0 0.0
      %847 = vmatpush2.msra.mxu0 0.0
      %848 = vmatprep.subr.mxu0 0.0
      %849 = vmatpush2.msra.mxu0 0.0
      %850 = vmatprep.subr.mxu0 0.0
      %851 = vmatpush2.msra.mxu0 0.0
      %852 = vmatprep.subr.mxu0 0.0
      %853 = vmatpush2.msra.mxu0 0.0
      %854 = vmatprep.subr.mxu0 0.0
      %855 = vmatpush2.msra.mxu0 0.0
      %856 = vmatprep.subr.mxu0 0.0
      %857 = vmatpush2.msra.mxu0 0.0
      %858 = vmatprep.subr.mxu0 0.0
      %859 = vmatpush2.msra.mxu0 0.0
      %860 = vmatprep.subr.mxu0 0.0
      %861 = vmatpush2.msra.mxu0 0.0
      %862 = vmatprep.subr.mxu0 0.0
      %863 = vmatpush2.msra.mxu0 0.0
      %864 = vmatprep.subr.mxu0 0.0
      %865 = vmatpush2.msra.mxu0 0.0
      %866 = vmatprep.subr.mxu0 0.0
      %867 = vmatpush2.msra.mxu0 0.0
      %868 = vmatprep.mubr.f32.mxu0 0.0
      %869 = vmatmul.mubr.f32.gmra.mxu0 %v778
      %v870 = vpop.f32.mrf.mxu0
      %v871 = vadd.f32 0.0, %v870
      %v872 = vpop.f32.mrf.mxu0
      %873 = vmatprep.mubr.f32.mxu0 0.0
      %874 = vmatmul.mubr.f32.gmra.mxu0 %v781
      %v875 = vpop.f32.mrf.mxu0
      %v876 = vadd.f32 0.0, %v875
      %v877 = vpop.f32.mrf.mxu0
      %878 = vmatprep.mubr.f32.mxu0 0.0
      %879 = vmatmul.mubr.f32.gmra.mxu0 %v784
      %v880 = vpop.f32.mrf.mxu0
      %v881 = vadd.f32 0.0, %v880
      %v882 = vpop.f32.mrf.mxu0
      %883 = vmatprep.mubr.f32.mxu0 0.0
      %884 = vmatmul.mubr.f32.gmra.mxu0 %v787
      %v885 = vpop.f32.mrf.mxu0
      %v886 = vadd.f32 0.0, %v885
      %v887 = vpop.f32.mrf.mxu0
      %888 = vmatprep.mubr.f32.mxu0 0.0
      %889 = vmatmul.mubr.f32.gmra.mxu0 %v790
      %v890 = vpop.f32.mrf.mxu0
      %v891 = vadd.f32 0.0, %v890
      %v892 = vpop.f32.mrf.mxu0
      %893 = vmatprep.mubr.f32.mxu0 0.0
      %894 = vmatmul.mubr.f32.gmra.mxu0 %v793
      %v895 = vpop.f32.mrf.mxu0
      %v896 = vadd.f32 0.0, %v895
      %v897 = vpop.f32.mrf.mxu0
      %898 = vmatprep.mubr.f32.mxu0 0.0
      %899 = vmatmul.mubr.f32.gmra.mxu0 %v796
      %v900 = vpop.f32.mrf.mxu0
      %v901 = vadd.f32 0.0, %v900
      %v902 = vpop.f32.mrf.mxu0
      %903 = vmatprep.mubr.f32.mxu0 0.0
      %904 = vmatmul.mubr.f32.gmra.mxu0 %v799
      %v905 = vpop.f32.mrf.mxu0
      %v906 = vadd.f32 0.0, %v905
      %v907 = vpop.f32.mrf.mxu0
      %908 = vdwg.mxu0
      %v909 = vadd.f32 %v759, %v871
      %v910 = vadd.f32 %v760, %v876
      %v911 = vadd.f32 %v761, %v881
      %v912 = vadd.f32 %v762, %v886
      %v913 = vadd.f32 %v763, %v891
      %v914 = vadd.f32 %v764, %v896
      %v915 = vadd.f32 %v765, %v901
      %v916 = vadd.f32 %v766, %v906
      %v917 = vld [vmem:[%s324 + $0x1] sm:$0xff]
      %v918 = vld [vmem:[%s324 + $0x11] sm:$0xff]
      %v919 = vld [vmem:[%s324 + $0x21] sm:$0xff]
      %v920 = vld [vmem:[%s324 + $0x31] sm:$0xff]
      %v921 = vld [vmem:[%s324 + $0x41] sm:$0xff]
      %v922 = vld [vmem:[%s324 + $0x51] sm:$0xff]
      %v923 = vld [vmem:[%s324 + $0x61] sm:$0xff]
      %v924 = vld [vmem:[%s324 + $0x71] sm:$0xff]
      %s925 = scalar_lea.vmem %s1, 16
      %v926 = vld [vmem:[%s925] sm:$0xf]
      %v928 = vsel %vm296, %v917, 0
      %v931 = vsel %vm296, %v918, 0
      %v934 = vsel %vm296, %v919, 0
      %v937 = vsel %vm296, %v920, 0
      %v940 = vsel %vm296, %v921, 0
      %v943 = vsel %vm296, %v922, 0
      %v946 = vsel %vm296, %v923, 0
      %v949 = vsel %vm296, %v924, 0
      %v952 = vsel %vm376, %v926, 0
      %954 = vmatprep.subr.mxu0 0.0
      %955 = vmatpush1.msra.mxu0 0.0
      %956 = vmatprep.subr.mxu0 0.0
      %957 = vmatpush1.msra.mxu0 0.0
      %958 = vmatprep.subr.mxu0 0.0
      %959 = vmatpush1.msra.mxu0 0.0
      %960 = vmatprep.subr.mxu0 0.0
      %961 = vmatpush1.msra.mxu0 0.0
      %962 = vmatprep.subr.mxu0 0.0
      %963 = vmatpush1.msra.mxu0 0.0
      %964 = vmatprep.subr.mxu0 0.0
      %965 = vmatpush1.msra.mxu0 0.0
      %966 = vmatprep.subr.mxu0 0.0
      %967 = vmatpush1.msra.mxu0 0.0
      %968 = vmatprep.subr.mxu0 0.0
      %969 = vmatpush1.msra.mxu0 0.0
      %970 = vmatprep.subr.mxu0 0.0
      %971 = vmatpush1.msra.mxu0 0.0
      %972 = vmatprep.subr.mxu0 0.0
      %973 = vmatpush1.msra.mxu0 0.0
      %974 = vmatprep.subr.mxu0 0.0
      %975 = vmatpush1.msra.mxu0 0.0
      %976 = vmatprep.subr.mxu0 0.0
      %977 = vmatpush1.msra.mxu0 0.0
      %978 = vmatprep.subr.mxu0 0.0
      %979 = vmatpush1.msra.mxu0 0.0
      %980 = vmatprep.subr.mxu0 0.0
      %981 = vmatpush1.msra.mxu0 0.0
      %982 = vmatprep.subr.mxu0 0.0
      %983 = vmatpush1.msra.mxu0 0.0
      %984 = vmatprep.subr.mxu0 0.0
      %985 = vmatpush1.msra.mxu0 %v952
      %986 = vmatprep.subr.mxu0 0.0
      %987 = vmatpush2.msra.mxu0 0.0
      %988 = vmatprep.subr.mxu0 0.0
      %989 = vmatpush2.msra.mxu0 0.0
      %990 = vmatprep.subr.mxu0 0.0
      %991 = vmatpush2.msra.mxu0 0.0
      %992 = vmatprep.subr.mxu0 0.0
      %993 = vmatpush2.msra.mxu0 0.0
      %994 = vmatprep.subr.mxu0 0.0
      %995 = vmatpush2.msra.mxu0 0.0
      %996 = vmatprep.subr.mxu0 0.0
      %997 = vmatpush2.msra.mxu0 0.0
      %998 = vmatprep.subr.mxu0 0.0
      %999 = vmatpush2.msra.mxu0 0.0
      %1000 = vmatprep.subr.mxu0 0.0
      %1001 = vmatpush2.msra.mxu0 0.0
      %1002 = vmatprep.subr.mxu0 0.0
      %1003 = vmatpush2.msra.mxu0 0.0
      %1004 = vmatprep.subr.mxu0 0.0
      %1005 = vmatpush2.msra.mxu0 0.0
      %1006 = vmatprep.subr.mxu0 0.0
      %1007 = vmatpush2.msra.mxu0 0.0
      %1008 = vmatprep.subr.mxu0 0.0
      %1009 = vmatpush2.msra.mxu0 0.0
      %1010 = vmatprep.subr.mxu0 0.0
      %1011 = vmatpush2.msra.mxu0 0.0
      %1012 = vmatprep.subr.mxu0 0.0
      %1013 = vmatpush2.msra.mxu0 0.0
      %1014 = vmatprep.subr.mxu0 0.0
      %1015 = vmatpush2.msra.mxu0 0.0
      %1016 = vmatprep.subr.mxu0 0.0
      %1017 = vmatpush2.msra.mxu0 0.0
      %1018 = vmatprep.mubr.f32.mxu0 0.0
      %1019 = vmatmul.mubr.f32.gmra.mxu0 %v928
      %v1020 = vpop.f32.mrf.mxu0
      %v1021 = vadd.f32 0.0, %v1020
      %v1022 = vpop.f32.mrf.mxu0
      %1023 = vmatprep.mubr.f32.mxu0 0.0
      %1024 = vmatmul.mubr.f32.gmra.mxu0 %v931
      %v1025 = vpop.f32.mrf.mxu0
      %v1026 = vadd.f32 0.0, %v1025
      %v1027 = vpop.f32.mrf.mxu0
      %1028 = vmatprep.mubr.f32.mxu0 0.0
      %1029 = vmatmul.mubr.f32.gmra.mxu0 %v934
      %v1030 = vpop.f32.mrf.mxu0
      %v1031 = vadd.f32 0.0, %v1030
      %v1032 = vpop.f32.mrf.mxu0
      %1033 = vmatprep.mubr.f32.mxu0 0.0
      %1034 = vmatmul.mubr.f32.gmra.mxu0 %v937
      %v1035 = vpop.f32.mrf.mxu0
      %v1036 = vadd.f32 0.0, %v1035
      %v1037 = vpop.f32.mrf.mxu0
      %1038 = vmatprep.mubr.f32.mxu0 0.0
      %1039 = vmatmul.mubr.f32.gmra.mxu0 %v940
      %v1040 = vpop.f32.mrf.mxu0
      %v1041 = vadd.f32 0.0, %v1040
      %v1042 = vpop.f32.mrf.mxu0
      %1043 = vmatprep.mubr.f32.mxu0 0.0
      %1044 = vmatmul.mubr.f32.gmra.mxu0 %v943
      %v1045 = vpop.f32.mrf.mxu0
      %v1046 = vadd.f32 0.0, %v1045
      %v1047 = vpop.f32.mrf.mxu0
      %1048 = vmatprep.mubr.f32.mxu0 0.0
      %1049 = vmatmul.mubr.f32.gmra.mxu0 %v946
      %v1050 = vpop.f32.mrf.mxu0
      %v1051 = vadd.f32 0.0, %v1050
      %v1052 = vpop.f32.mrf.mxu0
      %1053 = vmatprep.mubr.f32.mxu0 0.0
      %1054 = vmatmul.mubr.f32.gmra.mxu0 %v949
      %v1055 = vpop.f32.mrf.mxu0
      %v1056 = vadd.f32 0.0, %v1055
      %v1057 = vpop.f32.mrf.mxu0
      %1058 = vdwg.mxu0
      %v1059 = vadd.f32 %v909, %v1021
      %v1060 = vadd.f32 %v910, %v1026
      %v1061 = vadd.f32 %v911, %v1031
      %v1062 = vadd.f32 %v912, %v1036
      %v1063 = vadd.f32 %v913, %v1041
      %v1064 = vadd.f32 %v914, %v1046
      %v1065 = vadd.f32 %v915, %v1051
      %v1066 = vadd.f32 %v916, %v1056
      %v1067 = vld [vmem:[%s324 + $0x2] sm:$0xff]
      %v1068 = vld [vmem:[%s324 + $0x12] sm:$0xff]
      %v1069 = vld [vmem:[%s324 + $0x22] sm:$0xff]
      %v1070 = vld [vmem:[%s324 + $0x32] sm:$0xff]
      %v1071 = vld [vmem:[%s324 + $0x42] sm:$0xff]
      %v1072 = vld [vmem:[%s324 + $0x52] sm:$0xff]
      %v1073 = vld [vmem:[%s324 + $0x62] sm:$0xff]
      %v1074 = vld [vmem:[%s324 + $0x72] sm:$0xff]
      %s1075 = scalar_lea.vmem %s1, 20
      %v1076 = vld [vmem:[%s1075] sm:$0xf]
      %v1078 = vsel %vm296, %v1067, 0
      %v1081 = vsel %vm296, %v1068, 0
      %v1084 = vsel %vm296, %v1069, 0
      %v1087 = vsel %vm296, %v1070, 0
      %v1090 = vsel %vm296, %v1071, 0
      %v1093 = vsel %vm296, %v1072, 0
      %v1096 = vsel %vm296, %v1073, 0
      %v1099 = vsel %vm296, %v1074, 0
      %v1102 = vsel %vm376, %v1076, 0
      %1104 = vmatprep.subr.mxu0 0.0
      %1105 = vmatpush1.msra.mxu0 0.0
      %1106 = vmatprep.subr.mxu0 0.0
      %1107 = vmatpush1.msra.mxu0 0.0
      %1108 = vmatprep.subr.mxu0 0.0
      %1109 = vmatpush1.msra.mxu0 0.0
      %1110 = vmatprep.subr.mxu0 0.0
      %1111 = vmatpush1.msra.mxu0 0.0
      %1112 = vmatprep.subr.mxu0 0.0
      %1113 = vmatpush1.msra.mxu0 0.0
      %1114 = vmatprep.subr.mxu0 0.0
      %1115 = vmatpush1.msra.mxu0 0.0
      %1116 = vmatprep.subr.mxu0 0.0
      %1117 = vmatpush1.msra.mxu0 0.0
      %1118 = vmatprep.subr.mxu0 0.0
      %1119 = vmatpush1.msra.mxu0 0.0
      %1120 = vmatprep.subr.mxu0 0.0
      %1121 = vmatpush1.msra.mxu0 0.0
      %1122 = vmatprep.subr.mxu0 0.0
      %1123 = vmatpush1.msra.mxu0 0.0
      %1124 = vmatprep.subr.mxu0 0.0
      %1125 = vmatpush1.msra.mxu0 0.0
      %1126 = vmatprep.subr.mxu0 0.0
      %1127 = vmatpush1.msra.mxu0 0.0
      %1128 = vmatprep.subr.mxu0 0.0
      %1129 = vmatpush1.msra.mxu0 0.0
      %1130 = vmatprep.subr.mxu0 0.0
      %1131 = vmatpush1.msra.mxu0 0.0
      %1132 = vmatprep.subr.mxu0 0.0
      %1133 = vmatpush1.msra.mxu0 0.0
      %1134 = vmatprep.subr.mxu0 0.0
      %1135 = vmatpush1.msra.mxu0 %v1102
      %1136 = vmatprep.subr.mxu0 0.0
      %1137 = vmatpush2.msra.mxu0 0.0
      %1138 = vmatprep.subr.mxu0 0.0
      %1139 = vmatpush2.msra.mxu0 0.0
      %1140 = vmatprep.subr.mxu0 0.0
      %1141 = vmatpush2.msra.mxu0 0.0
      %1142 = vmatprep.subr.mxu0 0.0
      %1143 = vmatpush2.msra.mxu0 0.0
      %1144 = vmatprep.subr.mxu0 0.0
      %1145 = vmatpush2.msra.mxu0 0.0
      %1146 = vmatprep.subr.mxu0 0.0
      %1147 = vmatpush2.msra.mxu0 0.0
      %1148 = vmatprep.subr.mxu0 0.0
      %1149 = vmatpush2.msra.mxu0 0.0
      %1150 = vmatprep.subr.mxu0 0.0
      %1151 = vmatpush2.msra.mxu0 0.0
      %1152 = vmatprep.subr.mxu0 0.0
      %1153 = vmatpush2.msra.mxu0 0.0
      %1154 = vmatprep.subr.mxu0 0.0
      %1155 = vmatpush2.msra.mxu0 0.0
      %1156 = vmatprep.subr.mxu0 0.0
      %1157 = vmatpush2.msra.mxu0 0.0
      %1158 = vmatprep.subr.mxu0 0.0
      %1159 = vmatpush2.msra.mxu0 0.0
      %1160 = vmatprep.subr.mxu0 0.0
      %1161 = vmatpush2.msra.mxu0 0.0
      %1162 = vmatprep.subr.mxu0 0.0
      %1163 = vmatpush2.msra.mxu0 0.0
      %1164 = vmatprep.subr.mxu0 0.0
      %1165 = vmatpush2.msra.mxu0 0.0
      %1166 = vmatprep.subr.mxu0 0.0
      %1167 = vmatpush2.msra.mxu0 0.0
      %1168 = vmatprep.mubr.f32.mxu0 0.0
      %1169 = vmatmul.mubr.f32.gmra.mxu0 %v1078
      %v1170 = vpop.f32.mrf.mxu0
      %v1171 = vadd.f32 0.0, %v1170
      %v1172 = vpop.f32.mrf.mxu0
      %1173 = vmatprep.mubr.f32.mxu0 0.0
      %1174 = vmatmul.mubr.f32.gmra.mxu0 %v1081
      %v1175 = vpop.f32.mrf.mxu0
      %v1176 = vadd.f32 0.0, %v1175
      %v1177 = vpop.f32.mrf.mxu0
      %1178 = vmatprep.mubr.f32.mxu0 0.0
      %1179 = vmatmul.mubr.f32.gmra.mxu0 %v1084
      %v1180 = vpop.f32.mrf.mxu0
      %v1181 = vadd.f32 0.0, %v1180
      %v1182 = vpop.f32.mrf.mxu0
      %1183 = vmatprep.mubr.f32.mxu0 0.0
      %1184 = vmatmul.mubr.f32.gmra.mxu0 %v1087
      %v1185 = vpop.f32.mrf.mxu0
      %v1186 = vadd.f32 0.0, %v1185
      %v1187 = vpop.f32.mrf.mxu0
      %1188 = vmatprep.mubr.f32.mxu0 0.0
      %1189 = vmatmul.mubr.f32.gmra.mxu0 %v1090
      %v1190 = vpop.f32.mrf.mxu0
      %v1191 = vadd.f32 0.0, %v1190
      %v1192 = vpop.f32.mrf.mxu0
      %1193 = vmatprep.mubr.f32.mxu0 0.0
      %1194 = vmatmul.mubr.f32.gmra.mxu0 %v1093
      %v1195 = vpop.f32.mrf.mxu0
      %v1196 = vadd.f32 0.0, %v1195
      %v1197 = vpop.f32.mrf.mxu0
      %1198 = vmatprep.mubr.f32.mxu0 0.0
      %1199 = vmatmul.mubr.f32.gmra.mxu0 %v1096
      %v1200 = vpop.f32.mrf.mxu0
      %v1201 = vadd.f32 0.0, %v1200
      %v1202 = vpop.f32.mrf.mxu0
      %1203 = vmatprep.mubr.f32.mxu0 0.0
      %1204 = vmatmul.mubr.f32.gmra.mxu0 %v1099
      %v1205 = vpop.f32.mrf.mxu0
      %v1206 = vadd.f32 0.0, %v1205
      %v1207 = vpop.f32.mrf.mxu0
      %1208 = vdwg.mxu0
      %v1209 = vadd.f32 %v1059, %v1171
      %v1210 = vadd.f32 %v1060, %v1176
      %v1211 = vadd.f32 %v1061, %v1181
      %v1212 = vadd.f32 %v1062, %v1186
      %v1213 = vadd.f32 %v1063, %v1191
      %v1214 = vadd.f32 %v1064, %v1196
      %v1215 = vadd.f32 %v1065, %v1201
      %v1216 = vadd.f32 %v1066, %v1206
      %s1217 = scalar_lea.vmem [#allocation2], 32
      %v1218 = vld [vmem:[%s1217] sm:$0xff]
      %v1219 = vld [vmem:[%s1217 + $0x10] sm:$0xff]
      %v1220 = vld [vmem:[%s1217 + $0x20] sm:$0xff]
      %v1221 = vld [vmem:[%s1217 + $0x30] sm:$0xff]
      %v1222 = vld [vmem:[%s1217 + $0x40] sm:$0xff]
      %v1223 = vld [vmem:[%s1217 + $0x50] sm:$0xff]
      %v1224 = vld [vmem:[%s1217 + $0x60] sm:$0xff]
      %v1225 = vld [vmem:[%s1217 + $0x70] sm:$0xff]
      %s1226 = scalar_lea.vmem %s1, 24
      %v1227 = vld [vmem:[%s1226] sm:$0xf]
      %v1229 = vsel %vm296, %v1218, 0
      %v1232 = vsel %vm296, %v1219, 0
      %v1235 = vsel %vm296, %v1220, 0
      %v1238 = vsel %vm296, %v1221, 0
      %v1241 = vsel %vm296, %v1222, 0
      %v1244 = vsel %vm296, %v1223, 0
      %v1247 = vsel %vm296, %v1224, 0
      %v1250 = vsel %vm296, %v1225, 0
      %v1253 = vsel %vm376, %v1227, 0
      %1255 = vmatprep.subr.mxu0 0.0
      %1256 = vmatpush1.msra.mxu0 0.0
      %1257 = vmatprep.subr.mxu0 0.0
      %1258 = vmatpush1.msra.mxu0 0.0
      %1259 = vmatprep.subr.mxu0 0.0
      %1260 = vmatpush1.msra.mxu0 0.0
      %1261 = vmatprep.subr.mxu0 0.0
      %1262 = vmatpush1.msra.mxu0 0.0
      %1263 = vmatprep.subr.mxu0 0.0
      %1264 = vmatpush1.msra.mxu0 0.0
      %1265 = vmatprep.subr.mxu0 0.0
      %1266 = vmatpush1.msra.mxu0 0.0
      %1267 = vmatprep.subr.mxu0 0.0
      %1268 = vmatpush1.msra.mxu0 0.0
      %1269 = vmatprep.subr.mxu0 0.0
      %1270 = vmatpush1.msra.mxu0 0.0
      %1271 = vmatprep.subr.mxu0 0.0
      %1272 = vmatpush1.msra.mxu0 0.0
      %1273 = vmatprep.subr.mxu0 0.0
      %1274 = vmatpush1.msra.mxu0 0.0
      %1275 = vmatprep.subr.mxu0 0.0
      %1276 = vmatpush1.msra.mxu0 0.0
      %1277 = vmatprep.subr.mxu0 0.0
      %1278 = vmatpush1.msra.mxu0 0.0
      %1279 = vmatprep.subr.mxu0 0.0
      %1280 = vmatpush1.msra.mxu0 0.0
      %1281 = vmatprep.subr.mxu0 0.0
      %1282 = vmatpush1.msra.mxu0 0.0
      %1283 = vmatprep.subr.mxu0 0.0
      %1284 = vmatpush1.msra.mxu0 0.0
      %1285 = vmatprep.subr.mxu0 0.0
      %1286 = vmatpush1.msra.mxu0 %v1253
      %1287 = vmatprep.subr.mxu0 0.0
      %1288 = vmatpush2.msra.mxu0 0.0
      %1289 = vmatprep.subr.mxu0 0.0
      %1290 = vmatpush2.msra.mxu0 0.0
      %1291 = vmatprep.subr.mxu0 0.0
      %1292 = vmatpush2.msra.mxu0 0.0
      %1293 = vmatprep.subr.mxu0 0.0
      %1294 = vmatpush2.msra.mxu0 0.0
      %1295 = vmatprep.subr.mxu0 0.0
      %1296 = vmatpush2.msra.mxu0 0.0
      %1297 = vmatprep.subr.mxu0 0.0
      %1298 = vmatpush2.msra.mxu0 0.0
      %1299 = vmatprep.subr.mxu0 0.0
      %1300 = vmatpush2.msra.mxu0 0.0
      %1301 = vmatprep.subr.mxu0 0.0
      %1302 = vmatpush2.msra.mxu0 0.0
      %1303 = vmatprep.subr.mxu0 0.0
      %1304 = vmatpush2.msra.mxu0 0.0
      %1305 = vmatprep.subr.mxu0 0.0
      %1306 = vmatpush2.msra.mxu0 0.0
      %1307 = vmatprep.subr.mxu0 0.0
      %1308 = vmatpush2.msra.mxu0 0.0
      %1309 = vmatprep.subr.mxu0 0.0
      %1310 = vmatpush2.msra.mxu0 0.0
      %1311 = vmatprep.subr.mxu0 0.0
      %1312 = vmatpush2.msra.mxu0 0.0
      %1313 = vmatprep.subr.mxu0 0.0
      %1314 = vmatpush2.msra.mxu0 0.0
      %1315 = vmatprep.subr.mxu0 0.0
      %1316 = vmatpush2.msra.mxu0 0.0
      %1317 = vmatprep.subr.mxu0 0.0
      %1318 = vmatpush2.msra.mxu0 0.0
      %1319 = vmatprep.mubr.f32.mxu0 0.0
      %1320 = vmatmul.mubr.f32.gmra.mxu0 %v1229
      %v1321 = vpop.f32.mrf.mxu0
      %v1322 = vadd.f32 0.0, %v1321
      %v1323 = vpop.f32.mrf.mxu0
      %1324 = vmatprep.mubr.f32.mxu0 0.0
      %1325 = vmatmul.mubr.f32.gmra.mxu0 %v1232
      %v1326 = vpop.f32.mrf.mxu0
      %v1327 = vadd.f32 0.0, %v1326
      %v1328 = vpop.f32.mrf.mxu0
      %1329 = vmatprep.mubr.f32.mxu0 0.0
      %1330 = vmatmul.mubr.f32.gmra.mxu0 %v1235
      %v1331 = vpop.f32.mrf.mxu0
      %v1332 = vadd.f32 0.0, %v1331
      %v1333 = vpop.f32.mrf.mxu0
      %1334 = vmatprep.mubr.f32.mxu0 0.0
      %1335 = vmatmul.mubr.f32.gmra.mxu0 %v1238
      %v1336 = vpop.f32.mrf.mxu0
      %v1337 = vadd.f32 0.0, %v1336
      %v1338 = vpop.f32.mrf.mxu0
      %1339 = vmatprep.mubr.f32.mxu0 0.0
      %1340 = vmatmul.mubr.f32.gmra.mxu0 %v1241
      %v1341 = vpop.f32.mrf.mxu0
      %v1342 = vadd.f32 0.0, %v1341
      %v1343 = vpop.f32.mrf.mxu0
      %1344 = vmatprep.mubr.f32.mxu0 0.0
      %1345 = vmatmul.mubr.f32.gmra.mxu0 %v1244
      %v1346 = vpop.f32.mrf.mxu0
      %v1347 = vadd.f32 0.0, %v1346
      %v1348 = vpop.f32.mrf.mxu0
      %1349 = vmatprep.mubr.f32.mxu0 0.0
      %1350 = vmatmul.mubr.f32.gmra.mxu0 %v1247
      %v1351 = vpop.f32.mrf.mxu0
      %v1352 = vadd.f32 0.0, %v1351
      %v1353 = vpop.f32.mrf.mxu0
      %1354 = vmatprep.mubr.f32.mxu0 0.0
      %1355 = vmatmul.mubr.f32.gmra.mxu0 %v1250
      %v1356 = vpop.f32.mrf.mxu0
      %v1357 = vadd.f32 0.0, %v1356
      %v1358 = vpop.f32.mrf.mxu0
      %1359 = vdwg.mxu0
      %v1360 = vadd.f32 %v1209, %v1322
      %v1361 = vadd.f32 %v1210, %v1327
      %v1362 = vadd.f32 %v1211, %v1332
      %v1363 = vadd.f32 %v1212, %v1337
      %v1364 = vadd.f32 %v1213, %v1342
      %v1365 = vadd.f32 %v1214, %v1347
      %v1366 = vadd.f32 %v1215, %v1352
      %v1367 = vadd.f32 %v1216, %v1357
      %v1368 = vld [vmem:[%s1217 + $0x1] sm:$0xff]
      %v1369 = vld [vmem:[%s1217 + $0x11] sm:$0xff]
      %v1370 = vld [vmem:[%s1217 + $0x21] sm:$0xff]
      %v1371 = vld [vmem:[%s1217 + $0x31] sm:$0xff]
      %v1372 = vld [vmem:[%s1217 + $0x41] sm:$0xff]
      %v1373 = vld [vmem:[%s1217 + $0x51] sm:$0xff]
      %v1374 = vld [vmem:[%s1217 + $0x61] sm:$0xff]
      %v1375 = vld [vmem:[%s1217 + $0x71] sm:$0xff]
      %s1376 = scalar_lea.vmem %s1, 28
      %v1377 = vld [vmem:[%s1376] sm:$0xf]
      %v1379 = vsel %vm296, %v1368, 0
      %v1382 = vsel %vm296, %v1369, 0
      %v1385 = vsel %vm296, %v1370, 0
      %v1388 = vsel %vm296, %v1371, 0
      %v1391 = vsel %vm296, %v1372, 0
      %v1394 = vsel %vm296, %v1373, 0
      %v1397 = vsel %vm296, %v1374, 0
      %v1400 = vsel %vm296, %v1375, 0
      %v1403 = vsel %vm376, %v1377, 0
      %1405 = vmatprep.subr.mxu0 0.0
      %1406 = vmatpush1.msra.mxu0 0.0
      %1407 = vmatprep.subr.mxu0 0.0
      %1408 = vmatpush1.msra.mxu0 0.0
      %1409 = vmatprep.subr.mxu0 0.0
      %1410 = vmatpush1.msra.mxu0 0.0
      %1411 = vmatprep.subr.mxu0 0.0
      %1412 = vmatpush1.msra.mxu0 0.0
      %1413 = vmatprep.subr.mxu0 0.0
      %1414 = vmatpush1.msra.mxu0 0.0
      %1415 = vmatprep.subr.mxu0 0.0
      %1416 = vmatpush1.msra.mxu0 0.0
      %1417 = vmatprep.subr.mxu0 0.0
      %1418 = vmatpush1.msra.mxu0 0.0
      %1419 = vmatprep.subr.mxu0 0.0
      %1420 = vmatpush1.msra.mxu0 0.0
      %1421 = vmatprep.subr.mxu0 0.0
      %1422 = vmatpush1.msra.mxu0 0.0
      %1423 = vmatprep.subr.mxu0 0.0
      %1424 = vmatpush1.msra.mxu0 0.0
      %1425 = vmatprep.subr.mxu0 0.0
      %1426 = vmatpush1.msra.mxu0 0.0
      %1427 = vmatprep.subr.mxu0 0.0
      %1428 = vmatpush1.msra.mxu0 0.0
      %1429 = vmatprep.subr.mxu0 0.0
      %1430 = vmatpush1.msra.mxu0 0.0
      %1431 = vmatprep.subr.mxu0 0.0
      %1432 = vmatpush1.msra.mxu0 0.0
      %1433 = vmatprep.subr.mxu0 0.0
      %1434 = vmatpush1.msra.mxu0 0.0
      %1435 = vmatprep.subr.mxu0 0.0
      %1436 = vmatpush1.msra.mxu0 %v1403
      %1437 = vmatprep.subr.mxu0 0.0
      %1438 = vmatpush2.msra.mxu0 0.0
      %1439 = vmatprep.subr.mxu0 0.0
      %1440 = vmatpush2.msra.mxu0 0.0
      %1441 = vmatprep.subr.mxu0 0.0
      %1442 = vmatpush2.msra.mxu0 0.0
      %1443 = vmatprep.subr.mxu0 0.0
      %1444 = vmatpush2.msra.mxu0 0.0
      %1445 = vmatprep.subr.mxu0 0.0
      %1446 = vmatpush2.msra.mxu0 0.0
      %1447 = vmatprep.subr.mxu0 0.0
      %1448 = vmatpush2.msra.mxu0 0.0
      %1449 = vmatprep.subr.mxu0 0.0
      %1450 = vmatpush2.msra.mxu0 0.0
      %1451 = vmatprep.subr.mxu0 0.0
      %1452 = vmatpush2.msra.mxu0 0.0
      %1453 = vmatprep.subr.mxu0 0.0
      %1454 = vmatpush2.msra.mxu0 0.0
      %1455 = vmatprep.subr.mxu0 0.0
      %1456 = vmatpush2.msra.mxu0 0.0
      %1457 = vmatprep.subr.mxu0 0.0
      %1458 = vmatpush2.msra.mxu0 0.0
      %1459 = vmatprep.subr.mxu0 0.0
      %1460 = vmatpush2.msra.mxu0 0.0
      %1461 = vmatprep.subr.mxu0 0.0
      %1462 = vmatpush2.msra.mxu0 0.0
      %1463 = vmatprep.subr.mxu0 0.0
      %1464 = vmatpush2.msra.mxu0 0.0
      %1465 = vmatprep.subr.mxu0 0.0
      %1466 = vmatpush2.msra.mxu0 0.0
      %1467 = vmatprep.subr.mxu0 0.0
      %1468 = vmatpush2.msra.mxu0 0.0
      %1469 = vmatprep.mubr.f32.mxu0 0.0
      %1470 = vmatmul.mubr.f32.gmra.mxu0 %v1379
      %v1471 = vpop.f32.mrf.mxu0
      %v1472 = vadd.f32 0.0, %v1471
      %v1473 = vpop.f32.mrf.mxu0
      %1474 = vmatprep.mubr.f32.mxu0 0.0
      %1475 = vmatmul.mubr.f32.gmra.mxu0 %v1382
      %v1476 = vpop.f32.mrf.mxu0
      %v1477 = vadd.f32 0.0, %v1476
      %v1478 = vpop.f32.mrf.mxu0
      %1479 = vmatprep.mubr.f32.mxu0 0.0
      %1480 = vmatmul.mubr.f32.gmra.mxu0 %v1385
      %v1481 = vpop.f32.mrf.mxu0
      %v1482 = vadd.f32 0.0, %v1481
      %v1483 = vpop.f32.mrf.mxu0
      %1484 = vmatprep.mubr.f32.mxu0 0.0
      %1485 = vmatmul.mubr.f32.gmra.mxu0 %v1388
      %v1486 = vpop.f32.mrf.mxu0
      %v1487 = vadd.f32 0.0, %v1486
      %v1488 = vpop.f32.mrf.mxu0
      %1489 = vmatprep.mubr.f32.mxu0 0.0
      %1490 = vmatmul.mubr.f32.gmra.mxu0 %v1391
      %v1491 = vpop.f32.mrf.mxu0
      %v1492 = vadd.f32 0.0, %v1491
      %v1493 = vpop.f32.mrf.mxu0
      %1494 = vmatprep.mubr.f32.mxu0 0.0
      %1495 = vmatmul.mubr.f32.gmra.mxu0 %v1394
      %v1496 = vpop.f32.mrf.mxu0
      %v1497 = vadd.f32 0.0, %v1496
      %v1498 = vpop.f32.mrf.mxu0
      %1499 = vmatprep.mubr.f32.mxu0 0.0
      %1500 = vmatmul.mubr.f32.gmra.mxu0 %v1397
      %v1501 = vpop.f32.mrf.mxu0
      %v1502 = vadd.f32 0.0, %v1501
      %v1503 = vpop.f32.mrf.mxu0
      %1504 = vmatprep.mubr.f32.mxu0 0.0
      %1505 = vmatmul.mubr.f32.gmra.mxu0 %v1400
      %v1506 = vpop.f32.mrf.mxu0
      %v1507 = vadd.f32 0.0, %v1506
      %v1508 = vpop.f32.mrf.mxu0
      %1509 = vdwg.mxu0
      %v1510 = vadd.f32 %v1360, %v1472
      %v1511 = vadd.f32 %v1361, %v1477
      %v1512 = vadd.f32 %v1362, %v1482
      %v1513 = vadd.f32 %v1363, %v1487
      %v1514 = vadd.f32 %v1364, %v1492
      %v1515 = vadd.f32 %v1365, %v1497
      %v1516 = vadd.f32 %v1366, %v1502
      %v1517 = vadd.f32 %v1367, %v1507
      %v1518 = vld [vmem:[%s1217 + $0x2] sm:$0xff]
      %v1519 = vld [vmem:[%s1217 + $0x12] sm:$0xff]
      %v1520 = vld [vmem:[%s1217 + $0x22] sm:$0xff]
      %v1521 = vld [vmem:[%s1217 + $0x32] sm:$0xff]
      %v1522 = vld [vmem:[%s1217 + $0x42] sm:$0xff]
      %v1523 = vld [vmem:[%s1217 + $0x52] sm:$0xff]
      %v1524 = vld [vmem:[%s1217 + $0x62] sm:$0xff]
      %v1525 = vld [vmem:[%s1217 + $0x72] sm:$0xff]
      %s1526 = scalar_lea.vmem %s1, 32
      %v1527 = vld [vmem:[%s1526] sm:$0xf]
      %v1529 = vsel %vm296, %v1518, 0
      %v1532 = vsel %vm296, %v1519, 0
      %v1535 = vsel %vm296, %v1520, 0
      %v1538 = vsel %vm296, %v1521, 0
      %v1541 = vsel %vm296, %v1522, 0
      %v1544 = vsel %vm296, %v1523, 0
      %v1547 = vsel %vm296, %v1524, 0
      %v1550 = vsel %vm296, %v1525, 0
      %v1553 = vsel %vm376, %v1527, 0
      %1555 = vmatprep.subr.mxu0 0.0
      %1556 = vmatpush1.msra.mxu0 0.0
      %1557 = vmatprep.subr.mxu0 0.0
      %1558 = vmatpush1.msra.mxu0 0.0
      %1559 = vmatprep.subr.mxu0 0.0
      %1560 = vmatpush1.msra.mxu0 0.0
      %1561 = vmatprep.subr.mxu0 0.0
      %1562 = vmatpush1.msra.mxu0 0.0
      %1563 = vmatprep.subr.mxu0 0.0
      %1564 = vmatpush1.msra.mxu0 0.0
      %1565 = vmatprep.subr.mxu0 0.0
      %1566 = vmatpush1.msra.mxu0 0.0
      %1567 = vmatprep.subr.mxu0 0.0
      %1568 = vmatpush1.msra.mxu0 0.0
      %1569 = vmatprep.subr.mxu0 0.0
      %1570 = vmatpush1.msra.mxu0 0.0
      %1571 = vmatprep.subr.mxu0 0.0
      %1572 = vmatpush1.msra.mxu0 0.0
      %1573 = vmatprep.subr.mxu0 0.0
      %1574 = vmatpush1.msra.mxu0 0.0
      %1575 = vmatprep.subr.mxu0 0.0
      %1576 = vmatpush1.msra.mxu0 0.0
      %1577 = vmatprep.subr.mxu0 0.0
      %1578 = vmatpush1.msra.mxu0 0.0
      %1579 = vmatprep.subr.mxu0 0.0
      %1580 = vmatpush1.msra.mxu0 0.0
      %1581 = vmatprep.subr.mxu0 0.0
      %1582 = vmatpush1.msra.mxu0 0.0
      %1583 = vmatprep.subr.mxu0 0.0
      %1584 = vmatpush1.msra.mxu0 0.0
      %1585 = vmatprep.subr.mxu0 0.0
      %1586 = vmatpush1.msra.mxu0 %v1553
      %1587 = vmatprep.subr.mxu0 0.0
      %1588 = vmatpush2.msra.mxu0 0.0
      %1589 = vmatprep.subr.mxu0 0.0
      %1590 = vmatpush2.msra.mxu0 0.0
      %1591 = vmatprep.subr.mxu0 0.0
      %1592 = vmatpush2.msra.mxu0 0.0
      %1593 = vmatprep.subr.mxu0 0.0
      %1594 = vmatpush2.msra.mxu0 0.0
      %1595 = vmatprep.subr.mxu0 0.0
      %1596 = vmatpush2.msra.mxu0 0.0
      %1597 = vmatprep.subr.mxu0 0.0
      %1598 = vmatpush2.msra.mxu0 0.0
      %1599 = vmatprep.subr.mxu0 0.0
      %1600 = vmatpush2.msra.mxu0 0.0
      %1601 = vmatprep.subr.mxu0 0.0
      %1602 = vmatpush2.msra.mxu0 0.0
      %1603 = vmatprep.subr.mxu0 0.0
      %1604 = vmatpush2.msra.mxu0 0.0
      %1605 = vmatprep.subr.mxu0 0.0
      %1606 = vmatpush2.msra.mxu0 0.0
      %1607 = vmatprep.subr.mxu0 0.0
      %1608 = vmatpush2.msra.mxu0 0.0
      %1609 = vmatprep.subr.mxu0 0.0
      %1610 = vmatpush2.msra.mxu0 0.0
      %1611 = vmatprep.subr.mxu0 0.0
      %1612 = vmatpush2.msra.mxu0 0.0
      %1613 = vmatprep.subr.mxu0 0.0
      %1614 = vmatpush2.msra.mxu0 0.0
      %1615 = vmatprep.subr.mxu0 0.0
      %1616 = vmatpush2.msra.mxu0 0.0
      %1617 = vmatprep.subr.mxu0 0.0
      %1618 = vmatpush2.msra.mxu0 0.0
      %1619 = vmatprep.mubr.f32.mxu0 0.0
      %1620 = vmatmul.mubr.f32.gmra.mxu0 %v1529
      %v1621 = vpop.f32.mrf.mxu0
      %v1622 = vadd.f32 0.0, %v1621
      %v1623 = vpop.f32.mrf.mxu0
      %1624 = vmatprep.mubr.f32.mxu0 0.0
      %1625 = vmatmul.mubr.f32.gmra.mxu0 %v1532
      %v1626 = vpop.f32.mrf.mxu0
      %v1627 = vadd.f32 0.0, %v1626
      %v1628 = vpop.f32.mrf.mxu0
      %1629 = vmatprep.mubr.f32.mxu0 0.0
      %1630 = vmatmul.mubr.f32.gmra.mxu0 %v1535
      %v1631 = vpop.f32.mrf.mxu0
      %v1632 = vadd.f32 0.0, %v1631
      %v1633 = vpop.f32.mrf.mxu0
      %1634 = vmatprep.mubr.f32.mxu0 0.0
      %1635 = vmatmul.mubr.f32.gmra.mxu0 %v1538
      %v1636 = vpop.f32.mrf.mxu0
      %v1637 = vadd.f32 0.0, %v1636
      %v1638 = vpop.f32.mrf.mxu0
      %1639 = vmatprep.mubr.f32.mxu0 0.0
      %1640 = vmatmul.mubr.f32.gmra.mxu0 %v1541
      %v1641 = vpop.f32.mrf.mxu0
      %v1642 = vadd.f32 0.0, %v1641
      %v1643 = vpop.f32.mrf.mxu0
      %1644 = vmatprep.mubr.f32.mxu0 0.0
      %1645 = vmatmul.mubr.f32.gmra.mxu0 %v1544
      %v1646 = vpop.f32.mrf.mxu0
      %v1647 = vadd.f32 0.0, %v1646
      %v1648 = vpop.f32.mrf.mxu0
      %1649 = vmatprep.mubr.f32.mxu0 0.0
      %1650 = vmatmul.mubr.f32.gmra.mxu0 %v1547
      %v1651 = vpop.f32.mrf.mxu0
      %v1652 = vadd.f32 0.0, %v1651
      %v1653 = vpop.f32.mrf.mxu0
      %1654 = vmatprep.mubr.f32.mxu0 0.0
      %1655 = vmatmul.mubr.f32.gmra.mxu0 %v1550
      %v1656 = vpop.f32.mrf.mxu0
      %v1657 = vadd.f32 0.0, %v1656
      %v1658 = vpop.f32.mrf.mxu0
      %1659 = vdwg.mxu0
      %v1660 = vadd.f32 %v1510, %v1622
      %v1661 = vadd.f32 %v1511, %v1627
      %v1662 = vadd.f32 %v1512, %v1632
      %v1663 = vadd.f32 %v1513, %v1637
      %v1664 = vadd.f32 %v1514, %v1642
      %v1665 = vadd.f32 %v1515, %v1647
      %v1666 = vadd.f32 %v1516, %v1652
      %v1667 = vadd.f32 %v1517, %v1657
      %v1668 = vld [vmem:[%s2] sm:$0x1]
      %v1670 = vlaneseq
      %v1671 = vshrl.u32 %v1670, 7
      %v1672 = vsub.s32 0, %v1671
      %v1673 = vrot.slane %v1668, %v1672
      %v1675 = vadd.f32 %v1660, %v1673
      %v1676 = vadd.f32 %v1661, %v1673
      %v1677 = vadd.f32 %v1662, %v1673
      %v1678 = vadd.f32 %v1663, %v1673
      %v1679 = vadd.f32 %v1664, %v1673
      %v1680 = vadd.f32 %v1665, %v1673
      %v1681 = vadd.f32 %v1666, %v1673
      %v1682 = vadd.f32 %v1667, %v1673
      %vm1683 = vcmask 64512
      %1684 = vst.msk [vmem:[%s204] sm:$0xff] %vm1683, %v1675
      %1685 = vst.msk [vmem:[%s204 + $0x8] sm:$0xff] %vm1683, %v1676
      %1686 = vst.msk [vmem:[%s204 + $0x10] sm:$0xff] %vm1683, %v1677
      %1687 = vst.msk [vmem:[%s204 + $0x18] sm:$0xff] %vm1683, %v1678
      %1688 = vst.msk [vmem:[%s204 + $0x20] sm:$0xff] %vm1683, %v1679
      %1689 = vst.msk [vmem:[%s204 + $0x28] sm:$0xff] %vm1683, %v1680
      %1690 = vst.msk [vmem:[%s204 + $0x30] sm:$0xff] %vm1683, %v1681
      %1691 = vst.msk [vmem:[%s204 + $0x38] sm:$0xff] %vm1683, %v1682
      %v1692 = vsel %vm1683, %v1675, 0.0
      %v1693 = vsel %vm1683, %v1676, 0.0
      %v1694 = vadd.f32 %v1692, %v1693
      %v1695 = vsel %vm1683, %v1677, 0.0
      %v1696 = vadd.f32 %v1694, %v1695
      %v1697 = vsel %vm1683, %v1678, 0.0
      %v1698 = vadd.f32 %v1696, %v1697
      %v1699 = vsel %vm1683, %v1679, 0.0
      %v1700 = vadd.f32 %v1698, %v1699
      %v1701 = vsel %vm1683, %v1680, 0.0
      %v1702 = vadd.f32 %v1700, %v1701
      %v1703 = vsel %vm1683, %v1681, 0.0
      %v1704 = vadd.f32 %v1702, %v1703
      %v1705 = vsel %vm1683, %v1682, 0.0
      %v1706 = vadd.f32 %v1704, %v1705
      %v1707 = vrot.slane %v1706, 4
      %v1708 = vadd.f32 %v1706, %v1707
      %v1709 = vrot.slane %v1708, 2
      %v1710 = vadd.f32 %v1708, %v1709
      %v1711 = vrot.slane %v1710, 1
      %v1712 = vadd.f32 %v1710, %v1711
      %vm1713 = vcmask 57344
      %1714 = vst.msk [vmem:[%s208] sm:$0x1] %vm1713, %v1712
      %v1715 = vmul.f32 %v1675, %v1675
      %v1716 = vmul.f32 %v1676, %v1676
      %v1717 = vmul.f32 %v1677, %v1677
      %v1718 = vmul.f32 %v1678, %v1678
      %v1719 = vmul.f32 %v1679, %v1679
      %v1720 = vmul.f32 %v1680, %v1680
      %v1721 = vmul.f32 %v1681, %v1681
      %v1722 = vmul.f32 %v1682, %v1682
      %v1723 = vsel %vm1683, %v1715, 0.0
      %v1724 = vsel %vm1683, %v1716, 0.0
      %v1725 = vadd.f32 %v1723, %v1724
      %v1726 = vsel %vm1683, %v1717, 0.0
      %v1727 = vadd.f32 %v1725, %v1726
      %v1728 = vsel %vm1683, %v1718, 0.0
      %v1729 = vadd.f32 %v1727, %v1728
      %v1730 = vsel %vm1683, %v1719, 0.0
      %v1731 = vadd.f32 %v1729, %v1730
      %v1732 = vsel %vm1683, %v1720, 0.0
      %v1733 = vadd.f32 %v1731, %v1732
      %v1734 = vsel %vm1683, %v1721, 0.0
      %v1735 = vadd.f32 %v1733, %v1734
      %v1736 = vsel %vm1683, %v1722, 0.0
      %v1737 = vadd.f32 %v1735, %v1736
      %v1738 = vrot.slane %v1737, 4
      %v1739 = vadd.f32 %v1737, %v1738
      %v1740 = vrot.slane %v1739, 2
      %v1741 = vadd.f32 %v1739, %v1740
      %v1742 = vrot.slane %v1741, 1
      %v1743 = vadd.f32 %v1741, %v1742
      %1744 = vst.msk [vmem:[%s208 + $0x1] sm:$0x1] %vm1713, %v1743
      %p1745 = scmp.lt.s32.totalorder %s16, 1
      %s1746 = scalar_select %p1745, %s16, 1
      %s1747 = smul.addr %s1746, 8
      %s1748 = smul.addr %s1747, 8
      %s1749 = scalar_lea.vmem %s3, %s1748
      %p1750 = scmp.lt.s32.totalorder %s16, 1
      %s1751 = scalar_select %p1750, %s16, 1
      %s1752 = smul.addr %s1751, 2
      %s1753 = scalar_lea.vmem %s4, %s1752
      // Predicated region
      $region33: #{down_block.3} parent=31 // pred_check
        %p1754 = pneg %p102
      $region34: #{down_block.3} parent=31 // pred_check_branch
        %1756 = sbr.rel (%p1754) target = $region36
      $region35: #{down_block.3} parent=31 // pred_region
        _
      $region36: #{down_block.3} parent=31 // pred_fallthru
        _
      // Predicated region
      $region37: #{down_block.3} parent=31 // pred_check
        %p1757 = pneg %p128
      $region38: #{down_block.3} parent=31 // pred_check_branch
        %1759 = sbr.rel (%p1757) target = $region40
      $region39: #{down_block.3} parent=31 // pred_region
        _
      $region40: #{down_block.3} parent=31 // pred_fallthru
        _
    $region32: #{down_block.3} parent=5 // pred_fallthru
      _
    %p1760 = scmp.le.s32.totalorder 2, %s11
    // Predicated region
    $region41: #{down_block.3} parent=5 // pred_check
      %p1761 = pneg %p1760
    $region42: #{down_block.3} parent=5 // pred_check_branch
      %1763 = sbr.rel (%p1761) target = $region44
    $region43: #{down_block.3} parent=5 // pred_region
      %s1764 = ssub.s32 %s11, 2
      // Predicated region
      $region45: #{down_block.3} parent=43 // pred_check
        %p1765 = pneg %p108
      $region46: #{down_block.3} parent=43 // pred_check_branch
        %1767 = sbr.rel (%p1765) target = $region48
      $region47: #{down_block.3} parent=43 // pred_region
        %p1768 = scmp.lt.s32.totalorder %s17, 1
        %s1769 = scalar_select %p1768, %s17, 1
        %s1770 = smul.addr %s1769, 8
        %s1771 = smul.addr %s1770, 8
        %s1772 = scalar_lea.vmem %s3, %s1771
      $region48: #{down_block.3} parent=43 // pred_fallthru
        _
      // Predicated region
      $region49: #{down_block.3} parent=43 // pred_check
        %p1773 = pneg %p134
      $region50: #{down_block.3} parent=43 // pred_check_branch
        %1775 = sbr.rel (%p1773) target = $region52
      $region51: #{down_block.3} parent=43 // pred_region
        %p1776 = scmp.lt.s32.totalorder %s17, 1
        %s1777 = scalar_select %p1776, %s17, 1
        %s1778 = smul.addr %s1777, 2
        %s1779 = scalar_lea.vmem %s4, %s1778
      $region52: #{down_block.3} parent=43 // pred_fallthru
        _
    $region44: #{down_block.3} parent=5 // pred_fallthru
      _
  $region6: #{down_block.3} parent=0 // loop_footer
    %s15 = sadd.s32 1, %s11
  $region7: #{down_block.3} parent=0 // loop_footer_branch
    %10 = sbr.rel target = $region3
  $region8: #{down_block.3} parent=0 // loop_exit
    _

</llo_original>
